<compile_context>
chip_gen: v5e
topology: v5e:2x2
jax: 0.10.0
libtpu: 0.0.40
codegen_flags: <defaults>
</compile_context>

<pallas_src>
import jax
import jax.numpy as jnp
from jax.experimental import pallas as pl
from jax.experimental.pallas import tpu as pltpu

# ----------------------------- config (small synthetic Llama) -----------------------------
VOCAB = 128
H = 256           # hidden size
NH = 2            # num attention heads
HD = 128          # head dim (lane aligned)
INTER = 512       # MLP intermediate size
NLAYERS = 2
NLABELS = 2
LOGIT_PAD = 128   # classifier output padded to a full lane tile
EPS = 1e-5
ROPE_THETA = 10000.0
ATTN_SCALE = 1.0 / (HD ** 0.5)

B, S = 2, 8       # batch, sequence length
BS = B * S


# ----------------------------- in-kernel helpers (f32) -----------------------------
def _rms_norm(x, w):
  var = jnp.mean(x * x, axis=-1, keepdims=True)
  return x * jax.lax.rsqrt(var + EPS) * w


def _dequant_bf16(w_ref):
  # int8 weight block -> bf16 operand for the MXU; the per-output-channel scale is applied to the
  # f32 matmul result (it factors out of the contraction), so no full-size scale multiply here.
  return w_ref[0].astype(jnp.float32).astype(jnp.bfloat16)


# ----------------------------- fused decoder kernel (grid over layers) -----------------------------
def llama_kernel(ids_ref,                                        # scalar-prefetch: input_ids [BS] (SMEM)
                 emb_ref, lns_ref,
                 wqkv_ref, sqkv_ref, wo_ref, so_ref,
                 wgu_ref, sgu_ref, wd_ref, sd_ref,
                 cos_ref, sin_ref, bias_ref, lnf_ref, score_ref,
                 hid0_ref, hid_ref, logits_ref, h_scr):
  l = pl.program_id(0)

  @pl.when(l == 0)
  def _():
    # fused embedding gather: one dynamic-row VMEM load per token (BS=16), done once.
    rows = [emb_ref[pl.ds(ids_ref[i], 1), :] for i in range(BS)]
    h0 = jnp.concatenate(rows, axis=0)                           # [BS, H] f32 (exact gather)
    h_scr[...] = h0
    hid0_ref[...] = h0.reshape(B, S, H).astype(hid0_ref.dtype)

  x = h_scr[...]                                                 # [BS, H] f32 residual stream

  # ---------------- attention block ----------------
  h = _rms_norm(x, lns_ref[0, 0, :]).astype(jnp.bfloat16)        # input_layernorm -> bf16 for MXU
  qkv = jnp.dot(h, _dequant_bf16(wqkv_ref),
                preferred_element_type=jnp.float32) * sqkv_ref[0]  # [BS, 3H] f32 (fused Wq|Wk|Wv)

  cos = cos_ref[...][None]                                       # [1, S, HD] f32 (precomputed)
  sin = sin_ref[...][None]                                       # rotate_half sign already folded in

  # fold the NH static head loop into one batched path: [NH*B, S, HD] via cheap sublane concat
  q_all = jnp.concatenate(
      [qkv[:, hh * HD:(hh + 1) * HD].reshape(B, S, HD) for hh in range(NH)], axis=0)
  k_all = jnp.concatenate(
      [qkv[:, H + hh * HD:H + (hh + 1) * HD].reshape(B, S, HD) for hh in range(NH)], axis=0)
  v_all = jnp.concatenate(
      [qkv[:, 2 * H + hh * HD:2 * H + (hh + 1) * HD].reshape(B, S, HD) for hh in range(NH)],
      axis=0).astype(jnp.bfloat16)

  # RoPE (HF rotate_half formulation) via a single XLU roll per operand, f32 math -> bf16 for MXU
  q_all = (q_all * cos + pltpu.roll(q_all, HD // 2, axis=2) * sin).astype(jnp.bfloat16)
  k_all = (k_all * cos + pltpu.roll(k_all, HD // 2, axis=2) * sin).astype(jnp.bfloat16)

  scores = jnp.einsum('bqd,bkd->bqk', q_all, k_all,
                      preferred_element_type=jnp.float32)        # [NH*B, S, S]
  scores = scores * ATTN_SCALE + bias_ref[...]                   # additive causal bias [1, S, S]
  # explicit softmax: divide goes to the EUP via approximate reciprocal
  m = jnp.max(scores, axis=-1, keepdims=True)
  e = jnp.exp(scores - m)
  probs = (e * pl.reciprocal(jnp.sum(e, axis=-1, keepdims=True),
                             approx=True)).astype(jnp.bfloat16)
  ctx = jnp.einsum('bqk,bkd->bqd', probs, v_all,
                   preferred_element_type=jnp.float32)           # [NH*B, S, HD]

  # lane-concat the per-head contexts -> single [BS,H]x[H,H] O-projection
  ctx_cat = jnp.concatenate(
      [ctx[hh * B:(hh + 1) * B].reshape(BS, HD) for hh in range(NH)],
      axis=-1).astype(jnp.bfloat16)
  x = x + jnp.dot(ctx_cat, _dequant_bf16(wo_ref),
                  preferred_element_type=jnp.float32) * so_ref[0]

  # ---------------- MLP block (SwiGLU, fused gate/up) ----------------
  h2 = _rms_norm(x, lns_ref[0, 1, :]).astype(jnp.bfloat16)       # post_attention_layernorm
  gu = jnp.dot(h2, _dequant_bf16(wgu_ref),
               preferred_element_type=jnp.float32) * sgu_ref[0]  # [BS, 2*INTER] f32
  act = (jax.nn.silu(gu[:, :INTER]) * gu[:, INTER:]).astype(jnp.bfloat16)
  x = x + jnp.dot(act, _dequant_bf16(wd_ref),
                  preferred_element_type=jnp.float32) * sd_ref[0]

  h_scr[...] = x                                                 # carry residual to next layer

  # per-layer hidden-state output (bf16 to halve the HBM write stream)
  @pl.when(l < NLAYERS - 1)
  def _():
    hid_ref[0] = x.reshape(B, S, H).astype(hid_ref.dtype)

  # last layer: apply the final model.norm (matches HF hidden_states[-1]) and the class head
  @pl.when(l == NLAYERS - 1)
  def _():
    xn = _rms_norm(x, lnf_ref[0])                                # [BS, H] f32
    hid_ref[0] = xn.reshape(B, S, H).astype(hid_ref.dtype)
    pooled = xn.reshape(B, S, H)[:, S - 1, :].astype(jnp.bfloat16)   # last token (unpadded inputs)
    logits_ref[...] = jnp.dot(pooled, score_ref[...],
                              preferred_element_type=jnp.float32)    # [B, LOGIT_PAD]


# ----------------------------- pallas_call wrapper -----------------------------
def llama2_pallas_forward(input_ids, params, cos, sin_signed, mask_bias):
  ids_flat = input_ids.reshape(BS).astype(jnp.int32)

  grid_spec = pltpu.PrefetchScalarGridSpec(
      num_scalar_prefetch=1,                                     # input_ids -> SMEM
      grid=(NLAYERS,),
      in_specs=[
          pl.BlockSpec((VOCAB, H), lambda l, ids: (0, 0)),             # embedding table (f32)
          pl.BlockSpec((1, 2, H), lambda l, ids: (l, 0, 0)),           # per-layer [ln1, ln2]
          pl.BlockSpec((1, H, 3 * H), lambda l, ids: (l, 0, 0)),       # fused Wqkv (int8)
          pl.BlockSpec((1, 1, 3 * H), lambda l, ids: (l, 0, 0)),       # qkv out-channel scales
          pl.BlockSpec((1, H, H), lambda l, ids: (l, 0, 0)),           # Wo (int8)
          pl.BlockSpec((1, 1, H), lambda l, ids: (l, 0, 0)),           # o scales
          pl.BlockSpec((1, H, 2 * INTER), lambda l, ids: (l, 0, 0)),   # fused gate/up (int8)
          pl.BlockSpec((1, 1, 2 * INTER), lambda l, ids: (l, 0, 0)),   # gate/up scales
          pl.BlockSpec((1, INTER, H), lambda l, ids: (l, 0, 0)),       # Wdown (int8)
          pl.BlockSpec((1, 1, H), lambda l, ids: (l, 0, 0)),           # down scales
          pl.BlockSpec((S, HD), lambda l, ids: (0, 0)),                # RoPE cos (hoisted)
          pl.BlockSpec((S, HD), lambda l, ids: (0, 0)),                # RoPE sin, sign folded (hoisted)
          pl.BlockSpec((1, S, S), lambda l, ids: (0, 0, 0)),           # additive causal bias (hoisted)
          pl.BlockSpec((1, H), lambda l, ids: (0, 0)),                 # final norm weight
          pl.BlockSpec((H, LOGIT_PAD), lambda l, ids: (0, 0)),         # padded classifier (bf16)
      ],
      out_specs=[
          pl.BlockSpec((B, S, H), lambda l, ids: (0, 0, 0)),           # embedding hidden state
          pl.BlockSpec((1, B, S, H), lambda l, ids: (l, 0, 0, 0)),     # per-layer hidden states
          pl.BlockSpec((B, LOGIT_PAD), lambda l, ids: (0, 0)),         # padded logits (lane-dense)
      ],
      scratch_shapes=[pltpu.VMEM((BS, H), jnp.float32)],               # resident residual stream
  )

  hid0, hid_all, logits_pad = pl.pallas_call(
      llama_kernel,
      out_shape=(jax.ShapeDtypeStruct((B, S, H), jnp.bfloat16),
                 jax.ShapeDtypeStruct((NLAYERS, B, S, H), jnp.bfloat16),
                 jax.ShapeDtypeStruct((B, LOGIT_PAD), jnp.float32)),
      grid_spec=grid_spec,
      # layer axis carries the residual stream in scratch -> must stay sequential.
      # TODO(synk): at real shapes add a leading "parallel" token-block axis for v7x's 2nd TC.
      compiler_params=pltpu.CompilerParams(dimension_semantics=("arbitrary",)),
  )(ids_flat, params['embed'], params['lns'],
    params['wqkv'], params['sqkv'], params['wo'], params['so'],
    params['wgu'], params['sgu'], params['wd'], params['sd'],
    cos, sin_signed, mask_bias, params['final_norm'], params['score_pad'])
  return hid0, hid_all, logits_pad


# ----------------------------- glue: params, RoPE / mask tables -----------------------------
def _quantize_per_out_channel(w):
  # w: [L, in, out] f32 -> int8 weights + [L, 1, out] f32 scales (symmetric per-out-channel)
  absmax = jnp.max(jnp.abs(w), axis=1, keepdims=True)
  scale = jnp.maximum(absmax, 1e-8) / 127.0
  q = jnp.clip(jnp.round(w / scale), -127, 127).astype(jnp.int8)
  return q, scale.astype(jnp.float32)


def make_params(key):
  # TODO(synk): real module loads meta-llama/Llama-2-7b-hf checkpoint; deterministic init instead.
  def normal(k, shape):
    return jax.random.normal(k, shape, dtype=jnp.float32) * 0.02

  keys = jax.random.split(key, 2 + NLAYERS)
  wqkv, wo, wgu, wd = [], [], [], []
  for li in range(NLAYERS):
    lk = jax.random.split(keys[2 + li], 7)
    wqkv.append(jnp.concatenate([normal(lk[0], (H, H)),
                                 normal(lk[1], (H, H)),
                                 normal(lk[2], (H, H))], axis=-1))
    wo.append(normal(lk[3], (H, H)))
    wgu.append(jnp.concatenate([normal(lk[4], (H, INTER)),
                                normal(lk[5], (H, INTER))], axis=-1))
    wd.append(normal(lk[6], (INTER, H)))

  wqkv_q, sqkv = _quantize_per_out_channel(jnp.stack(wqkv))
  wo_q, so = _quantize_per_out_channel(jnp.stack(wo))
  wgu_q, sgu = _quantize_per_out_channel(jnp.stack(wgu))
  wd_q, sd = _quantize_per_out_channel(jnp.stack(wd))

  score = normal(keys[1], (H, NLABELS))
  score_pad = jnp.zeros((H, LOGIT_PAD), jnp.float32).at[:, :NLABELS].set(score)

  return {
      'embed': normal(keys[0], (VOCAB, H)),                      # f32, gathered inside the kernel
      'lns': jnp.ones((NLAYERS, 2, H), jnp.float32),             # [ln1, ln2] per layer
      'wqkv': wqkv_q, 'sqkv': sqkv,
      'wo': wo_q, 'so': so,
      'wgu': wgu_q, 'sgu': sgu,
      'wd': wd_q, 'sd': sd,
      'final_norm': jnp.ones((1, H), jnp.float32),
      'score_pad': score_pad.astype(jnp.bfloat16),
  }


def rope_tables(seq_len, head_dim):
  inv_freq = 1.0 / (ROPE_THETA ** (jnp.arange(0, head_dim, 2, dtype=jnp.float32) / head_dim))
  pos = jnp.arange(seq_len, dtype=jnp.float32)
  freqs = jnp.einsum('s,d->sd', pos, inv_freq)                   # [S, HD/2]
  emb = jnp.concatenate([freqs, freqs], axis=-1)                 # [S, HD] (HF Llama convention)
  cos = jnp.cos(emb)
  sin = jnp.sin(emb)
  # fold the rotate_half sign into sin so the kernel needs only one pltpu.roll per operand
  sin_signed = jnp.concatenate([-sin[:, :head_dim // 2], sin[:, head_dim // 2:]], axis=-1)
  return cos, sin_signed


def causal_bias(seq_len):
  q = jnp.arange(seq_len)[:, None]
  k = jnp.arange(seq_len)[None, :]
  return jnp.where(k <= q, 0.0, -1e30).astype(jnp.float32)[None]   # [1, S, S] additive mask


@jax.jit
def llama2_decoder_forward(input_ids, params):
  cos, sin_signed = rope_tables(S, HD)
  bias = causal_bias(S)
  hid0, hid_all, logits_pad = llama2_pallas_forward(input_ids, params, cos, sin_signed, bias)
  logits = logits_pad[:, :NLABELS]
  # mirrors output_hidden_states=True: embeddings + each decoder layer output
  # (last entry has the final model.norm applied, matching HF)
  all_hidden = (hid0,) + tuple(hid_all[i] for i in range(NLAYERS))
  return logits, all_hidden


if __name__ == "__main__":
  key = jax.random.PRNGKey(0)
  pkey, dkey = jax.random.split(key)
  params = make_params(pkey)
  input_ids = jax.random.randint(dkey, (B, S), 0, VOCAB, dtype=jnp.int32)

  logits, hidden_states = llama2_decoder_forward(input_ids, params)
  jax.block_until_ready(logits)
  jax.block_until_ready(hidden_states)

  assert logits.shape == (B, NLABELS)
  assert len(hidden_states) == NLAYERS + 1
  assert hidden_states[0].shape == (B, S, H)
  assert hidden_states[-1].shape == (B, S, H)
  assert bool(jnp.all(jnp.isfinite(logits)))
  assert bool(jnp.all(jnp.isfinite(hidden_states[-1].astype(jnp.float32))))
  print("KERNEL_OK")
</pallas_src>

<mosaic_0001>
module attributes {stable_mosaic.version = 11 : i64} {
  func.func @llama_kernel(%arg0: i32, %arg1: memref<16xi32, #tpu.memory_space<smem>>, %arg2: memref<128x256xf32, #tpu.memory_space<vmem>>, %arg3: memref<1x2x256xf32, #tpu.memory_space<vmem>>, %arg4: memref<1x256x768xi8, #tpu.memory_space<vmem>>, %arg5: memref<1x1x768xf32, #tpu.memory_space<vmem>>, %arg6: memref<1x256x256xi8, #tpu.memory_space<vmem>>, %arg7: memref<1x1x256xf32, #tpu.memory_space<vmem>>, %arg8: memref<1x256x1024xi8, #tpu.memory_space<vmem>>, %arg9: memref<1x1x1024xf32, #tpu.memory_space<vmem>>, %arg10: memref<1x512x256xi8, #tpu.memory_space<vmem>>, %arg11: memref<1x1x256xf32, #tpu.memory_space<vmem>>, %arg12: memref<8x128xf32, #tpu.memory_space<vmem>>, %arg13: memref<8x128xf32, #tpu.memory_space<vmem>>, %arg14: memref<1x8x8xf32, #tpu.memory_space<vmem>>, %arg15: memref<1x256xf32, #tpu.memory_space<vmem>>, %arg16: memref<256x128xbf16, #tpu.memory_space<vmem>>, %arg17: memref<2x8x256xbf16, #tpu.memory_space<vmem>>, %arg18: memref<1x2x8x256xbf16, #tpu.memory_space<vmem>>, %arg19: memref<2x128xf32, #tpu.memory_space<vmem>>, %arg20: memref<16x256xf32, #tpu.memory_space<vmem>>) attributes {dimension_semantics = [#tpu.dimension_semantics<arbitrary>], iteration_bounds = array<i64: 2>, scalar_prefetch = 1 : i64, scratch_operands = 1 : i64, tpu.core_type = #tpu.core_type<tc>, window_params = [{pipeline_mode = #tpu.pipeline_mode<synchronous>, transform_indices = @transform_0, window_bounds = array<i64: 128, 256>}, {transform_indices = @transform_1, window_bounds = array<i64: 1, 2, 256>}, {transform_indices = @transform_2, window_bounds = array<i64: 1, 256, 768>}, {transform_indices = @transform_3, window_bounds = array<i64: 1, 1, 768>}, {transform_indices = @transform_4, window_bounds = array<i64: 1, 256, 256>}, {transform_indices = @transform_5, window_bounds = array<i64: 1, 1, 256>}, {transform_indices = @transform_6, window_bounds = array<i64: 1, 256, 1024>}, {transform_indices = @transform_7, window_bounds = array<i64: 1, 1, 1024>}, {transform_indices = @transform_8, window_bounds = array<i64: 1, 512, 256>}, {transform_indices = @transform_9, window_bounds = array<i64: 1, 1, 256>}, {pipeline_mode = #tpu.pipeline_mode<synchronous>, transform_indices = @transform_10, window_bounds = array<i64: 8, 128>}, {pipeline_mode = #tpu.pipeline_mode<synchronous>, transform_indices = @transform_11, window_bounds = array<i64: 8, 128>}, {pipeline_mode = #tpu.pipeline_mode<synchronous>, transform_indices = @transform_12, window_bounds = array<i64: 1, 8, 8>}, {pipeline_mode = #tpu.pipeline_mode<synchronous>, transform_indices = @transform_13, window_bounds = array<i64: 1, 256>}, {pipeline_mode = #tpu.pipeline_mode<synchronous>, transform_indices = @transform_14, window_bounds = array<i64: 256, 128>}, {pipeline_mode = #tpu.pipeline_mode<synchronous>, transform_indices = @transform_15, window_bounds = array<i64: 2, 8, 256>}, {transform_indices = @transform_16, window_bounds = array<i64: 1, 2, 8, 256>}, {pipeline_mode = #tpu.pipeline_mode<synchronous>, transform_indices = @transform_17, window_bounds = array<i64: 2, 128>}]} {
    %c0_i32 = arith.constant 0 : i32
    %0 = arith.cmpi eq, %arg0, %c0_i32 : i32
    %1 = arith.extui %0 : i1 to i32
    %c0_i32_0 = arith.constant 0 : i32
    %2 = arith.cmpi ne, %1, %c0_i32_0 : i32
    scf.if %2 {
      %c0_59 = arith.constant 0 : index
      %149 = memref.load %arg1[%c0_59] : memref<16xi32, #tpu.memory_space<smem>>
      %150 = arith.index_cast %149 : i32 to index
      %c0_60 = arith.constant 0 : index
      %151 = vector.load %arg2[%150, %c0_60] : memref<128x256xf32, #tpu.memory_space<vmem>>, vector<1x256xf32>
      %c1_61 = arith.constant 1 : index
      %152 = memref.load %arg1[%c1_61] : memref<16xi32, #tpu.memory_space<smem>>
      %153 = arith.index_cast %152 : i32 to index
      %c0_62 = arith.constant 0 : index
      %154 = vector.load %arg2[%153, %c0_62] : memref<128x256xf32, #tpu.memory_space<vmem>>, vector<1x256xf32>
      %c2 = arith.constant 2 : index
      %155 = memref.load %arg1[%c2] : memref<16xi32, #tpu.memory_space<smem>>
      %156 = arith.index_cast %155 : i32 to index
      %c0_63 = arith.constant 0 : index
      %157 = vector.load %arg2[%156, %c0_63] : memref<128x256xf32, #tpu.memory_space<vmem>>, vector<1x256xf32>
      %c3 = arith.constant 3 : index
      %158 = memref.load %arg1[%c3] : memref<16xi32, #tpu.memory_space<smem>>
      %159 = arith.index_cast %158 : i32 to index
      %c0_64 = arith.constant 0 : index
      %160 = vector.load %arg2[%159, %c0_64] : memref<128x256xf32, #tpu.memory_space<vmem>>, vector<1x256xf32>
      %c4 = arith.constant 4 : index
      %161 = memref.load %arg1[%c4] : memref<16xi32, #tpu.memory_space<smem>>
      %162 = arith.index_cast %161 : i32 to index
      %c0_65 = arith.constant 0 : index
      %163 = vector.load %arg2[%162, %c0_65] : memref<128x256xf32, #tpu.memory_space<vmem>>, vector<1x256xf32>
      %c5 = arith.constant 5 : index
      %164 = memref.load %arg1[%c5] : memref<16xi32, #tpu.memory_space<smem>>
      %165 = arith.index_cast %164 : i32 to index
      %c0_66 = arith.constant 0 : index
      %166 = vector.load %arg2[%165, %c0_66] : memref<128x256xf32, #tpu.memory_space<vmem>>, vector<1x256xf32>
      %c6 = arith.constant 6 : index
      %167 = memref.load %arg1[%c6] : memref<16xi32, #tpu.memory_space<smem>>
      %168 = arith.index_cast %167 : i32 to index
      %c0_67 = arith.constant 0 : index
      %169 = vector.load %arg2[%168, %c0_67] : memref<128x256xf32, #tpu.memory_space<vmem>>, vector<1x256xf32>
      %c7 = arith.constant 7 : index
      %170 = memref.load %arg1[%c7] : memref<16xi32, #tpu.memory_space<smem>>
      %171 = arith.index_cast %170 : i32 to index
      %c0_68 = arith.constant 0 : index
      %172 = vector.load %arg2[%171, %c0_68] : memref<128x256xf32, #tpu.memory_space<vmem>>, vector<1x256xf32>
      %c8 = arith.constant 8 : index
      %173 = memref.load %arg1[%c8] : memref<16xi32, #tpu.memory_space<smem>>
      %174 = arith.index_cast %173 : i32 to index
      %c0_69 = arith.constant 0 : index
      %175 = vector.load %arg2[%174, %c0_69] : memref<128x256xf32, #tpu.memory_space<vmem>>, vector<1x256xf32>
      %c9 = arith.constant 9 : index
      %176 = memref.load %arg1[%c9] : memref<16xi32, #tpu.memory_space<smem>>
      %177 = arith.index_cast %176 : i32 to index
      %c0_70 = arith.constant 0 : index
      %178 = vector.load %arg2[%177, %c0_70] : memref<128x256xf32, #tpu.memory_space<vmem>>, vector<1x256xf32>
      %c10 = arith.constant 10 : index
      %179 = memref.load %arg1[%c10] : memref<16xi32, #tpu.memory_space<smem>>
      %180 = arith.index_cast %179 : i32 to index
      %c0_71 = arith.constant 0 : index
      %181 = vector.load %arg2[%180, %c0_71] : memref<128x256xf32, #tpu.memory_space<vmem>>, vector<1x256xf32>
      %c11 = arith.constant 11 : index
      %182 = memref.load %arg1[%c11] : memref<16xi32, #tpu.memory_space<smem>>
      %183 = arith.index_cast %182 : i32 to index
      %c0_72 = arith.constant 0 : index
      %184 = vector.load %arg2[%183, %c0_72] : memref<128x256xf32, #tpu.memory_space<vmem>>, vector<1x256xf32>
      %c12 = arith.constant 12 : index
      %185 = memref.load %arg1[%c12] : memref<16xi32, #tpu.memory_space<smem>>
      %186 = arith.index_cast %185 : i32 to index
      %c0_73 = arith.constant 0 : index
      %187 = vector.load %arg2[%186, %c0_73] : memref<128x256xf32, #tpu.memory_space<vmem>>, vector<1x256xf32>
      %c13 = arith.constant 13 : index
      %188 = memref.load %arg1[%c13] : memref<16xi32, #tpu.memory_space<smem>>
      %189 = arith.index_cast %188 : i32 to index
      %c0_74 = arith.constant 0 : index
      %190 = vector.load %arg2[%189, %c0_74] : memref<128x256xf32, #tpu.memory_space<vmem>>, vector<1x256xf32>
      %c14 = arith.constant 14 : index
      %191 = memref.load %arg1[%c14] : memref<16xi32, #tpu.memory_space<smem>>
      %192 = arith.index_cast %191 : i32 to index
      %c0_75 = arith.constant 0 : index
      %193 = vector.load %arg2[%192, %c0_75] : memref<128x256xf32, #tpu.memory_space<vmem>>, vector<1x256xf32>
      %c15 = arith.constant 15 : index
      %194 = memref.load %arg1[%c15] : memref<16xi32, #tpu.memory_space<smem>>
      %195 = arith.index_cast %194 : i32 to index
      %c0_76 = arith.constant 0 : index
      %196 = vector.load %arg2[%195, %c0_76] : memref<128x256xf32, #tpu.memory_space<vmem>>, vector<1x256xf32>
      %197 = tpu.concatenate %151, %154, %157, %160, %163, %166, %169, %172, %175, %178, %181, %184, %187, %190, %193, %196 in 0 : vector<1x256xf32>, vector<1x256xf32>, vector<1x256xf32>, vector<1x256xf32>, vector<1x256xf32>, vector<1x256xf32>, vector<1x256xf32>, vector<1x256xf32>, vector<1x256xf32>, vector<1x256xf32>, vector<1x256xf32>, vector<1x256xf32>, vector<1x256xf32>, vector<1x256xf32>, vector<1x256xf32>, vector<1x256xf32> -> vector<16x256xf32>
      %c0_77 = arith.constant 0 : index
      %c0_78 = arith.constant 0 : index
      %198 = vector.load %arg20[%c0_77, %c0_78] : memref<16x256xf32, #tpu.memory_space<vmem>>, vector<16x256xf32>
      tpu.vector_store %arg20[%c0_77, %c0_78], %197 {strides = array<i32>} : memref<16x256xf32, #tpu.memory_space<vmem>>, vector<16x256xf32>,
      %199 = vector.shape_cast %197 : vector<16x256xf32> to vector<2x8x256xf32>
      %200 = arith.truncf %199 : vector<2x8x256xf32> to vector<2x8x256xbf16>
      %c0_79 = arith.constant 0 : index
      %c0_80 = arith.constant 0 : index
      %c0_81 = arith.constant 0 : index
      %201 = vector.load %arg17[%c0_79, %c0_80, %c0_81] : memref<2x8x256xbf16, #tpu.memory_space<vmem>>, vector<2x8x256xbf16>
      tpu.vector_store %arg17[%c0_79, %c0_80, %c0_81], %200 {strides = array<i32>} : memref<2x8x256xbf16, #tpu.memory_space<vmem>>, vector<2x8x256xbf16>,
    } else {
    }
    %c0 = arith.constant 0 : index
    %c0_1 = arith.constant 0 : index
    %3 = vector.load %arg20[%c0, %c0_1] : memref<16x256xf32, #tpu.memory_space<vmem>>, vector<16x256xf32>
    %c0_2 = arith.constant 0 : index
    %c0_3 = arith.constant 0 : index
    %c0_4 = arith.constant 0 : index
    %4 = vector.load %arg3[%c0_2, %c0_3, %c0_4] : memref<1x2x256xf32, #tpu.memory_space<vmem>>, vector<1x1x256xf32>
    %5 = vector.shape_cast %4 : vector<1x1x256xf32> to vector<256xf32>
    %6 = arith.mulf %3, %3 : vector<16x256xf32>
    %cst = arith.constant dense<0.000000e+00> : vector<16xf32>
    %7 = vector.multi_reduction <add>, %6, %cst [1] : vector<16x256xf32> to vector<16xf32>
    %8 = vector.shape_cast %7 : vector<16xf32> to vector<16x1xf32>
    %cst_5 = arith.constant 2.560000e+02 : f32
    %9 = vector.broadcast %cst_5 : f32 to vector<16x1xf32>
    %10 = arith.divf %8, %9 : vector<16x1xf32>
    %cst_6 = arith.constant 9.99999974E-6 : f32
    %11 = vector.broadcast %cst_6 : f32 to vector<16x1xf32>
    %12 = arith.addf %10, %11 : vector<16x1xf32>
    %13 = math.rsqrt %12 : vector<16x1xf32>
    %14 = vector.broadcast %13 : vector<16x1xf32> to vector<16x256xf32>
    %15 = arith.mulf %3, %14 : vector<16x256xf32>
    %16 = vector.shape_cast %5 : vector<256xf32> to vector<1x256xf32>
    %17 = vector.broadcast %16 : vector<1x256xf32> to vector<16x256xf32>
    %18 = arith.mulf %15, %17 : vector<16x256xf32>
    %19 = arith.truncf %18 : vector<16x256xf32> to vector<16x256xbf16>
    %c0_7 = arith.constant 0 : index
    %c0_8 = arith.constant 0 : index
    %c0_9 = arith.constant 0 : index
    %20 = vector.load %arg4[%c0_7, %c0_8, %c0_9] : memref<1x256x768xi8, #tpu.memory_space<vmem>>, vector<1x256x768xi8>
    %21 = vector.shape_cast %20 : vector<1x256x768xi8> to vector<256x768xi8>
    %22 = arith.sitofp %21 : vector<256x768xi8> to vector<256x768xf32>
    %23 = arith.truncf %22 : vector<256x768xf32> to vector<256x768xbf16>
    %cst_10 = arith.constant dense<0.000000e+00> : vector<16x768xf32>
    %24 = tpu.matmul %19, %23, %cst_10 {dimension_numbers = #tpu.dot_dimension_numbers<[1], [0], [0], [1], [0, 0, 1, 1], [], []>} : vector<16x256xbf16>, vector<256x768xbf16>, vector<16x768xf32> -> vector<16x768xf32>
    %c0_11 = arith.constant 0 : index
    %c0_12 = arith.constant 0 : index
    %c0_13 = arith.constant 0 : index
    %25 = vector.load %arg5[%c0_11, %c0_12, %c0_13] : memref<1x1x768xf32, #tpu.memory_space<vmem>>, vector<1x1x768xf32>
    %26 = vector.shape_cast %25 : vector<1x1x768xf32> to vector<1x768xf32>
    %27 = vector.broadcast %26 : vector<1x768xf32> to vector<16x768xf32>
    %28 = arith.mulf %24, %27 : vector<16x768xf32>
    %c0_14 = arith.constant 0 : index
    %c0_15 = arith.constant 0 : index
    %29 = vector.load %arg12[%c0_14, %c0_15] : memref<8x128xf32, #tpu.memory_space<vmem>>, vector<8x128xf32>
    %30 = vector.shape_cast %29 : vector<8x128xf32> to vector<1x8x128xf32>
    %c0_16 = arith.constant 0 : index
    %c0_17 = arith.constant 0 : index
    %31 = vector.load %arg13[%c0_16, %c0_17] : memref<8x128xf32, #tpu.memory_space<vmem>>, vector<8x128xf32>
    %32 = vector.shape_cast %31 : vector<8x128xf32> to vector<1x8x128xf32>
    %33 = vector.extract_strided_slice %28 {offsets = [0, 0], sizes = [16, 128], strides = [1, 1]} : vector<16x768xf32> to vector<16x128xf32>
    %34 = vector.shape_cast %33 : vector<16x128xf32> to vector<2x8x128xf32>
    %35 = vector.extract_strided_slice %28 {offsets = [0, 128], sizes = [16, 128], strides = [1, 1]} : vector<16x768xf32> to vector<16x128xf32>
    %36 = vector.shape_cast %35 : vector<16x128xf32> to vector<2x8x128xf32>
    %37 = tpu.concatenate %34, %36 in 0 : vector<2x8x128xf32>, vector<2x8x128xf32> -> vector<4x8x128xf32>
    %38 = vector.extract_strided_slice %28 {offsets = [0, 256], sizes = [16, 128], strides = [1, 1]} : vector<16x768xf32> to vector<16x128xf32>
    %39 = vector.shape_cast %38 : vector<16x128xf32> to vector<2x8x128xf32>
    %40 = vector.extract_strided_slice %28 {offsets = [0, 384], sizes = [16, 128], strides = [1, 1]} : vector<16x768xf32> to vector<16x128xf32>
    %41 = vector.shape_cast %40 : vector<16x128xf32> to vector<2x8x128xf32>
    %42 = tpu.concatenate %39, %41 in 0 : vector<2x8x128xf32>, vector<2x8x128xf32> -> vector<4x8x128xf32>
    %43 = vector.extract_strided_slice %28 {offsets = [0, 512], sizes = [16, 128], strides = [1, 1]} : vector<16x768xf32> to vector<16x128xf32>
    %44 = vector.shape_cast %43 : vector<16x128xf32> to vector<2x8x128xf32>
    %45 = vector.extract_strided_slice %28 {offsets = [0, 640], sizes = [16, 128], strides = [1, 1]} : vector<16x768xf32> to vector<16x128xf32>
    %46 = vector.shape_cast %45 : vector<16x128xf32> to vector<2x8x128xf32>
    %47 = tpu.concatenate %44, %46 in 0 : vector<2x8x128xf32>, vector<2x8x128xf32> -> vector<4x8x128xf32>
    %48 = arith.truncf %47 : vector<4x8x128xf32> to vector<4x8x128xbf16>
    %49 = vector.broadcast %30 : vector<1x8x128xf32> to vector<4x8x128xf32>
    %50 = arith.mulf %37, %49 : vector<4x8x128xf32>
    %c64_i32 = arith.constant 64 : i32
    %51 = tpu.dynamic_rotate %37 by %c64_i32 dim 2 : vector<4x8x128xf32>, i32 -> vector<4x8x128xf32>
    %52 = vector.broadcast %32 : vector<1x8x128xf32> to vector<4x8x128xf32>
    %53 = arith.mulf %51, %52 : vector<4x8x128xf32>
    %54 = arith.addf %50, %53 : vector<4x8x128xf32>
    %55 = arith.truncf %54 : vector<4x8x128xf32> to vector<4x8x128xbf16>
    %56 = vector.broadcast %30 : vector<1x8x128xf32> to vector<4x8x128xf32>
    %57 = arith.mulf %42, %56 : vector<4x8x128xf32>
    %c64_i32_18 = arith.constant 64 : i32
    %58 = tpu.dynamic_rotate %42 by %c64_i32_18 dim 2 : vector<4x8x128xf32>, i32 -> vector<4x8x128xf32>
    %59 = vector.broadcast %32 : vector<1x8x128xf32> to vector<4x8x128xf32>
    %60 = arith.mulf %58, %59 : vector<4x8x128xf32>
    %61 = arith.addf %57, %60 : vector<4x8x128xf32>
    %62 = arith.truncf %61 : vector<4x8x128xf32> to vector<4x8x128xbf16>
    "tpu.trace_start"() <{level = 10 : i32, message = "bqd,bkd->bqk"}> : () -> ()
    %cst_19 = arith.constant dense<0.000000e+00> : vector<4x8x8xf32>
    %63 = tpu.matmul %55, %62, %cst_19 {dimension_numbers = #tpu.dot_dimension_numbers<[2], [2], [1], [1], [0, 0, 0, 1, 1, 1], [0], [0]>} : vector<4x8x128xbf16>, vector<4x8x128xbf16>, vector<4x8x8xf32> -> vector<4x8x8xf32>
    "tpu.trace_stop"() : () -> ()
    %cst_20 = arith.constant 0.0883883461 : f32
    %64 = vector.broadcast %cst_20 : f32 to vector<4x8x8xf32>
    %65 = arith.mulf %63, %64 : vector<4x8x8xf32>
    %c0_21 = arith.constant 0 : index
    %c0_22 = arith.constant 0 : index
    %c0_23 = arith.constant 0 : index
    %66 = vector.load %arg14[%c0_21, %c0_22, %c0_23] : memref<1x8x8xf32, #tpu.memory_space<vmem>>, vector<1x8x8xf32>
    %67 = vector.broadcast %66 : vector<1x8x8xf32> to vector<4x8x8xf32>
    %68 = arith.addf %65, %67 : vector<4x8x8xf32>
    %cst_24 = arith.constant dense<0xFF800000> : vector<4x8xf32>
    %69 = vector.multi_reduction <maximumf>, %68, %cst_24 [2] : vector<4x8x8xf32> to vector<4x8xf32>
    %70 = vector.shape_cast %69 : vector<4x8xf32> to vector<4x8x1xf32>
    %71 = vector.broadcast %70 : vector<4x8x1xf32> to vector<4x8x8xf32>
    %72 = arith.subf %68, %71 : vector<4x8x8xf32>
    %73 = math.exp %72 : vector<4x8x8xf32>
    %cst_25 = arith.constant dense<0.000000e+00> : vector<4x8xf32>
    %74 = vector.multi_reduction <add>, %73, %cst_25 [2] : vector<4x8x8xf32> to vector<4x8xf32>
    %75 = vector.shape_cast %74 : vector<4x8xf32> to vector<4x8x1xf32>
    %76 = tpu.reciprocal %75 {approx = true} : vector<4x8x1xf32> -> vector<4x8x1xf32>
    %77 = vector.broadcast %76 : vector<4x8x1xf32> to vector<4x8x8xf32>
    %78 = arith.mulf %73, %77 : vector<4x8x8xf32>
    %79 = arith.truncf %78 : vector<4x8x8xf32> to vector<4x8x8xbf16>
    "tpu.trace_start"() <{level = 10 : i32, message = "bqk,bkd->bqd"}> : () -> ()
    %cst_26 = arith.constant dense<0.000000e+00> : vector<4x8x128xf32>
    %80 = tpu.matmul %79, %48, %cst_26 {dimension_numbers = #tpu.dot_dimension_numbers<[2], [1], [1], [2], [0, 0, 0, 1, 1, 2], [0], [0]>} : vector<4x8x8xbf16>, vector<4x8x128xbf16>, vector<4x8x128xf32> -> vector<4x8x128xf32>
    "tpu.trace_stop"() : () -> ()
    %81 = vector.extract_strided_slice %80 {offsets = [0, 0, 0], sizes = [2, 8, 128], strides = [1, 1, 1]} : vector<4x8x128xf32> to vector<2x8x128xf32>
    %82 = vector.shape_cast %81 : vector<2x8x128xf32> to vector<16x128xf32>
    %83 = vector.extract_strided_slice %80 {offsets = [2, 0, 0], sizes = [2, 8, 128], strides = [1, 1, 1]} : vector<4x8x128xf32> to vector<2x8x128xf32>
    %84 = vector.shape_cast %83 : vector<2x8x128xf32> to vector<16x128xf32>
    %85 = tpu.concatenate %82, %84 in 1 : vector<16x128xf32>, vector<16x128xf32> -> vector<16x256xf32>
    %86 = arith.truncf %85 : vector<16x256xf32> to vector<16x256xbf16>
    %c0_27 = arith.constant 0 : index
    %c0_28 = arith.constant 0 : index
    %c0_29 = arith.constant 0 : index
    %87 = vector.load %arg6[%c0_27, %c0_28, %c0_29] : memref<1x256x256xi8, #tpu.memory_space<vmem>>, vector<1x256x256xi8>
    %88 = vector.shape_cast %87 : vector<1x256x256xi8> to vector<256x256xi8>
    %89 = arith.sitofp %88 : vector<256x256xi8> to vector<256x256xf32>
    %90 = arith.truncf %89 : vector<256x256xf32> to vector<256x256xbf16>
    %cst_30 = arith.constant dense<0.000000e+00> : vector<16x256xf32>
    %91 = tpu.matmul %86, %90, %cst_30 {dimension_numbers = #tpu.dot_dimension_numbers<[1], [0], [0], [1], [0, 0, 1, 1], [], []>} : vector<16x256xbf16>, vector<256x256xbf16>, vector<16x256xf32> -> vector<16x256xf32>
    %c0_31 = arith.constant 0 : index
    %c0_32 = arith.constant 0 : index
    %c0_33 = arith.constant 0 : index
    %92 = vector.load %arg7[%c0_31, %c0_32, %c0_33] : memref<1x1x256xf32, #tpu.memory_space<vmem>>, vector<1x1x256xf32>
    %93 = vector.shape_cast %92 : vector<1x1x256xf32> to vector<1x256xf32>
    %94 = vector.broadcast %93 : vector<1x256xf32> to vector<16x256xf32>
    %95 = arith.mulf %91, %94 : vector<16x256xf32>
    %96 = arith.addf %3, %95 : vector<16x256xf32>
    %c0_34 = arith.constant 0 : index
    %c1 = arith.constant 1 : index
    %c0_35 = arith.constant 0 : index
    %97 = vector.load %arg3[%c0_34, %c1, %c0_35] : memref<1x2x256xf32, #tpu.memory_space<vmem>>, vector<1x1x256xf32>
    %98 = vector.shape_cast %97 : vector<1x1x256xf32> to vector<256xf32>
    %99 = arith.mulf %96, %96 : vector<16x256xf32>
    %cst_36 = arith.constant dense<0.000000e+00> : vector<16xf32>
    %100 = vector.multi_reduction <add>, %99, %cst_36 [1] : vector<16x256xf32> to vector<16xf32>
    %101 = vector.shape_cast %100 : vector<16xf32> to vector<16x1xf32>
    %cst_37 = arith.constant 2.560000e+02 : f32
    %102 = vector.broadcast %cst_37 : f32 to vector<16x1xf32>
    %103 = arith.divf %101, %102 : vector<16x1xf32>
    %cst_38 = arith.constant 9.99999974E-6 : f32
    %104 = vector.broadcast %cst_38 : f32 to vector<16x1xf32>
    %105 = arith.addf %103, %104 : vector<16x1xf32>
    %106 = math.rsqrt %105 : vector<16x1xf32>
    %107 = vector.broadcast %106 : vector<16x1xf32> to vector<16x256xf32>
    %108 = arith.mulf %96, %107 : vector<16x256xf32>
    %109 = vector.shape_cast %98 : vector<256xf32> to vector<1x256xf32>
    %110 = vector.broadcast %109 : vector<1x256xf32> to vector<16x256xf32>
    %111 = arith.mulf %108, %110 : vector<16x256xf32>
    %112 = arith.truncf %111 : vector<16x256xf32> to vector<16x256xbf16>
    %c0_39 = arith.constant 0 : index
    %c0_40 = arith.constant 0 : index
    %c0_41 = arith.constant 0 : index
    %113 = vector.load %arg8[%c0_39, %c0_40, %c0_41] : memref<1x256x1024xi8, #tpu.memory_space<vmem>>, vector<1x256x1024xi8>
    %114 = vector.shape_cast %113 : vector<1x256x1024xi8> to vector<256x1024xi8>
    %115 = arith.sitofp %114 : vector<256x1024xi8> to vector<256x1024xf32>
    %116 = arith.truncf %115 : vector<256x1024xf32> to vector<256x1024xbf16>
    %cst_42 = arith.constant dense<0.000000e+00> : vector<16x1024xf32>
    %117 = tpu.matmul %112, %116, %cst_42 {dimension_numbers = #tpu.dot_dimension_numbers<[1], [0], [0], [1], [0, 0, 1, 1], [], []>} : vector<16x256xbf16>, vector<256x1024xbf16>, vector<16x1024xf32> -> vector<16x1024xf32>
    %c0_43 = arith.constant 0 : index
    %c0_44 = arith.constant 0 : index
    %c0_45 = arith.constant 0 : index
    %118 = vector.load %arg9[%c0_43, %c0_44, %c0_45] : memref<1x1x1024xf32, #tpu.memory_space<vmem>>, vector<1x1x1024xf32>
    %119 = vector.shape_cast %118 : vector<1x1x1024xf32> to vector<1x1024xf32>
    %120 = vector.broadcast %119 : vector<1x1024xf32> to vector<16x1024xf32>
    %121 = arith.mulf %117, %120 : vector<16x1024xf32>
    %122 = vector.extract_strided_slice %121 {offsets = [0, 0], sizes = [16, 512], strides = [1, 1]} : vector<16x1024xf32> to vector<16x512xf32>
    %123 = arith.negf %122 : vector<16x512xf32>
    %124 = math.exp %123 : vector<16x512xf32>
    %cst_46 = arith.constant 1.000000e+00 : f32
    %125 = vector.broadcast %cst_46 : f32 to vector<16x512xf32>
    %126 = arith.addf %125, %124 : vector<16x512xf32>
    %127 = arith.divf %125, %126 : vector<16x512xf32>
    %128 = arith.mulf %122, %127 : vector<16x512xf32>
    %129 = vector.extract_strided_slice %121 {offsets = [0, 512], sizes = [16, 512], strides = [1, 1]} : vector<16x1024xf32> to vector<16x512xf32>
    %130 = arith.mulf %128, %129 : vector<16x512xf32>
    %131 = arith.truncf %130 : vector<16x512xf32> to vector<16x512xbf16>
    %c0_47 = arith.constant 0 : index
    %c0_48 = arith.constant 0 : index
    %c0_49 = arith.constant 0 : index
    %132 = vector.load %arg10[%c0_47, %c0_48, %c0_49] : memref<1x512x256xi8, #tpu.memory_space<vmem>>, vector<1x512x256xi8>
    %133 = vector.shape_cast %132 : vector<1x512x256xi8> to vector<512x256xi8>
    %134 = arith.sitofp %133 : vector<512x256xi8> to vector<512x256xf32>
    %135 = arith.truncf %134 : vector<512x256xf32> to vector<512x256xbf16>
    %cst_50 = arith.constant dense<0.000000e+00> : vector<16x256xf32>
    %136 = tpu.matmul %131, %135, %cst_50 {dimension_numbers = #tpu.dot_dimension_numbers<[1], [0], [0], [1], [0, 0, 1, 1], [], []>} : vector<16x512xbf16>, vector<512x256xbf16>, vector<16x256xf32> -> vector<16x256xf32>
    %c0_51 = arith.constant 0 : index
    %c0_52 = arith.constant 0 : index
    %c0_53 = arith.constant 0 : index
    %137 = vector.load %arg11[%c0_51, %c0_52, %c0_53] : memref<1x1x256xf32, #tpu.memory_space<vmem>>, vector<1x1x256xf32>
    %138 = vector.shape_cast %137 : vector<1x1x256xf32> to vector<1x256xf32>
    %139 = vector.broadcast %138 : vector<1x256xf32> to vector<16x256xf32>
    %140 = arith.mulf %136, %139 : vector<16x256xf32>
    %141 = arith.addf %96, %140 : vector<16x256xf32>
    %c0_54 = arith.constant 0 : index
    %c0_55 = arith.constant 0 : index
    %142 = vector.load %arg20[%c0_54, %c0_55] : memref<16x256xf32, #tpu.memory_space<vmem>>, vector<16x256xf32>
    tpu.vector_store %arg20[%c0_54, %c0_55], %141 {strides = array<i32>} : memref<16x256xf32, #tpu.memory_space<vmem>>, vector<16x256xf32>,
    %c1_i32 = arith.constant 1 : i32
    %143 = arith.cmpi slt, %arg0, %c1_i32 : i32
    %144 = arith.extui %143 : i1 to i32
    %c0_i32_56 = arith.constant 0 : i32
    %145 = arith.cmpi ne, %144, %c0_i32_56 : i32
    scf.if %145 {
      %149 = vector.shape_cast %141 : vector<16x256xf32> to vector<2x8x256xf32>
      %150 = arith.truncf %149 : vector<2x8x256xf32> to vector<2x8x256xbf16>
      %c0_59 = arith.constant 0 : index
      %c0_60 = arith.constant 0 : index
      %c0_61 = arith.constant 0 : index
      %c0_62 = arith.constant 0 : index
      %151 = vector.load %arg18[%c0_59, %c0_60, %c0_61, %c0_62] : memref<1x2x8x256xbf16, #tpu.memory_space<vmem>>, vector<1x2x8x256xbf16>
      %152 = vector.shape_cast %151 : vector<1x2x8x256xbf16> to vector<2x8x256xbf16>
      %153 = vector.shape_cast %150 : vector<2x8x256xbf16> to vector<1x2x8x256xbf16>
      tpu.vector_store %arg18[%c0_59, %c0_60, %c0_61, %c0_62], %153 {strides = array<i32>} : memref<1x2x8x256xbf16, #tpu.memory_space<vmem>>, vector<1x2x8x256xbf16>,
    } else {
    }
    %c1_i32_57 = arith.constant 1 : i32
    %146 = arith.cmpi eq, %arg0, %c1_i32_57 : i32
    %147 = arith.extui %146 : i1 to i32
    %c0_i32_58 = arith.constant 0 : i32
    %148 = arith.cmpi ne, %147, %c0_i32_58 : i32
    scf.if %148 {
      %c0_59 = arith.constant 0 : index
      %c0_60 = arith.constant 0 : index
      %149 = vector.load %arg15[%c0_59, %c0_60] : memref<1x256xf32, #tpu.memory_space<vmem>>, vector<1x256xf32>
      %150 = vector.shape_cast %149 : vector<1x256xf32> to vector<256xf32>
      %151 = arith.mulf %141, %141 : vector<16x256xf32>
      %cst_61 = arith.constant dense<0.000000e+00> : vector<16xf32>
      %152 = vector.multi_reduction <add>, %151, %cst_61 [1] : vector<16x256xf32> to vector<16xf32>
      %153 = vector.shape_cast %152 : vector<16xf32> to vector<16x1xf32>
      %cst_62 = arith.constant 2.560000e+02 : f32
      %154 = vector.broadcast %cst_62 : f32 to vector<16x1xf32>
      %155 = arith.divf %153, %154 : vector<16x1xf32>
      %cst_63 = arith.constant 9.99999974E-6 : f32
      %156 = vector.broadcast %cst_63 : f32 to vector<16x1xf32>
      %157 = arith.addf %155, %156 : vector<16x1xf32>
      %158 = math.rsqrt %157 : vector<16x1xf32>
      %159 = vector.broadcast %158 : vector<16x1xf32> to vector<16x256xf32>
      %160 = arith.mulf %141, %159 : vector<16x256xf32>
      %161 = vector.shape_cast %150 : vector<256xf32> to vector<1x256xf32>
      %162 = vector.broadcast %161 : vector<1x256xf32> to vector<16x256xf32>
      %163 = arith.mulf %160, %162 : vector<16x256xf32>
      %164 = vector.shape_cast %163 : vector<16x256xf32> to vector<2x8x256xf32>
      %165 = arith.truncf %164 : vector<2x8x256xf32> to vector<2x8x256xbf16>
      %c0_64 = arith.constant 0 : index
      %c0_65 = arith.constant 0 : index
      %c0_66 = arith.constant 0 : index
      %c0_67 = arith.constant 0 : index
      %166 = vector.load %arg18[%c0_64, %c0_65, %c0_66, %c0_67] : memref<1x2x8x256xbf16, #tpu.memory_space<vmem>>, vector<1x2x8x256xbf16>
      %167 = vector.shape_cast %166 : vector<1x2x8x256xbf16> to vector<2x8x256xbf16>
      %168 = vector.shape_cast %165 : vector<2x8x256xbf16> to vector<1x2x8x256xbf16>
      tpu.vector_store %arg18[%c0_64, %c0_65, %c0_66, %c0_67], %168 {strides = array<i32>} : memref<1x2x8x256xbf16, #tpu.memory_space<vmem>>, vector<1x2x8x256xbf16>,
      %169 = vector.shape_cast %163 : vector<16x256xf32> to vector<2x8x256xf32>
      %170 = vector.extract_strided_slice %169 {offsets = [0, 7, 0], sizes = [2, 1, 256], strides = [1, 1, 1]} : vector<2x8x256xf32> to vector<2x1x256xf32>
      %171 = vector.shape_cast %170 : vector<2x1x256xf32> to vector<2x256xf32>
      %172 = arith.truncf %171 : vector<2x256xf32> to vector<2x256xbf16>
      %c0_68 = arith.constant 0 : index
      %c0_69 = arith.constant 0 : index
      %173 = vector.load %arg16[%c0_68, %c0_69] : memref<256x128xbf16, #tpu.memory_space<vmem>>, vector<256x128xbf16>
      %cst_70 = arith.constant dense<0.000000e+00> : vector<2x128xf32>
      %174 = tpu.matmul %172, %173, %cst_70 {dimension_numbers = #tpu.dot_dimension_numbers<[1], [0], [0], [1], [0, 0, 1, 1], [], []>} : vector<2x256xbf16>, vector<256x128xbf16>, vector<2x128xf32> -> vector<2x128xf32>
      %c0_71 = arith.constant 0 : index
      %c0_72 = arith.constant 0 : index
      %175 = vector.load %arg19[%c0_71, %c0_72] : memref<2x128xf32, #tpu.memory_space<vmem>>, vector<2x128xf32>
      tpu.vector_store %arg19[%c0_71, %c0_72], %174 {strides = array<i32>} : memref<2x128xf32, #tpu.memory_space<vmem>>, vector<2x128xf32>,
    } else {
    }
    return
  }
  func.func @transform_0(%arg0: i32, %arg1: memref<16xi32, #tpu.memory_space<smem>>) -> (i32, i32) {
    %c0_i32 = arith.constant 0 : i32
    %c0_i32_0 = arith.constant 0 : i32
    %c0_i32_1 = arith.constant 0 : i32
    return %c0_i32, %c0_i32_0 : i32, i32
  }
  func.func @transform_1(%arg0: i32, %arg1: memref<16xi32, #tpu.memory_space<smem>>) -> (i32, i32, i32) {
    %c0_i32 = arith.constant 0 : i32
    %c0_i32_0 = arith.constant 0 : i32
    %c0_i32_1 = arith.constant 0 : i32
    return %arg0, %c0_i32, %c0_i32_0 : i32, i32, i32
  }
  func.func @transform_2(%arg0: i32, %arg1: memref<16xi32, #tpu.memory_space<smem>>) -> (i32, i32, i32) {
    %c0_i32 = arith.constant 0 : i32
    %c0_i32_0 = arith.constant 0 : i32
    %c0_i32_1 = arith.constant 0 : i32
    return %arg0, %c0_i32, %c0_i32_0 : i32, i32, i32
  }
  func.func @transform_3(%arg0: i32, %arg1: memref<16xi32, #tpu.memory_space<smem>>) -> (i32, i32, i32) {
    %c0_i32 = arith.constant 0 : i32
    %c0_i32_0 = arith.constant 0 : i32
    %c0_i32_1 = arith.constant 0 : i32
    return %arg0, %c0_i32, %c0_i32_0 : i32, i32, i32
  }
  func.func @transform_4(%arg0: i32, %arg1: memref<16xi32, #tpu.memory_space<smem>>) -> (i32, i32, i32) {
    %c0_i32 = arith.constant 0 : i32
    %c0_i32_0 = arith.constant 0 : i32
    %c0_i32_1 = arith.constant 0 : i32
    return %arg0, %c0_i32, %c0_i32_0 : i32, i32, i32
  }
  func.func @transform_5(%arg0: i32, %arg1: memref<16xi32, #tpu.memory_space<smem>>) -> (i32, i32, i32) {
    %c0_i32 = arith.constant 0 : i32
    %c0_i32_0 = arith.constant 0 : i32
    %c0_i32_1 = arith.constant 0 : i32
    return %arg0, %c0_i32, %c0_i32_0 : i32, i32, i32
  }
  func.func @transform_6(%arg0: i32, %arg1: memref<16xi32, #tpu.memory_space<smem>>) -> (i32, i32, i32) {
    %c0_i32 = arith.constant 0 : i32
    %c0_i32_0 = arith.constant 0 : i32
    %c0_i32_1 = arith.constant 0 : i32
    return %arg0, %c0_i32, %c0_i32_0 : i32, i32, i32
  }
  func.func @transform_7(%arg0: i32, %arg1: memref<16xi32, #tpu.memory_space<smem>>) -> (i32, i32, i32) {
    %c0_i32 = arith.constant 0 : i32
    %c0_i32_0 = arith.constant 0 : i32
    %c0_i32_1 = arith.constant 0 : i32
    return %arg0, %c0_i32, %c0_i32_0 : i32, i32, i32
  }
  func.func @transform_8(%arg0: i32, %arg1: memref<16xi32, #tpu.memory_space<smem>>) -> (i32, i32, i32) {
    %c0_i32 = arith.constant 0 : i32
    %c0_i32_0 = arith.constant 0 : i32
    %c0_i32_1 = arith.constant 0 : i32
    return %arg0, %c0_i32, %c0_i32_0 : i32, i32, i32
  }
  func.func @transform_9(%arg0: i32, %arg1: memref<16xi32, #tpu.memory_space<smem>>) -> (i32, i32, i32) {
    %c0_i32 = arith.constant 0 : i32
    %c0_i32_0 = arith.constant 0 : i32
    %c0_i32_1 = arith.constant 0 : i32
    return %arg0, %c0_i32, %c0_i32_0 : i32, i32, i32
  }
  func.func @transform_10(%arg0: i32, %arg1: memref<16xi32, #tpu.memory_space<smem>>) -> (i32, i32) {
    %c0_i32 = arith.constant 0 : i32
    %c0_i32_0 = arith.constant 0 : i32
    %c0_i32_1 = arith.constant 0 : i32
    return %c0_i32, %c0_i32_0 : i32, i32
  }
  func.func @transform_11(%arg0: i32, %arg1: memref<16xi32, #tpu.memory_space<smem>>) -> (i32, i32) {
    %c0_i32 = arith.constant 0 : i32
    %c0_i32_0 = arith.constant 0 : i32
    %c0_i32_1 = arith.constant 0 : i32
    return %c0_i32, %c0_i32_0 : i32, i32
  }
  func.func @transform_12(%arg0: i32, %arg1: memref<16xi32, #tpu.memory_space<smem>>) -> (i32, i32, i32) {
    %c0_i32 = arith.constant 0 : i32
    %c0_i32_0 = arith.constant 0 : i32
    %c0_i32_1 = arith.constant 0 : i32
    %c0_i32_2 = arith.constant 0 : i32
    return %c0_i32, %c0_i32_0, %c0_i32_1 : i32, i32, i32
  }
  func.func @transform_13(%arg0: i32, %arg1: memref<16xi32, #tpu.memory_space<smem>>) -> (i32, i32) {
    %c0_i32 = arith.constant 0 : i32
    %c0_i32_0 = arith.constant 0 : i32
    %c0_i32_1 = arith.constant 0 : i32
    return %c0_i32, %c0_i32_0 : i32, i32
  }
  func.func @transform_14(%arg0: i32, %arg1: memref<16xi32, #tpu.memory_space<smem>>) -> (i32, i32) {
    %c0_i32 = arith.constant 0 : i32
    %c0_i32_0 = arith.constant 0 : i32
    %c0_i32_1 = arith.constant 0 : i32
    return %c0_i32, %c0_i32_0 : i32, i32
  }
  func.func @transform_15(%arg0: i32, %arg1: memref<16xi32, #tpu.memory_space<smem>>) -> (i32, i32, i32) {
    %c0_i32 = arith.constant 0 : i32
    %c0_i32_0 = arith.constant 0 : i32
    %c0_i32_1 = arith.constant 0 : i32
    %c0_i32_2 = arith.constant 0 : i32
    return %c0_i32, %c0_i32_0, %c0_i32_1 : i32, i32, i32
  }
  func.func @transform_16(%arg0: i32, %arg1: memref<16xi32, #tpu.memory_space<smem>>) -> (i32, i32, i32, i32) {
    %c0_i32 = arith.constant 0 : i32
    %c0_i32_0 = arith.constant 0 : i32
    %c0_i32_1 = arith.constant 0 : i32
    %c0_i32_2 = arith.constant 0 : i32
    return %arg0, %c0_i32, %c0_i32_0, %c0_i32_1 : i32, i32, i32, i32
  }
  func.func @transform_17(%arg0: i32, %arg1: memref<16xi32, #tpu.memory_space<smem>>) -> (i32, i32) {
    %c0_i32 = arith.constant 0 : i32
    %c0_i32_0 = arith.constant 0 : i32
    %c0_i32_1 = arith.constant 0 : i32
    return %c0_i32, %c0_i32_0 : i32, i32
  }
}

</mosaic_0001>

<llo_original>
// kernel: llama2_decoder_forward.1
$region0: #{llama2_decoder_forward.1}
  #allocation0 [shape = 'u32[]', space=smem, size = 0x4, offset = 0x4, fixed_abs, tag = 'smem constant byte address 0x4 - core index']
  #allocation1 [shape = 'u32[72,128]{1,0:T(1,128)}', space=vmem, size = 0x9000, scoped, tag = 'internal scratch']
  #allocation2 [shape = 'f32[16,256]{1,0:T(8,128)}', space=vmem, size = 0x4000, scoped, tag = 'scratch operand']
  #allocation3 [shape = 's32[1]{0}', space=sflag, size = 0x4, scoped, tag = 'scoped memory for llama2_decoder_forward.1']
  #allocation4 [shape = 'u8[512]{0}', space=smem, size = 0x200, scoped, tag = 'prefetched SMEM operand 0']
  %s0 = inlined_call_operand.vmem [shape: s32[16], index: 0, kind: input, shape index: {}]
  %s1 = inlined_call_operand.hbm [shape: f32[128,256], index: 1, kind: input, shape index: {}]
  %s2 = inlined_call_operand.vmem [shape: f32[2,2,256], index: 2, kind: input, shape index: {}]
  %s3 = inlined_call_operand.hbm [shape: s8[2,256,768], index: 3, kind: input, shape index: {}]
  %s4 = inlined_call_operand.vmem [shape: f32[2,1,768], index: 4, kind: input, shape index: {}]
  %s5 = inlined_call_operand.hbm [shape: s8[2,256,256], index: 5, kind: input, shape index: {}]
  %s6 = inlined_call_operand.vmem [shape: f32[2,1,256], index: 6, kind: input, shape index: {}]
  %s7 = inlined_call_operand.hbm [shape: s8[2,256,1024], index: 7, kind: input, shape index: {}]
  %s8 = inlined_call_operand.vmem [shape: f32[2,1,1024], index: 8, kind: input, shape index: {}]
  %s9 = inlined_call_operand.hbm [shape: s8[2,512,256], index: 9, kind: input, shape index: {}]
  %s10 = inlined_call_operand.vmem [shape: f32[2,1,256], index: 10, kind: input, shape index: {}]
  %s11 = inlined_call_operand.vmem [shape: f32[8,128], index: 11, kind: input, shape index: {}]
  %s12 = inlined_call_operand.vmem [shape: f32[8,128], index: 12, kind: input, shape index: {}]
  %s13 = inlined_call_operand.vmem [shape: f32[1,8,8], index: 13, kind: input, shape index: {}]
  %s14 = inlined_call_operand.vmem [shape: f32[1,256], index: 14, kind: input, shape index: {}]
  %s15 = inlined_call_operand.hbm [shape: bf16[256,128], index: 15, kind: input, shape index: {}]
  %s16 = inlined_call_operand.hbm [shape: bf16[2,8,256], index: 16, kind: output, shape index: {0}]
  %s17 = inlined_call_operand.vmem [shape: bf16[2,2,8,256], index: 17, kind: output, shape index: {1}]
  %s18 = inlined_call_operand.hbm [shape: f32[2,128], index: 18, kind: output, shape index: {2}]
  %19 = xla_tuple %s16, %s17, %s18
  %s20 = sld [smem:[#allocation0]]
  $region145: #{llama2_decoder_forward.1} parent=0
    _
  %s22 = ssub.s32 1, %s20
  %s23 = scalar_select 0, %s22, %s20
  %s25 = sshll.u32 %s0, 4
  %s26 = int_to_ptr.vmem [resolvable:$true] %s25
  %28 = dma.vmem_to_smem %s26, 16, [#allocation4], [#allocation3]
  %30 = dma.done [#allocation3], 16
  %31 = sfence
  $region1: #{llama2_decoder_forward.1} parent=0
    #allocation5 [shape = 'u8[131072]{0}', space=vmem, size = 0x20000, scoped, tag = 'input window, operand 1, single buffered']
    #allocation6 [shape = 's32[2]{0}', space=sflag, size = 0x8, scoped, tag = 'scoped memory for llama2_decoder_forward.1']
    #allocation7 [shape = 's32[2]{0}', space=sflag, size = 0x8, scoped, tag = 'scoped memory for llama2_decoder_forward.1']
    #allocation8 [shape = 'u8[393216]{0}', space=vmem, size = 0x60000, scoped, tag = 'input window, operand 3']
    #allocation9 [shape = 's32[2]{0}', space=sflag, size = 0x8, scoped, tag = 'scoped memory for llama2_decoder_forward.1']
    #allocation10 [shape = 'u8[131072]{0}', space=vmem, size = 0x20000, scoped, tag = 'input window, operand 5']
    #allocation11 [shape = 'u8[524288]{0}', space=vmem, size = 0x80000, scoped, tag = 'input window, operand 7']
    #allocation12 [shape = 's32[2]{0}', space=sflag, size = 0x8, scoped, tag = 'scoped memory for llama2_decoder_forward.1']
    #allocation13 [shape = 'u8[262144]{0}', space=vmem, size = 0x40000, scoped, tag = 'input window, operand 9']
    #allocation14 [shape = 'u8[65536]{0}', space=vmem, size = 0x10000, scoped, tag = 'input window, operand 15, single buffered']
    #allocation15 [shape = 's32[1]{0}', space=sflag, size = 0x4, scoped, tag = 'scoped memory for llama2_decoder_forward.1']
    #allocation16 [shape = 'u8[8192]{0}', space=vmem, size = 0x2000, scoped, tag = 'output window, operand 0, single buffered']
    #allocation17 [shape = 'u8[1024]{0}', space=vmem, size = 0x400, scoped, tag = 'output window, operand 2, single buffered']
    #allocation18 [shape = 's32[1]{0}', space=sflag, size = 0x4, scoped, tag = 'scoped memory for llama2_decoder_forward.1']
    %32 = vsyncpa [#allocation6], 0
    %33 = vsyncpa [#allocation9], 0
    %s34 = scalar_lea.sflag [#allocation9], 1
    %35 = vsyncpa %s34, 0
    %36 = vsyncpa [#allocation12], 0
    %s37 = scalar_lea.sflag [#allocation12], 1
    %38 = vsyncpa %s37, 0
    %39 = vsyncpa [#allocation15], 0
    %40 = vsyncpa [#allocation7], 0
    %41 = vsyncpa [#allocation18], 0
    loop: start=0, step=1, limit=4
    $region2: #{llama2_decoder_forward.1} parent=1 // loop_pre_header
      _
    $region3: #{llama2_decoder_forward.1} parent=1 // loop_header
      %s43 = sphi 0, %s47
      %p44 = scmp.ge.s32.totalorder %s43, 4
      %s51 = sphi 0, %s51
      %s53 = sphi 0, %s51
      %s54 = sphi 0, %s53
      %s68 = sphi 0, %s54
      %s74 = sphi 0, %s76
      %s77 = sphi 0, %s74
      %s78 = sphi 0, %s77
      %s94 = sphi 0, %s78
      %s100 = sphi 0, %s102
      %s103 = sphi 0, %s100
      %s104 = sphi 0, %s103
      %s120 = sphi 0, %s104
      %s126 = sphi 0, %s128
      %s129 = sphi 0, %s126
      %s130 = sphi 0, %s129
      %s146 = sphi 0, %s130
      %s152 = sphi 0, %s154
      %s155 = sphi 0, %s152
      %s156 = sphi 0, %s155
      %s172 = sphi 0, %s156
      %s178 = sphi 0, %s180
      %s181 = sphi 0, %s178
      %s182 = sphi 0, %s181
      %s198 = sphi 0, %s182
      %s204 = sphi 0, %s206
      %s207 = sphi 0, %s204
      %s208 = sphi 0, %s207
      %s224 = sphi 0, %s208
      %s230 = sphi 0, %s232
      %s233 = sphi 0, %s230
      %s234 = sphi 0, %s233
      %s250 = sphi 0, %s234
      %s256 = sphi 0, %s258
      %s259 = sphi 0, %s256
      %s260 = sphi 0, %s259
      %s276 = sphi 0, %s260
      %s282 = sphi 0, %s284
      %s285 = sphi 0, %s282
      %s286 = sphi 0, %s285
      %s302 = sphi 0, %s286
      %s306 = sphi 0, %s306
      %s308 = sphi 0, %s306
      %s309 = sphi 0, %s308
      %s323 = sphi 0, %s309
      %s327 = sphi 0, %s327
      %s329 = sphi 0, %s327
      %s330 = sphi 0, %s329
      %s344 = sphi 0, %s330
      %s348 = sphi 0, %s348
      %s350 = sphi 0, %s348
      %s351 = sphi 0, %s350
      %s365 = sphi 0, %s351
      %s369 = sphi 0, %s369
      %s371 = sphi 0, %s369
      %s372 = sphi 0, %s371
      %s386 = sphi 0, %s372
      %s390 = sphi 0, %s390
      %s392 = sphi 0, %s390
      %s393 = sphi 0, %s392
      %s407 = sphi 0, %s393
      %s411 = sphi 0, %s411
      %s413 = sphi 0, %s411
      %s414 = sphi 0, %s413
      %s428 = sphi 0, %s414
      %s434 = sphi 0, %s436
      %s437 = sphi 0, %s434
      %s438 = sphi 0, %s437
      %s454 = sphi 0, %s438
      %s458 = sphi 0, %s458
      %s460 = sphi 0, %s458
      %s461 = sphi 0, %s460
      %s475 = sphi 0, %s461
    $region4: #{llama2_decoder_forward.1} parent=1 // loop_header_branch
      %46 = sbr.rel (%p44) target = $region8
    $region5: #{llama2_decoder_forward.1} parent=1 // loop_body
      %s48 = ssub.s32 %s43, 1
      %s49 = ssub.s32 %s43, 2
      %s50 = sadd.s32 %s43, 1
      %s52 = sadd.s32 %s51, 1
      %p55 = scmp.eq.s32.totalorder %s43, 1
      %p56 = scmp.ne.s32.totalorder %s51, %s53
      %p57 = scmp.eq.s32.totalorder %s43, 0
      %p58 = por %p56, %p57
      %p59 = scmp.ne.s32.totalorder %s51, %s53
      %p60 = scmp.eq.s32.totalorder %s48, 1
      %p61 = por %p59, %p60
      %p62 = scmp.ne.s32.totalorder %s53, %s54
      %p63 = scmp.eq.s32.totalorder %s48, 0
      %p64 = por %p62, %p63
      %p65 = scmp.ne.s32.totalorder %s53, %s54
      %p66 = scmp.eq.s32.totalorder %s49, 1
      %p67 = por %p65, %p66
      %p69 = scmp.ne.s32.totalorder %s54, %s68
      %p70 = scmp.eq.s32.totalorder %s49, 0
      %p71 = por %p69, %p70
      %s72 = ssub.s32 %s43, %s50
      %p73 = scmp.eq.s32.totalorder %s72, 0
      %s75 = sadd.s32 %s74, 1
      %s76 = scalar_select %p73, %s74, %s75
      %p79 = pneg %p73
      %p80 = scmp.eq.s32.totalorder %s43, 1
      %p81 = por %p79, %p80
      %p82 = scmp.ne.s32.totalorder %s74, %s77
      %p83 = scmp.eq.s32.totalorder %s43, 0
      %p84 = por %p82, %p83
      %p85 = scmp.ne.s32.totalorder %s74, %s77
      %p86 = scmp.eq.s32.totalorder %s48, 1
      %p87 = por %p85, %p86
      %p88 = scmp.ne.s32.totalorder %s77, %s78
      %p89 = scmp.eq.s32.totalorder %s48, 0
      %p90 = por %p88, %p89
      %p91 = scmp.ne.s32.totalorder %s77, %s78
      %p92 = scmp.eq.s32.totalorder %s49, 1
      %p93 = por %p91, %p92
      %p95 = scmp.ne.s32.totalorder %s78, %s94
      %p96 = scmp.eq.s32.totalorder %s49, 0
      %p97 = por %p95, %p96
      %s98 = ssub.s32 %s43, %s50
      %p99 = scmp.eq.s32.totalorder %s98, 0
      %s101 = sadd.s32 %s100, 1
      %s102 = scalar_select %p99, %s100, %s101
      %p105 = pneg %p99
      %p106 = scmp.eq.s32.totalorder %s43, 1
      %p107 = por %p105, %p106
      %p108 = scmp.ne.s32.totalorder %s100, %s103
      %p109 = scmp.eq.s32.totalorder %s43, 0
      %p110 = por %p108, %p109
      %p111 = scmp.ne.s32.totalorder %s100, %s103
      %p112 = scmp.eq.s32.totalorder %s48, 1
      %p113 = por %p111, %p112
      %p114 = scmp.ne.s32.totalorder %s103, %s104
      %p115 = scmp.eq.s32.totalorder %s48, 0
      %p116 = por %p114, %p115
      %p117 = scmp.ne.s32.totalorder %s103, %s104
      %p118 = scmp.eq.s32.totalorder %s49, 1
      %p119 = por %p117, %p118
      %p121 = scmp.ne.s32.totalorder %s104, %s120
      %p122 = scmp.eq.s32.totalorder %s49, 0
      %p123 = por %p121, %p122
      %s124 = ssub.s32 %s43, %s50
      %p125 = scmp.eq.s32.totalorder %s124, 0
      %s127 = sadd.s32 %s126, 1
      %s128 = scalar_select %p125, %s126, %s127
      %p131 = pneg %p125
      %p132 = scmp.eq.s32.totalorder %s43, 1
      %p133 = por %p131, %p132
      %p134 = scmp.ne.s32.totalorder %s126, %s129
      %p135 = scmp.eq.s32.totalorder %s43, 0
      %p136 = por %p134, %p135
      %p137 = scmp.ne.s32.totalorder %s126, %s129
      %p138 = scmp.eq.s32.totalorder %s48, 1
      %p139 = por %p137, %p138
      %p140 = scmp.ne.s32.totalorder %s129, %s130
      %p141 = scmp.eq.s32.totalorder %s48, 0
      %p142 = por %p140, %p141
      %p143 = scmp.ne.s32.totalorder %s129, %s130
      %p144 = scmp.eq.s32.totalorder %s49, 1
      %p145 = por %p143, %p144
      %p147 = scmp.ne.s32.totalorder %s130, %s146
      %p148 = scmp.eq.s32.totalorder %s49, 0
      %p149 = por %p147, %p148
      %s150 = ssub.s32 %s43, %s50
      %p151 = scmp.eq.s32.totalorder %s150, 0
      %s153 = sadd.s32 %s152, 1
      %s154 = scalar_select %p151, %s152, %s153
      %p157 = pneg %p151
      %p158 = scmp.eq.s32.totalorder %s43, 1
      %p159 = por %p157, %p158
      %p160 = scmp.ne.s32.totalorder %s152, %s155
      %p161 = scmp.eq.s32.totalorder %s43, 0
      %p162 = por %p160, %p161
      %p163 = scmp.ne.s32.totalorder %s152, %s155
      %p164 = scmp.eq.s32.totalorder %s48, 1
      %p165 = por %p163, %p164
      %p166 = scmp.ne.s32.totalorder %s155, %s156
      %p167 = scmp.eq.s32.totalorder %s48, 0
      %p168 = por %p166, %p167
      %p169 = scmp.ne.s32.totalorder %s155, %s156
      %p170 = scmp.eq.s32.totalorder %s49, 1
      %p171 = por %p169, %p170
      %p173 = scmp.ne.s32.totalorder %s156, %s172
      %p174 = scmp.eq.s32.totalorder %s49, 0
      %p175 = por %p173, %p174
      %s176 = ssub.s32 %s43, %s50
      %p177 = scmp.eq.s32.totalorder %s176, 0
      %s179 = sadd.s32 %s178, 1
      %s180 = scalar_select %p177, %s178, %s179
      %p183 = pneg %p177
      %p184 = scmp.eq.s32.totalorder %s43, 1
      %p185 = por %p183, %p184
      %p186 = scmp.ne.s32.totalorder %s178, %s181
      %p187 = scmp.eq.s32.totalorder %s43, 0
      %p188 = por %p186, %p187
      %p189 = scmp.ne.s32.totalorder %s178, %s181
      %p190 = scmp.eq.s32.totalorder %s48, 1
      %p191 = por %p189, %p190
      %p192 = scmp.ne.s32.totalorder %s181, %s182
      %p193 = scmp.eq.s32.totalorder %s48, 0
      %p194 = por %p192, %p193
      %p195 = scmp.ne.s32.totalorder %s181, %s182
      %p196 = scmp.eq.s32.totalorder %s49, 1
      %p197 = por %p195, %p196
      %p199 = scmp.ne.s32.totalorder %s182, %s198
      %p200 = scmp.eq.s32.totalorder %s49, 0
      %p201 = por %p199, %p200
      %s202 = ssub.s32 %s43, %s50
      %p203 = scmp.eq.s32.totalorder %s202, 0
      %s205 = sadd.s32 %s204, 1
      %s206 = scalar_select %p203, %s204, %s205
      %p209 = pneg %p203
      %p210 = scmp.eq.s32.totalorder %s43, 1
      %p211 = por %p209, %p210
      %p212 = scmp.ne.s32.totalorder %s204, %s207
      %p213 = scmp.eq.s32.totalorder %s43, 0
      %p214 = por %p212, %p213
      %p215 = scmp.ne.s32.totalorder %s204, %s207
      %p216 = scmp.eq.s32.totalorder %s48, 1
      %p217 = por %p215, %p216
      %p218 = scmp.ne.s32.totalorder %s207, %s208
      %p219 = scmp.eq.s32.totalorder %s48, 0
      %p220 = por %p218, %p219
      %p221 = scmp.ne.s32.totalorder %s207, %s208
      %p222 = scmp.eq.s32.totalorder %s49, 1
      %p223 = por %p221, %p222
      %p225 = scmp.ne.s32.totalorder %s208, %s224
      %p226 = scmp.eq.s32.totalorder %s49, 0
      %p227 = por %p225, %p226
      %s228 = ssub.s32 %s43, %s50
      %p229 = scmp.eq.s32.totalorder %s228, 0
      %s231 = sadd.s32 %s230, 1
      %s232 = scalar_select %p229, %s230, %s231
      %p235 = pneg %p229
      %p236 = scmp.eq.s32.totalorder %s43, 1
      %p237 = por %p235, %p236
      %p238 = scmp.ne.s32.totalorder %s230, %s233
      %p239 = scmp.eq.s32.totalorder %s43, 0
      %p240 = por %p238, %p239
      %p241 = scmp.ne.s32.totalorder %s230, %s233
      %p242 = scmp.eq.s32.totalorder %s48, 1
      %p243 = por %p241, %p242
      %p244 = scmp.ne.s32.totalorder %s233, %s234
      %p245 = scmp.eq.s32.totalorder %s48, 0
      %p246 = por %p244, %p245
      %p247 = scmp.ne.s32.totalorder %s233, %s234
      %p248 = scmp.eq.s32.totalorder %s49, 1
      %p249 = por %p247, %p248
      %p251 = scmp.ne.s32.totalorder %s234, %s250
      %p252 = scmp.eq.s32.totalorder %s49, 0
      %p253 = por %p251, %p252
      %s254 = ssub.s32 %s43, %s50
      %p255 = scmp.eq.s32.totalorder %s254, 0
      %s257 = sadd.s32 %s256, 1
      %s258 = scalar_select %p255, %s256, %s257
      %p261 = pneg %p255
      %p262 = scmp.eq.s32.totalorder %s43, 1
      %p263 = por %p261, %p262
      %p264 = scmp.ne.s32.totalorder %s256, %s259
      %p265 = scmp.eq.s32.totalorder %s43, 0
      %p266 = por %p264, %p265
      %p267 = scmp.ne.s32.totalorder %s256, %s259
      %p268 = scmp.eq.s32.totalorder %s48, 1
      %p269 = por %p267, %p268
      %p270 = scmp.ne.s32.totalorder %s259, %s260
      %p271 = scmp.eq.s32.totalorder %s48, 0
      %p272 = por %p270, %p271
      %p273 = scmp.ne.s32.totalorder %s259, %s260
      %p274 = scmp.eq.s32.totalorder %s49, 1
      %p275 = por %p273, %p274
      %p277 = scmp.ne.s32.totalorder %s260, %s276
      %p278 = scmp.eq.s32.totalorder %s49, 0
      %p279 = por %p277, %p278
      %s280 = ssub.s32 %s43, %s50
      %p281 = scmp.eq.s32.totalorder %s280, 0
      %s283 = sadd.s32 %s282, 1
      %s284 = scalar_select %p281, %s282, %s283
      %p287 = pneg %p281
      %p288 = scmp.eq.s32.totalorder %s43, 1
      %p289 = por %p287, %p288
      %p290 = scmp.ne.s32.totalorder %s282, %s285
      %p291 = scmp.eq.s32.totalorder %s43, 0
      %p292 = por %p290, %p291
      %p293 = scmp.ne.s32.totalorder %s282, %s285
      %p294 = scmp.eq.s32.totalorder %s48, 1
      %p295 = por %p293, %p294
      %p296 = scmp.ne.s32.totalorder %s285, %s286
      %p297 = scmp.eq.s32.totalorder %s48, 0
      %p298 = por %p296, %p297
      %p299 = scmp.ne.s32.totalorder %s285, %s286
      %p300 = scmp.eq.s32.totalorder %s49, 1
      %p301 = por %p299, %p300
      %p303 = scmp.ne.s32.totalorder %s286, %s302
      %p304 = scmp.eq.s32.totalorder %s49, 0
      %p305 = por %p303, %p304
      %s307 = sadd.s32 %s306, 1
      %p310 = scmp.eq.s32.totalorder %s43, 1
      %p311 = scmp.ne.s32.totalorder %s306, %s308
      %p312 = scmp.eq.s32.totalorder %s43, 0
      %p313 = por %p311, %p312
      %p314 = scmp.ne.s32.totalorder %s306, %s308
      %p315 = scmp.eq.s32.totalorder %s48, 1
      %p316 = por %p314, %p315
      %p317 = scmp.ne.s32.totalorder %s308, %s309
      %p318 = scmp.eq.s32.totalorder %s48, 0
      %p319 = por %p317, %p318
      %p320 = scmp.ne.s32.totalorder %s308, %s309
      %p321 = scmp.eq.s32.totalorder %s49, 1
      %p322 = por %p320, %p321
      %p324 = scmp.ne.s32.totalorder %s309, %s323
      %p325 = scmp.eq.s32.totalorder %s49, 0
      %p326 = por %p324, %p325
      %s328 = sadd.s32 %s327, 1
      %p331 = scmp.eq.s32.totalorder %s43, 1
      %p332 = scmp.ne.s32.totalorder %s327, %s329
      %p333 = scmp.eq.s32.totalorder %s43, 0
      %p334 = por %p332, %p333
      %p335 = scmp.ne.s32.totalorder %s327, %s329
      %p336 = scmp.eq.s32.totalorder %s48, 1
      %p337 = por %p335, %p336
      %p338 = scmp.ne.s32.totalorder %s329, %s330
      %p339 = scmp.eq.s32.totalorder %s48, 0
      %p340 = por %p338, %p339
      %p341 = scmp.ne.s32.totalorder %s329, %s330
      %p342 = scmp.eq.s32.totalorder %s49, 1
      %p343 = por %p341, %p342
      %p345 = scmp.ne.s32.totalorder %s330, %s344
      %p346 = scmp.eq.s32.totalorder %s49, 0
      %p347 = por %p345, %p346
      %s349 = sadd.s32 %s348, 1
      %p352 = scmp.eq.s32.totalorder %s43, 1
      %p353 = scmp.ne.s32.totalorder %s348, %s350
      %p354 = scmp.eq.s32.totalorder %s43, 0
      %p355 = por %p353, %p354
      %p356 = scmp.ne.s32.totalorder %s348, %s350
      %p357 = scmp.eq.s32.totalorder %s48, 1
      %p358 = por %p356, %p357
      %p359 = scmp.ne.s32.totalorder %s350, %s351
      %p360 = scmp.eq.s32.totalorder %s48, 0
      %p361 = por %p359, %p360
      %p362 = scmp.ne.s32.totalorder %s350, %s351
      %p363 = scmp.eq.s32.totalorder %s49, 1
      %p364 = por %p362, %p363
      %p366 = scmp.ne.s32.totalorder %s351, %s365
      %p367 = scmp.eq.s32.totalorder %s49, 0
      %p368 = por %p366, %p367
      %s370 = sadd.s32 %s369, 1
      %p373 = scmp.eq.s32.totalorder %s43, 1
      %p374 = scmp.ne.s32.totalorder %s369, %s371
      %p375 = scmp.eq.s32.totalorder %s43, 0
      %p376 = por %p374, %p375
      %p377 = scmp.ne.s32.totalorder %s369, %s371
      %p378 = scmp.eq.s32.totalorder %s48, 1
      %p379 = por %p377, %p378
      %p380 = scmp.ne.s32.totalorder %s371, %s372
      %p381 = scmp.eq.s32.totalorder %s48, 0
      %p382 = por %p380, %p381
      %p383 = scmp.ne.s32.totalorder %s371, %s372
      %p384 = scmp.eq.s32.totalorder %s49, 1
      %p385 = por %p383, %p384
      %p387 = scmp.ne.s32.totalorder %s372, %s386
      %p388 = scmp.eq.s32.totalorder %s49, 0
      %p389 = por %p387, %p388
      %s391 = sadd.s32 %s390, 1
      %p394 = scmp.eq.s32.totalorder %s43, 1
      %p395 = scmp.ne.s32.totalorder %s390, %s392
      %p396 = scmp.eq.s32.totalorder %s43, 0
      %p397 = por %p395, %p396
      %p398 = scmp.ne.s32.totalorder %s390, %s392
      %p399 = scmp.eq.s32.totalorder %s48, 1
      %p400 = por %p398, %p399
      %p401 = scmp.ne.s32.totalorder %s392, %s393
      %p402 = scmp.eq.s32.totalorder %s48, 0
      %p403 = por %p401, %p402
      %p404 = scmp.ne.s32.totalorder %s392, %s393
      %p405 = scmp.eq.s32.totalorder %s49, 1
      %p406 = por %p404, %p405
      %p408 = scmp.ne.s32.totalorder %s393, %s407
      %p409 = scmp.eq.s32.totalorder %s49, 0
      %p410 = por %p408, %p409
      %s412 = sadd.s32 %s411, 1
      %p415 = scmp.eq.s32.totalorder %s43, 1
      %p416 = scmp.ne.s32.totalorder %s411, %s413
      %p417 = scmp.eq.s32.totalorder %s43, 0
      %p418 = por %p416, %p417
      %p419 = scmp.ne.s32.totalorder %s411, %s413
      %p420 = scmp.eq.s32.totalorder %s48, 1
      %p421 = por %p419, %p420
      %p422 = scmp.ne.s32.totalorder %s413, %s414
      %p423 = scmp.eq.s32.totalorder %s48, 0
      %p424 = por %p422, %p423
      %p425 = scmp.ne.s32.totalorder %s413, %s414
      %p426 = scmp.eq.s32.totalorder %s49, 1
      %p427 = por %p425, %p426
      %p429 = scmp.ne.s32.totalorder %s414, %s428
      %p430 = scmp.eq.s32.totalorder %s49, 0
      %p431 = por %p429, %p430
      %s432 = ssub.s32 %s43, %s50
      %p433 = scmp.eq.s32.totalorder %s432, 0
      %s435 = sadd.s32 %s434, 1
      %s436 = scalar_select %p433, %s434, %s435
      %p439 = pneg %p433
      %p440 = scmp.eq.s32.totalorder %s43, 1
      %p441 = por %p439, %p440
      %p442 = scmp.ne.s32.totalorder %s434, %s437
      %p443 = scmp.eq.s32.totalorder %s43, 0
      %p444 = por %p442, %p443
      %p445 = scmp.ne.s32.totalorder %s434, %s437
      %p446 = scmp.eq.s32.totalorder %s48, 1
      %p447 = por %p445, %p446
      %p448 = scmp.ne.s32.totalorder %s437, %s438
      %p449 = scmp.eq.s32.totalorder %s48, 0
      %p450 = por %p448, %p449
      %p451 = scmp.ne.s32.totalorder %s437, %s438
      %p452 = scmp.eq.s32.totalorder %s49, 1
      %p453 = por %p451, %p452
      %p455 = scmp.ne.s32.totalorder %s438, %s454
      %p456 = scmp.eq.s32.totalorder %s49, 0
      %p457 = por %p455, %p456
      %s459 = sadd.s32 %s458, 1
      %p462 = scmp.eq.s32.totalorder %s43, 1
      %p463 = scmp.ne.s32.totalorder %s458, %s460
      %p464 = scmp.eq.s32.totalorder %s43, 0
      %p465 = por %p463, %p464
      %p466 = scmp.ne.s32.totalorder %s458, %s460
      %p467 = scmp.eq.s32.totalorder %s48, 1
      %p468 = por %p466, %p467
      %p469 = scmp.ne.s32.totalorder %s460, %s461
      %p470 = scmp.eq.s32.totalorder %s48, 0
      %p471 = por %p469, %p470
      %p472 = scmp.ne.s32.totalorder %s460, %s461
      %p473 = scmp.eq.s32.totalorder %s49, 1
      %p474 = por %p472, %p473
      %p476 = scmp.ne.s32.totalorder %s461, %s475
      %p477 = scmp.eq.s32.totalorder %s49, 0
      %p478 = por %p476, %p477
      %p479 = scmp.le.s32.totalorder 1, %s43
      %p480 = scmp.lt.s32.totalorder %s43, 3
      %p481 = pnand %p479, %p480
      %p482 = pneg %p481
      // Predicated region
      $region9: #{llama2_decoder_forward.1} parent=5 // pred_check
        _
      $region10: #{llama2_decoder_forward.1} parent=5 // pred_check_branch
        %484 = sbr.rel (%p481) target = $region12
      $region11: #{llama2_decoder_forward.1} parent=5 // pred_region
        %s485 = ssub.s32 %s43, 1
        // Predicated region
        $region13: #{llama2_decoder_forward.1} parent=11 // pred_check
          %p486 = pneg %p64
        $region14: #{llama2_decoder_forward.1} parent=11 // pred_check_branch
          %488 = sbr.rel (%p486) target = $region16
        $region15: #{llama2_decoder_forward.1} parent=11 // pred_region
          %490 = vsyncadd [#allocation6], 0
          %s491 = sshll.u32 %s1, 4
          %s492 = int_to_ptr.hbm [resolvable:$true] %s491
          %s493 = sshll.u32 [#allocation5], 4
          %s494 = int_to_ptr.vmem [resolvable:$true] %s493
          %499 = dma.hbm_to_vmem [thread:$0]  %s492, 4096, %s494, [#allocation6], 256, 256, 16
        $region16: #{llama2_decoder_forward.1} parent=11 // pred_fallthru
          _
        // Predicated region
        $region17: #{llama2_decoder_forward.1} parent=11 // pred_check
          %p500 = pneg %p319
        $region18: #{llama2_decoder_forward.1} parent=11 // pred_check_branch
          %502 = sbr.rel (%p500) target = $region20
        $region19: #{llama2_decoder_forward.1} parent=11 // pred_region
          _
        $region20: #{llama2_decoder_forward.1} parent=11 // pred_fallthru
          _
        // Predicated region
        $region21: #{llama2_decoder_forward.1} parent=11 // pred_check
          %p503 = pneg %p340
        $region22: #{llama2_decoder_forward.1} parent=11 // pred_check_branch
          %505 = sbr.rel (%p503) target = $region24
        $region23: #{llama2_decoder_forward.1} parent=11 // pred_region
          _
        $region24: #{llama2_decoder_forward.1} parent=11 // pred_fallthru
          _
        // Predicated region
        $region25: #{llama2_decoder_forward.1} parent=11 // pred_check
          %p506 = pneg %p361
        $region26: #{llama2_decoder_forward.1} parent=11 // pred_check_branch
          %508 = sbr.rel (%p506) target = $region28
        $region27: #{llama2_decoder_forward.1} parent=11 // pred_region
          _
        $region28: #{llama2_decoder_forward.1} parent=11 // pred_fallthru
          _
        // Predicated region
        $region29: #{llama2_decoder_forward.1} parent=11 // pred_check
          %p509 = pneg %p382
        $region30: #{llama2_decoder_forward.1} parent=11 // pred_check_branch
          %511 = sbr.rel (%p509) target = $region32
        $region31: #{llama2_decoder_forward.1} parent=11 // pred_region
          _
        $region32: #{llama2_decoder_forward.1} parent=11 // pred_fallthru
          _
        // Predicated region
        $region33: #{llama2_decoder_forward.1} parent=11 // pred_check
          %p512 = pneg %p403
        $region34: #{llama2_decoder_forward.1} parent=11 // pred_check_branch
          %514 = sbr.rel (%p512) target = $region36
        $region35: #{llama2_decoder_forward.1} parent=11 // pred_region
          %516 = vsyncadd [#allocation15], 0
          %s517 = sshll.u32 %s15, 4
          %s518 = int_to_ptr.hbm [resolvable:$true] %s517
          %s519 = sshll.u32 [#allocation14], 4
          %s520 = int_to_ptr.vmem [resolvable:$true] %s519
          %525 = dma.hbm_to_vmem [thread:$0]  %s518, 2048, %s520, [#allocation15], 64, 64, 4
        $region36: #{llama2_decoder_forward.1} parent=11 // pred_fallthru
          _
      $region12: #{llama2_decoder_forward.1} parent=5 // pred_fallthru
        _
      %p526 = scmp.lt.s32.totalorder %s43, 2
      // Predicated region
      $region37: #{llama2_decoder_forward.1} parent=5 // pred_check
        %p527 = pneg %p526
      $region38: #{llama2_decoder_forward.1} parent=5 // pred_check_branch
        %529 = sbr.rel (%p527) target = $region40
      $region39: #{llama2_decoder_forward.1} parent=5 // pred_region
        // Predicated region
        $region41: #{llama2_decoder_forward.1} parent=39 // pred_check
          %p530 = pneg %p84
        $region42: #{llama2_decoder_forward.1} parent=39 // pred_check_branch
          %532 = sbr.rel (%p530) target = $region44
        $region43: #{llama2_decoder_forward.1} parent=39 // pred_region
          %p533 = scmp.lt.s32.totalorder %s43, 1
          %s534 = scalar_select %p533, %s43, 1
          %s535 = smul.addr %s534, 2
          %s536 = smul.addr %s535, 2
          %s537 = scalar_lea.vmem %s2, %s536
        $region44: #{llama2_decoder_forward.1} parent=39 // pred_fallthru
          _
        // Predicated region
        $region45: #{llama2_decoder_forward.1} parent=39 // pred_check
          %p538 = pneg %p110
        $region46: #{llama2_decoder_forward.1} parent=39 // pred_check_branch
          %540 = sbr.rel (%p538) target = $region48
        $region47: #{llama2_decoder_forward.1} parent=39 // pred_region
          %s541 = sand.u32 %s43, 1
          %s542 = scalar_lea.sflag [#allocation9], %s541
          %s543 = sand.u32 %s100, 1
          %s544 = smul.addr %s543, 384
          %s545 = scalar_lea.vmem [#allocation8], %s544
          %547 = vsyncadd %s542, 0
          %s548 = smul.addr %s43, 48
          %s549 = smul.addr %s548, 8
          %s550 = scalar_lea.hbm %s3, %s549
          %s551 = sshll.u32 %s550, 4
          %s552 = int_to_ptr.hbm [resolvable:$true] %s551
          %s553 = sshll.u32 %s545, 4
          %s554 = int_to_ptr.vmem [resolvable:$true] %s553
          %559 = dma.hbm_to_vmem [thread:$0]  %s552, 6144, %s554, %s542, 768, 768, 48
        $region48: #{llama2_decoder_forward.1} parent=39 // pred_fallthru
          _
        // Predicated region
        $region49: #{llama2_decoder_forward.1} parent=39 // pred_check
          %p560 = pneg %p136
        $region50: #{llama2_decoder_forward.1} parent=39 // pred_check_branch
          %562 = sbr.rel (%p560) target = $region52
        $region51: #{llama2_decoder_forward.1} parent=39 // pred_region
          %p563 = scmp.lt.s32.totalorder %s43, 1
          %s564 = scalar_select %p563, %s43, 1
          %s565 = smul.addr %s564, 6
          %s566 = scalar_lea.vmem %s4, %s565
        $region52: #{llama2_decoder_forward.1} parent=39 // pred_fallthru
          _
        // Predicated region
        $region53: #{llama2_decoder_forward.1} parent=39 // pred_check
          %p567 = pneg %p162
        $region54: #{llama2_decoder_forward.1} parent=39 // pred_check_branch
          %569 = sbr.rel (%p567) target = $region56
        $region55: #{llama2_decoder_forward.1} parent=39 // pred_region
          %s570 = sand.u32 %s43, 1
          %s571 = scalar_lea.sflag [#allocation9], %s570
          %s572 = sand.u32 %s152, 1
          %s573 = smul.addr %s572, 128
          %s574 = scalar_lea.vmem [#allocation10], %s573
          %576 = vsyncadd %s571, 0
          %s577 = smul.addr %s43, 16
          %s578 = smul.addr %s577, 8
          %s579 = scalar_lea.hbm %s5, %s578
          %s580 = sshll.u32 %s579, 4
          %s581 = int_to_ptr.hbm [resolvable:$true] %s580
          %s582 = sshll.u32 %s574, 4
          %s583 = int_to_ptr.vmem [resolvable:$true] %s582
          %588 = dma.hbm_to_vmem [thread:$0]  %s581, 2048, %s583, %s571, 256, 256, 16
        $region56: #{llama2_decoder_forward.1} parent=39 // pred_fallthru
          _
        // Predicated region
        $region57: #{llama2_decoder_forward.1} parent=39 // pred_check
          %p589 = pneg %p188
        $region58: #{llama2_decoder_forward.1} parent=39 // pred_check_branch
          %591 = sbr.rel (%p589) target = $region60
        $region59: #{llama2_decoder_forward.1} parent=39 // pred_region
          %p592 = scmp.lt.s32.totalorder %s43, 1
          %s593 = scalar_select %p592, %s43, 1
          %s594 = smul.addr %s593, 2
          %s595 = scalar_lea.vmem %s6, %s594
        $region60: #{llama2_decoder_forward.1} parent=39 // pred_fallthru
          _
        // Predicated region
        $region61: #{llama2_decoder_forward.1} parent=39 // pred_check
          %p596 = pneg %p214
        $region62: #{llama2_decoder_forward.1} parent=39 // pred_check_branch
          %598 = sbr.rel (%p596) target = $region64
        $region63: #{llama2_decoder_forward.1} parent=39 // pred_region
          %s599 = sand.u32 %s43, 1
          %s600 = scalar_lea.sflag [#allocation12], %s599
          %s601 = sand.u32 %s204, 1
          %s602 = smul.addr %s601, 512
          %s603 = scalar_lea.vmem [#allocation11], %s602
          %605 = vsyncadd %s600, 0
          %s606 = smul.addr %s43, 64
          %s607 = smul.addr %s606, 8
          %s608 = scalar_lea.hbm %s7, %s607
          %s609 = sshll.u32 %s608, 4
          %s610 = int_to_ptr.hbm [resolvable:$true] %s609
          %s611 = sshll.u32 %s603, 4
          %s612 = int_to_ptr.vmem [resolvable:$true] %s611
          %617 = dma.hbm_to_vmem [thread:$0]  %s610, 8192, %s612, %s600, 1024, 1024, 64
        $region64: #{llama2_decoder_forward.1} parent=39 // pred_fallthru
          _
        // Predicated region
        $region65: #{llama2_decoder_forward.1} parent=39 // pred_check
          %p618 = pneg %p240
        $region66: #{llama2_decoder_forward.1} parent=39 // pred_check_branch
          %620 = sbr.rel (%p618) target = $region68
        $region67: #{llama2_decoder_forward.1} parent=39 // pred_region
          %p621 = scmp.lt.s32.totalorder %s43, 1
          %s622 = scalar_select %p621, %s43, 1
          %s623 = smul.addr %s622, 8
          %s624 = scalar_lea.vmem %s8, %s623
        $region68: #{llama2_decoder_forward.1} parent=39 // pred_fallthru
          _
        // Predicated region
        $region69: #{llama2_decoder_forward.1} parent=39 // pred_check
          %p625 = pneg %p266
        $region70: #{llama2_decoder_forward.1} parent=39 // pred_check_branch
          %627 = sbr.rel (%p625) target = $region72
        $region71: #{llama2_decoder_forward.1} parent=39 // pred_region
          %s628 = sand.u32 %s43, 1
          %s629 = scalar_lea.sflag [#allocation12], %s628
          %s630 = sand.u32 %s256, 1
          %s631 = smul.addr %s630, 256
          %s632 = scalar_lea.vmem [#allocation13], %s631
          %634 = vsyncadd %s629, 0
          %s635 = smul.addr %s43, 32
          %s636 = smul.addr %s635, 8
          %s637 = scalar_lea.hbm %s9, %s636
          %s638 = sshll.u32 %s637, 4
          %s639 = int_to_ptr.hbm [resolvable:$true] %s638
          %s640 = sshll.u32 %s632, 4
          %s641 = int_to_ptr.vmem [resolvable:$true] %s640
          %646 = dma.hbm_to_vmem [thread:$0]  %s639, 4096, %s641, %s629, 256, 256, 16
        $region72: #{llama2_decoder_forward.1} parent=39 // pred_fallthru
          _
        // Predicated region
        $region73: #{llama2_decoder_forward.1} parent=39 // pred_check
          %p647 = pneg %p292
        $region74: #{llama2_decoder_forward.1} parent=39 // pred_check_branch
          %649 = sbr.rel (%p647) target = $region76
        $region75: #{llama2_decoder_forward.1} parent=39 // pred_region
          %p650 = scmp.lt.s32.totalorder %s43, 1
          %s651 = scalar_select %p650, %s43, 1
          %s652 = smul.addr %s651, 2
          %s653 = scalar_lea.vmem %s10, %s652
        $region76: #{llama2_decoder_forward.1} parent=39 // pred_fallthru
          _
      $region40: #{llama2_decoder_forward.1} parent=5 // pred_fallthru
        _
      %p654 = scmp.le.s32.totalorder 1, %s43
      %p655 = scmp.lt.s32.totalorder %s43, 3
      %p656 = pnand %p654, %p655
      %p657 = pneg %p656
      // Predicated region
      $region77: #{llama2_decoder_forward.1} parent=5 // pred_check
        _
      $region78: #{llama2_decoder_forward.1} parent=5 // pred_check_branch
        %659 = sbr.rel (%p656) target = $region80
      $region79: #{llama2_decoder_forward.1} parent=5 // pred_region
        %s660 = ssub.s32 %s43, 1
        // Predicated region
        $region81: #{llama2_decoder_forward.1} parent=79 // pred_check
          %p661 = pneg %p64
        $region82: #{llama2_decoder_forward.1} parent=79 // pred_check_branch
          %663 = sbr.rel (%p661) target = $region84
        $region83: #{llama2_decoder_forward.1} parent=79 // pred_region
          %665 = dma.done [#allocation6], 4096
        $region84: #{llama2_decoder_forward.1} parent=79 // pred_fallthru
          _
        %s666 = sand.u32 %s48, 1
        %s667 = scalar_lea.sflag [#allocation9], %s666
        %s668 = sand.u32 %s103, 1
        %s669 = smul.addr %s668, 384
        %s670 = scalar_lea.vmem [#allocation8], %s669
        // Predicated region
        $region85: #{llama2_decoder_forward.1} parent=79 // pred_check
          %p671 = pneg %p116
        $region86: #{llama2_decoder_forward.1} parent=79 // pred_check_branch
          %673 = sbr.rel (%p671) target = $region88
        $region87: #{llama2_decoder_forward.1} parent=79 // pred_region
          %675 = dma.done %s667, 6144
        $region88: #{llama2_decoder_forward.1} parent=79 // pred_fallthru
          _
        %s676 = sand.u32 %s48, 1
        %s677 = scalar_lea.sflag [#allocation9], %s676
        %s678 = sand.u32 %s155, 1
        %s679 = smul.addr %s678, 128
        %s680 = scalar_lea.vmem [#allocation10], %s679
        // Predicated region
        $region89: #{llama2_decoder_forward.1} parent=79 // pred_check
          %p681 = pneg %p168
        $region90: #{llama2_decoder_forward.1} parent=79 // pred_check_branch
          %683 = sbr.rel (%p681) target = $region92
        $region91: #{llama2_decoder_forward.1} parent=79 // pred_region
          %685 = dma.done %s677, 2048
        $region92: #{llama2_decoder_forward.1} parent=79 // pred_fallthru
          _
        %s686 = sand.u32 %s48, 1
        %s687 = scalar_lea.sflag [#allocation12], %s686
        %s688 = sand.u32 %s207, 1
        %s689 = smul.addr %s688, 512
        %s690 = scalar_lea.vmem [#allocation11], %s689
        // Predicated region
        $region93: #{llama2_decoder_forward.1} parent=79 // pred_check
          %p691 = pneg %p220
        $region94: #{llama2_decoder_forward.1} parent=79 // pred_check_branch
          %693 = sbr.rel (%p691) target = $region96
        $region95: #{llama2_decoder_forward.1} parent=79 // pred_region
          %695 = dma.done %s687, 8192
        $region96: #{llama2_decoder_forward.1} parent=79 // pred_fallthru
          _
        %s696 = sand.u32 %s48, 1
        %s697 = scalar_lea.sflag [#allocation12], %s696
        %s698 = sand.u32 %s259, 1
        %s699 = smul.addr %s698, 256
        %s700 = scalar_lea.vmem [#allocation13], %s699
        // Predicated region
        $region97: #{llama2_decoder_forward.1} parent=79 // pred_check
          %p701 = pneg %p272
        $region98: #{llama2_decoder_forward.1} parent=79 // pred_check_branch
          %703 = sbr.rel (%p701) target = $region100
        $region99: #{llama2_decoder_forward.1} parent=79 // pred_region
          %705 = dma.done %s697, 4096
        $region100: #{llama2_decoder_forward.1} parent=79 // pred_fallthru
          _
        // Predicated region
        $region101: #{llama2_decoder_forward.1} parent=79 // pred_check
          %p706 = pneg %p403
        $region102: #{llama2_decoder_forward.1} parent=79 // pred_check_branch
          %708 = sbr.rel (%p706) target = $region104
        $region103: #{llama2_decoder_forward.1} parent=79 // pred_region
          %710 = dma.done [#allocation15], 2048
        $region104: #{llama2_decoder_forward.1} parent=79 // pred_fallthru
          _
        %p711 = pneg %p64
        %p712 = pneg %p61
        %p713 = scmp.lt.s32.totalorder %s48, 1
        %s714 = scalar_select %p713, %s48, 1
        %s715 = smul.addr %s714, 2
        %s716 = smul.addr %s715, 2
        %s717 = scalar_lea.vmem %s2, %s716
        %p718 = pneg %p90
        %p719 = pneg %p87
        %s720 = sand.u32 %s48, 1
        %s721 = scalar_lea.sflag [#allocation9], %s720
        %s722 = sand.u32 %s103, 1
        %s723 = smul.addr %s722, 384
        %s724 = scalar_lea.vmem [#allocation8], %s723
        %p725 = pneg %p116
        %p726 = pneg %p113
        %p727 = scmp.lt.s32.totalorder %s48, 1
        %s728 = scalar_select %p727, %s48, 1
        %s729 = smul.addr %s728, 6
        %s730 = scalar_lea.vmem %s4, %s729
        %p731 = pneg %p142
        %p732 = pneg %p139
        %s733 = sand.u32 %s48, 1
        %s734 = scalar_lea.sflag [#allocation9], %s733
        %s735 = sand.u32 %s155, 1
        %s736 = smul.addr %s735, 128
        %s737 = scalar_lea.vmem [#allocation10], %s736
        %p738 = pneg %p168
        %p739 = pneg %p165
        %p740 = scmp.lt.s32.totalorder %s48, 1
        %s741 = scalar_select %p740, %s48, 1
        %s742 = smul.addr %s741, 2
        %s743 = scalar_lea.vmem %s6, %s742
        %p744 = pneg %p194
        %p745 = pneg %p191
        %s746 = sand.u32 %s48, 1
        %s747 = scalar_lea.sflag [#allocation12], %s746
        %s748 = sand.u32 %s207, 1
        %s749 = smul.addr %s748, 512
        %s750 = scalar_lea.vmem [#allocation11], %s749
        %p751 = pneg %p220
        %p752 = pneg %p217
        %p753 = scmp.lt.s32.totalorder %s48, 1
        %s754 = scalar_select %p753, %s48, 1
        %s755 = smul.addr %s754, 8
        %s756 = scalar_lea.vmem %s8, %s755
        %p757 = pneg %p246
        %p758 = pneg %p243
        %s759 = sand.u32 %s48, 1
        %s760 = scalar_lea.sflag [#allocation12], %s759
        %s761 = sand.u32 %s259, 1
        %s762 = smul.addr %s761, 256
        %s763 = scalar_lea.vmem [#allocation13], %s762
        %p764 = pneg %p272
        %p765 = pneg %p269
        %p766 = scmp.lt.s32.totalorder %s48, 1
        %s767 = scalar_select %p766, %s48, 1
        %s768 = smul.addr %s767, 2
        %s769 = scalar_lea.vmem %s10, %s768
        %p770 = pneg %p298
        %p771 = pneg %p295
        %p772 = pneg %p319
        %p773 = pneg %p316
        %p774 = pneg %p340
        %p775 = pneg %p337
        %p776 = pneg %p361
        %p777 = pneg %p358
        %p778 = pneg %p382
        %p779 = pneg %p379
        %p780 = pneg %p403
        %p781 = pneg %p400
        %p782 = pneg %p424
        %p783 = pneg %p421
        %p784 = pneg %p450
        %p785 = pneg %p447
        %p786 = scmp.lt.s32.totalorder %s48, 1
        %s787 = scalar_select %p786, %s48, 1
        %s788 = smul.addr %s787, 4
        %s789 = smul.addr %s788, 4
        %s790 = scalar_lea.vmem %s17, %s789
        %p791 = pneg %p471
        %p792 = pneg %p468
        %p793 = scmp.lt.s32.totalorder %s48, 1
        %s794 = scalar_select %p793, %s48, 1
        %s795 = smul.addr %s794, 2
        %s796 = smul.addr %s795, 2
        %s797 = scalar_lea.vmem %s2, %s796
        %p798 = scmp.lt.s32.totalorder %s48, 1
        %s799 = scalar_select %p798, %s48, 1
        %s800 = smul.addr %s799, 6
        %s801 = scalar_lea.vmem %s4, %s800
        %p802 = scmp.lt.s32.totalorder %s48, 1
        %s803 = scalar_select %p802, %s48, 1
        %s804 = smul.addr %s803, 2
        %s805 = scalar_lea.vmem %s6, %s804
        %p806 = scmp.lt.s32.totalorder %s48, 1
        %s807 = scalar_select %p806, %s48, 1
        %s808 = smul.addr %s807, 8
        %s809 = scalar_lea.vmem %s8, %s808
        %p810 = scmp.lt.s32.totalorder %s48, 1
        %s811 = scalar_select %p810, %s48, 1
        %s812 = smul.addr %s811, 2
        %s813 = scalar_lea.vmem %s10, %s812
        %p814 = scmp.lt.s32.totalorder %s48, 1
        %s815 = scalar_select %p814, %s48, 1
        %s816 = smul.addr %s815, 4
        %s817 = smul.addr %s816, 4
        %s818 = scalar_lea.vmem %s17, %s817
        %p820 = scmp.eq.s32.totalorder %s48, 0
        // Predicated region
        $region105: #{llama2_decoder_forward.1} parent=79 // pred_check
          %p821 = pneg %p820
        $region106: #{llama2_decoder_forward.1} parent=79 // pred_check_branch
          %823 = sbr.rel (%p821) target = $region108
        $region107: #{llama2_decoder_forward.1} parent=79 // pred_region
          %s824 = sld [smem:[#allocation4]]
          %s825 = sshra.s32 %s824, 3
          %s826 = sand.u32 %s824, 7
          %s827 = sshra.s32 %s824, 3
          %s828 = sand.u32 %s824, 7
          %s829 = smul.u32 %s825, 2
          %s830 = smul.u32 %s829, 8
          %s831 = sadd.s32 %s830, %s828
          %s832 = scalar_lea.vmem [#allocation5], %s831
          %v833 = vld [vmem:[%s832] ss:$8 sm:$0x3]
          %s834 = sld [smem:[#allocation4 + $0x1]]
          %s835 = sshra.s32 %s834, 3
          %s836 = sand.u32 %s834, 7
          %s837 = sshra.s32 %s834, 3
          %s838 = sand.u32 %s834, 7
          %s839 = smul.u32 %s835, 2
          %s840 = smul.u32 %s839, 8
          %s841 = sadd.s32 %s840, %s838
          %s842 = scalar_lea.vmem [#allocation5], %s841
          %v843 = vld [vmem:[%s842] ss:$8 sm:$0x3]
          %s844 = sld [smem:[#allocation4 + $0x2]]
          %s845 = sshra.s32 %s844, 3
          %s846 = sand.u32 %s844, 7
          %s847 = sshra.s32 %s844, 3
          %s848 = sand.u32 %s844, 7
          %s849 = smul.u32 %s845, 2
          %s850 = smul.u32 %s849, 8
          %s851 = sadd.s32 %s850, %s848
          %s852 = scalar_lea.vmem [#allocation5], %s851
          %v853 = vld [vmem:[%s852] ss:$8 sm:$0x3]
          %s854 = sld [smem:[#allocation4 + $0x3]]
          %s855 = sshra.s32 %s854, 3
          %s856 = sand.u32 %s854, 7
          %s857 = sshra.s32 %s854, 3
          %s858 = sand.u32 %s854, 7
          %s859 = smul.u32 %s855, 2
          %s860 = smul.u32 %s859, 8
          %s861 = sadd.s32 %s860, %s858
          %s862 = scalar_lea.vmem [#allocation5], %s861
          %v863 = vld [vmem:[%s862] ss:$8 sm:$0x3]
          %s864 = sld [smem:[#allocation4 + $0x4]]
          %s865 = sshra.s32 %s864, 3
          %s866 = sand.u32 %s864, 7
          %s867 = sshra.s32 %s864, 3
          %s868 = sand.u32 %s864, 7
          %s869 = smul.u32 %s865, 2
          %s870 = smul.u32 %s869, 8
          %s871 = sadd.s32 %s870, %s868
          %s872 = scalar_lea.vmem [#allocation5], %s871
          %v873 = vld [vmem:[%s872] ss:$8 sm:$0x3]
          %s874 = sld [smem:[#allocation4 + $0x5]]
          %s875 = sshra.s32 %s874, 3
          %s876 = sand.u32 %s874, 7
          %s877 = sshra.s32 %s874, 3
          %s878 = sand.u32 %s874, 7
          %s879 = smul.u32 %s875, 2
          %s880 = smul.u32 %s879, 8
          %s881 = sadd.s32 %s880, %s878
          %s882 = scalar_lea.vmem [#allocation5], %s881
          %v883 = vld [vmem:[%s882] ss:$8 sm:$0x3]
          %s884 = sld [smem:[#allocation4 + $0x6]]
          %s885 = sshra.s32 %s884, 3
          %s886 = sand.u32 %s884, 7
          %s887 = sshra.s32 %s884, 3
          %s888 = sand.u32 %s884, 7
          %s889 = smul.u32 %s885, 2
          %s890 = smul.u32 %s889, 8
          %s891 = sadd.s32 %s890, %s888
          %s892 = scalar_lea.vmem [#allocation5], %s891
          %v893 = vld [vmem:[%s892] ss:$8 sm:$0x3]
          %s894 = sld [smem:[#allocation4 + $0x7]]
          %s895 = sshra.s32 %s894, 3
          %s896 = sand.u32 %s894, 7
          %s897 = sshra.s32 %s894, 3
          %s898 = sand.u32 %s894, 7
          %s899 = smul.u32 %s895, 2
          %s900 = smul.u32 %s899, 8
          %s901 = sadd.s32 %s900, %s898
          %s902 = scalar_lea.vmem [#allocation5], %s901
          %v903 = vld [vmem:[%s902] ss:$8 sm:$0x3]
          %s904 = sld [smem:[#allocation4 + $0x8]]
          %s905 = sshra.s32 %s904, 3
          %s906 = sand.u32 %s904, 7
          %s907 = sshra.s32 %s904, 3
          %s908 = sand.u32 %s904, 7
          %s909 = smul.u32 %s905, 2
          %s910 = smul.u32 %s909, 8
          %s911 = sadd.s32 %s910, %s908
          %s912 = scalar_lea.vmem [#allocation5], %s911
          %v913 = vld [vmem:[%s912] ss:$8 sm:$0x3]
          %s914 = sld [smem:[#allocation4 + $0x9]]
          %s915 = sshra.s32 %s914, 3
          %s916 = sand.u32 %s914, 7
          %s917 = sshra.s32 %s914, 3
          %s918 = sand.u32 %s914, 7
          %s919 = smul.u32 %s915, 2
          %s920 = smul.u32 %s919, 8
          %s921 = sadd.s32 %s920, %s918
          %s922 = scalar_lea.vmem [#allocation5], %s921
          %v923 = vld [vmem:[%s922] ss:$8 sm:$0x3]
          %s924 = sld [smem:[#allocation4 + $0xa]]
          %s925 = sshra.s32 %s924, 3
          %s926 = sand.u32 %s924, 7
          %s927 = sshra.s32 %s924, 3
          %s928 = sand.u32 %s924, 7
          %s929 = smul.u32 %s925, 2
          %s930 = smul.u32 %s929, 8
          %s931 = sadd.s32 %s930, %s928
          %s932 = scalar_lea.vmem [#allocation5], %s931
          %v933 = vld [vmem:[%s932] ss:$8 sm:$0x3]
          %s934 = sld [smem:[#allocation4 + $0xb]]
          %s935 = sshra.s32 %s934, 3
          %s936 = sand.u32 %s934, 7
          %s937 = sshra.s32 %s934, 3
          %s938 = sand.u32 %s934, 7
          %s939 = smul.u32 %s935, 2
          %s940 = smul.u32 %s939, 8
          %s941 = sadd.s32 %s940, %s938
          %s942 = scalar_lea.vmem [#allocation5], %s941
          %v943 = vld [vmem:[%s942] ss:$8 sm:$0x3]
          %s944 = sld [smem:[#allocation4 + $0xc]]
          %s945 = sshra.s32 %s944, 3
          %s946 = sand.u32 %s944, 7
          %s947 = sshra.s32 %s944, 3
          %s948 = sand.u32 %s944, 7
          %s949 = smul.u32 %s945, 2
          %s950 = smul.u32 %s949, 8
          %s951 = sadd.s32 %s950, %s948
          %s952 = scalar_lea.vmem [#allocation5], %s951
          %v953 = vld [vmem:[%s952] ss:$8 sm:$0x3]
          %s954 = sld [smem:[#allocation4 + $0xd]]
          %s955 = sshra.s32 %s954, 3
          %s956 = sand.u32 %s954, 7
          %s957 = sshra.s32 %s954, 3
          %s958 = sand.u32 %s954, 7
          %s959 = smul.u32 %s955, 2
          %s960 = smul.u32 %s959, 8
          %s961 = sadd.s32 %s960, %s958
          %s962 = scalar_lea.vmem [#allocation5], %s961
          %v963 = vld [vmem:[%s962] ss:$8 sm:$0x3]
          %s964 = sld [smem:[#allocation4 + $0xe]]
          %s965 = sshra.s32 %s964, 3
          %s966 = sand.u32 %s964, 7
          %s967 = sshra.s32 %s964, 3
          %s968 = sand.u32 %s964, 7
          %s969 = smul.u32 %s965, 2
          %s970 = smul.u32 %s969, 8
          %s971 = sadd.s32 %s970, %s968
          %s972 = scalar_lea.vmem [#allocation5], %s971
          %v973 = vld [vmem:[%s972] ss:$8 sm:$0x3]
          %s974 = sld [smem:[#allocation4 + $0xf]]
          %s975 = sshra.s32 %s974, 3
          %s976 = sand.u32 %s974, 7
          %s977 = sshra.s32 %s974, 3
          %s978 = sand.u32 %s974, 7
          %s979 = smul.u32 %s975, 2
          %s980 = smul.u32 %s979, 8
          %s981 = sadd.s32 %s980, %s978
          %s982 = scalar_lea.vmem [#allocation5], %s981
          %v983 = vld [vmem:[%s982] ss:$8 sm:$0x3]
          %v985 = vperm.slane %v833, 0
          %v986 = vperm.slane %v833, 1
          %v990 = vperm.slane %v843, 0
          %v991 = vperm.slane %v843, 1
          %v995 = vperm.slane %v853, 0
          %v996 = vperm.slane %v853, 1
          %v1000 = vperm.slane %v863, 0
          %v1001 = vperm.slane %v863, 1
          %v1005 = vperm.slane %v873, 0
          %v1006 = vperm.slane %v873, 1
          %v1010 = vperm.slane %v883, 0
          %v1011 = vperm.slane %v883, 1
          %v1015 = vperm.slane %v893, 0
          %v1016 = vperm.slane %v893, 1
          %v1020 = vperm.slane %v903, 0
          %v1021 = vperm.slane %v903, 1
          %v1025 = vperm.slane %v913, 0
          %v1026 = vperm.slane %v913, 1
          %v1030 = vperm.slane %v923, 0
          %v1031 = vperm.slane %v923, 1
          %v1035 = vperm.slane %v933, 0
          %v1036 = vperm.slane %v933, 1
          %v1040 = vperm.slane %v943, 0
          %v1041 = vperm.slane %v943, 1
          %v1045 = vperm.slane %v953, 0
          %v1046 = vperm.slane %v953, 1
          %v1050 = vperm.slane %v963, 0
          %v1051 = vperm.slane %v963, 1
          %v1055 = vperm.slane %v973, 0
          %v1056 = vperm.slane %v973, 1
          %v1060 = vperm.slane %v983, 0
          %v1061 = vperm.slane %v983, 1
          %vm1064 = vcmask 1040384
          %v1065 = vsel %vm1064, %v985, %v990
          %v1066 = vsel %vm1064, %v986, %v991
          %vm1067 = vcmask 1041408
          %v1068 = vsel %vm1067, %v1065, %v995
          %v1069 = vsel %vm1067, %v1066, %v996
          %vm1070 = vcmask 1042432
          %v1071 = vsel %vm1070, %v1068, %v1000
          %v1072 = vsel %vm1070, %v1069, %v1001
          %vm1073 = vcmask 1043456
          %v1074 = vsel %vm1073, %v1071, %v1005
          %v1075 = vsel %vm1073, %v1072, %v1006
          %vm1076 = vcmask 1044480
          %v1077 = vsel %vm1076, %v1074, %v1010
          %v1078 = vsel %vm1076, %v1075, %v1011
          %vm1079 = vcmask 1045504
          %v1080 = vsel %vm1079, %v1077, %v1015
          %v1081 = vsel %vm1079, %v1078, %v1016
          %vm1082 = vcmask 1046528
          %v1083 = vsel %vm1082, %v1080, %v1020
          %v1084 = vsel %vm1082, %v1081, %v1021
          %v1085 = vsel %vm1064, %v1025, %v1030
          %v1086 = vsel %vm1064, %v1026, %v1031
          %v1087 = vsel %vm1067, %v1085, %v1035
          %v1088 = vsel %vm1067, %v1086, %v1036
          %v1089 = vsel %vm1070, %v1087, %v1040
          %v1090 = vsel %vm1070, %v1088, %v1041
          %v1091 = vsel %vm1073, %v1089, %v1045
          %v1092 = vsel %vm1073, %v1090, %v1046
          %v1093 = vsel %vm1076, %v1091, %v1050
          %v1094 = vsel %vm1076, %v1092, %v1051
          %v1095 = vsel %vm1079, %v1093, %v1055
          %v1096 = vsel %vm1079, %v1094, %v1056
          %v1097 = vsel %vm1082, %v1095, %v1060
          %v1098 = vsel %vm1082, %v1096, %v1061
          %1099 = vst [vmem:[#allocation2] sm:$0xff] %v1083
          %1100 = vst [vmem:[#allocation2 + $0x8] sm:$0xff] %v1084
          %1101 = vst [vmem:[#allocation2 + $0x10] sm:$0xff] %v1097
          %1102 = vst [vmem:[#allocation2 + $0x18] sm:$0xff] %v1098
          %v1103 = vpack.c.bf16 %v1084, %v1083
          %v1104 = vpack.c.bf16 %v1098, %v1097
          %1105 = vst [vmem:[#allocation16] sm:$0xff] %v1103
          %1106 = vst [vmem:[#allocation16 + $0x8] sm:$0xff] %v1104
        $region108: #{llama2_decoder_forward.1} parent=79 // pred_fallthru
          _
        %v1107 = vld [vmem:[#allocation2] sm:$0xff]
        %v1108 = vld [vmem:[#allocation2 + $0x8] sm:$0xff]
        %v1109 = vld [vmem:[#allocation2 + $0x10] sm:$0xff]
        %v1110 = vld [vmem:[#allocation2 + $0x18] sm:$0xff]
        %v1111 = vld [vmem:[%s797] ss:$2 sm:$0x3]
        %v1112 = vmul.f32 %v1107, %v1107
        %v1113 = vmul.f32 %v1108, %v1108
        %v1114 = vmul.f32 %v1109, %v1109
        %v1115 = vmul.f32 %v1110, %v1110
        %v1116 = vadd.f32 %v1112, %v1113
        %1117 = vadd.xlane.f32.xlu0 %v1116
        %v1118 = vpop.xlane.xlu0 %1117
        %v1119 = vadd.f32 %v1114, %v1115
        %1120 = vadd.xlane.f32.xlu0 %v1119
        %v1121 = vpop.xlane.xlu0 %1120
        %v1122 = vrcp.pop 256.0
        %v1123 = vmul.f32 256.0, %v1122
        %v1124 = vsub.f32 1.0, %v1123
        %v1125 = vmul.f32 %v1122, %v1124
        %v1126 = vadd.f32 %v1122, %v1125
        %vm1127 = vweird.f32 %v1122
        %v1128 = vsel %vm1127, %v1122, %v1126
        %v1129 = vmul.f32 %v1118, %v1128
        %v1130 = vmul.f32 %v1121, %v1128
        %v1131 = vadd.f32 %v1129, 1e-05
        %v1132 = vadd.f32 %v1130, 1e-05
        %v1133 = vrsqrt.pop %v1131
        %v1134 = vmul.f32 %v1133, %v1131
        %v1135 = vmul.f32 %v1134, %v1133
        %v1136 = vmul.f32 0.5, %v1135
        %v1137 = vsub.f32 1.5, %v1136
        %v1138 = vmul.f32 %v1133, %v1137
        %vm1139 = vweird.f32 %v1131
        %vm1140 = vweird.f32 %v1133
        %vm1141 = vmor %vm1139, %vm1140
        %v1142 = vsel %vm1141, %v1133, %v1138
        %v1143 = vrsqrt.pop %v1132
        %v1144 = vmul.f32 %v1143, %v1132
        %v1145 = vmul.f32 %v1144, %v1143
        %v1146 = vmul.f32 0.5, %v1145
        %v1147 = vsub.f32 1.5, %v1146
        %v1148 = vmul.f32 %v1143, %v1147
        %vm1149 = vweird.f32 %v1132
        %vm1150 = vweird.f32 %v1143
        %vm1151 = vmor %vm1149, %vm1150
        %v1152 = vsel %vm1151, %v1143, %v1148
        %v1153 = vmul.f32 %v1107, %v1142
        %v1154 = vmul.f32 %v1108, %v1142
        %v1155 = vmul.f32 %v1109, %v1152
        %v1156 = vmul.f32 %v1110, %v1152
        %v1158 = vperm.slane %v1111, 0
        %v1159 = vperm.slane %v1111, 1
        %v1162 = vmul.f32 %v1153, %v1158
        %v1163 = vmul.f32 %v1154, %v1159
        %v1164 = vmul.f32 %v1155, %v1158
        %v1165 = vmul.f32 %v1156, %v1159
        %v1166 = vpack.c.bf16 %v1164, %v1162
        %v1167 = vpack.c.bf16 %v1165, %v1163
        %v1168 = vld [vmem:[%s670] sm:$0xff]
        %v1169 = vld [vmem:[%s670 + $0x8] sm:$0xff]
        %v1170 = vld [vmem:[%s670 + $0x10] sm:$0xff]
        %v1171 = vld [vmem:[%s670 + $0x18] sm:$0xff]
        %v1172 = vld [vmem:[%s670 + $0x20] sm:$0xff]
        %v1173 = vld [vmem:[%s670 + $0x28] sm:$0xff]
        %v1174 = vld [vmem:[%s670 + $0x30] sm:$0xff]
        %v1175 = vld [vmem:[%s670 + $0x38] sm:$0xff]
        %v1176 = vld [vmem:[%s670 + $0x40] sm:$0xff]
        %v1177 = vld [vmem:[%s670 + $0x48] sm:$0xff]
        %v1178 = vld [vmem:[%s670 + $0x50] sm:$0xff]
        %v1179 = vld [vmem:[%s670 + $0x58] sm:$0xff]
        %v1180 = vld [vmem:[%s670 + $0x60] sm:$0xff]
        %v1181 = vld [vmem:[%s670 + $0x68] sm:$0xff]
        %v1182 = vld [vmem:[%s670 + $0x70] sm:$0xff]
        %v1183 = vld [vmem:[%s670 + $0x78] sm:$0xff]
        %v1184 = vld [vmem:[%s670 + $0x80] sm:$0xff]
        %v1185 = vld [vmem:[%s670 + $0x88] sm:$0xff]
        %v1186 = vld [vmem:[%s670 + $0x90] sm:$0xff]
        %v1187 = vld [vmem:[%s670 + $0x98] sm:$0xff]
        %v1188 = vld [vmem:[%s670 + $0xa0] sm:$0xff]
        %v1189 = vld [vmem:[%s670 + $0xa8] sm:$0xff]
        %v1190 = vld [vmem:[%s670 + $0xb0] sm:$0xff]
        %v1191 = vld [vmem:[%s670 + $0xb8] sm:$0xff]
        %v1192 = vld [vmem:[%s670 + $0xc0] sm:$0xff]
        %v1193 = vld [vmem:[%s670 + $0xc8] sm:$0xff]
        %v1194 = vld [vmem:[%s670 + $0xd0] sm:$0xff]
        %v1195 = vld [vmem:[%s670 + $0xd8] sm:$0xff]
        %v1196 = vld [vmem:[%s670 + $0xe0] sm:$0xff]
        %v1197 = vld [vmem:[%s670 + $0xe8] sm:$0xff]
        %v1198 = vld [vmem:[%s670 + $0xf0] sm:$0xff]
        %v1199 = vld [vmem:[%s670 + $0xf8] sm:$0xff]
        %v1200 = vld [vmem:[%s670 + $0x100] sm:$0xff]
        %v1201 = vld [vmem:[%s670 + $0x108] sm:$0xff]
        %v1202 = vld [vmem:[%s670 + $0x110] sm:$0xff]
        %v1203 = vld [vmem:[%s670 + $0x118] sm:$0xff]
        %v1204 = vld [vmem:[%s670 + $0x120] sm:$0xff]
        %v1205 = vld [vmem:[%s670 + $0x128] sm:$0xff]
        %v1206 = vld [vmem:[%s670 + $0x130] sm:$0xff]
        %v1207 = vld [vmem:[%s670 + $0x138] sm:$0xff]
        %v1208 = vld [vmem:[%s670 + $0x140] sm:$0xff]
        %v1209 = vld [vmem:[%s670 + $0x148] sm:$0xff]
        %v1210 = vld [vmem:[%s670 + $0x150] sm:$0xff]
        %v1211 = vld [vmem:[%s670 + $0x158] sm:$0xff]
        %v1212 = vld [vmem:[%s670 + $0x160] sm:$0xff]
        %v1213 = vld [vmem:[%s670 + $0x168] sm:$0xff]
        %v1214 = vld [vmem:[%s670 + $0x170] sm:$0xff]
        %v1215 = vld [vmem:[%s670 + $0x178] sm:$0xff]
        %v1216 = vunpack.c.0.s8 %v1168
        %v1217 = vunpack.c.0.s8 %v1169
        %v1218 = vunpack.c.0.s8 %v1170
        %v1219 = vunpack.c.0.s8 %v1171
        %v1220 = vunpack.c.0.s8 %v1172
        %v1221 = vunpack.c.0.s8 %v1173
        %v1222 = vunpack.c.1.s8 %v1168
        %v1223 = vunpack.c.1.s8 %v1169
        %v1224 = vunpack.c.1.s8 %v1170
        %v1225 = vunpack.c.1.s8 %v1171
        %v1226 = vunpack.c.1.s8 %v1172
        %v1227 = vunpack.c.1.s8 %v1173
        %v1228 = vunpack.c.2.s8 %v1168
        %v1229 = vunpack.c.2.s8 %v1169
        %v1230 = vunpack.c.2.s8 %v1170
        %v1231 = vunpack.c.2.s8 %v1171
        %v1232 = vunpack.c.2.s8 %v1172
        %v1233 = vunpack.c.2.s8 %v1173
        %v1234 = vunpack.c.3.s8 %v1168
        %v1235 = vunpack.c.3.s8 %v1169
        %v1236 = vunpack.c.3.s8 %v1170
        %v1237 = vunpack.c.3.s8 %v1171
        %v1238 = vunpack.c.3.s8 %v1172
        %v1239 = vunpack.c.3.s8 %v1173
        %v1240 = vunpack.c.0.s8 %v1174
        %v1241 = vunpack.c.0.s8 %v1175
        %v1242 = vunpack.c.0.s8 %v1176
        %v1243 = vunpack.c.0.s8 %v1177
        %v1244 = vunpack.c.0.s8 %v1178
        %v1245 = vunpack.c.0.s8 %v1179
        %v1246 = vunpack.c.1.s8 %v1174
        %v1247 = vunpack.c.1.s8 %v1175
        %v1248 = vunpack.c.1.s8 %v1176
        %v1249 = vunpack.c.1.s8 %v1177
        %v1250 = vunpack.c.1.s8 %v1178
        %v1251 = vunpack.c.1.s8 %v1179
        %v1252 = vunpack.c.2.s8 %v1174
        %v1253 = vunpack.c.2.s8 %v1175
        %v1254 = vunpack.c.2.s8 %v1176
        %v1255 = vunpack.c.2.s8 %v1177
        %v1256 = vunpack.c.2.s8 %v1178
        %v1257 = vunpack.c.2.s8 %v1179
        %v1258 = vunpack.c.3.s8 %v1174
        %v1259 = vunpack.c.3.s8 %v1175
        %v1260 = vunpack.c.3.s8 %v1176
        %v1261 = vunpack.c.3.s8 %v1177
        %v1262 = vunpack.c.3.s8 %v1178
        %v1263 = vunpack.c.3.s8 %v1179
        %v1264 = vunpack.c.0.s8 %v1180
        %v1265 = vunpack.c.0.s8 %v1181
        %v1266 = vunpack.c.0.s8 %v1182
        %v1267 = vunpack.c.0.s8 %v1183
        %v1268 = vunpack.c.0.s8 %v1184
        %v1269 = vunpack.c.0.s8 %v1185
        %v1270 = vunpack.c.1.s8 %v1180
        %v1271 = vunpack.c.1.s8 %v1181
        %v1272 = vunpack.c.1.s8 %v1182
        %v1273 = vunpack.c.1.s8 %v1183
        %v1274 = vunpack.c.1.s8 %v1184
        %v1275 = vunpack.c.1.s8 %v1185
        %v1276 = vunpack.c.2.s8 %v1180
        %v1277 = vunpack.c.2.s8 %v1181
        %v1278 = vunpack.c.2.s8 %v1182
        %v1279 = vunpack.c.2.s8 %v1183
        %v1280 = vunpack.c.2.s8 %v1184
        %v1281 = vunpack.c.2.s8 %v1185
        %v1282 = vunpack.c.3.s8 %v1180
        %v1283 = vunpack.c.3.s8 %v1181
        %v1284 = vunpack.c.3.s8 %v1182
        %v1285 = vunpack.c.3.s8 %v1183
        %v1286 = vunpack.c.3.s8 %v1184
        %v1287 = vunpack.c.3.s8 %v1185
        %v1288 = vunpack.c.0.s8 %v1186
        %v1289 = vunpack.c.0.s8 %v1187
        %v1290 = vunpack.c.0.s8 %v1188
        %v1291 = vunpack.c.0.s8 %v1189
        %v1292 = vunpack.c.0.s8 %v1190
        %v1293 = vunpack.c.0.s8 %v1191
        %v1294 = vunpack.c.1.s8 %v1186
        %v1295 = vunpack.c.1.s8 %v1187
        %v1296 = vunpack.c.1.s8 %v1188
        %v1297 = vunpack.c.1.s8 %v1189
        %v1298 = vunpack.c.1.s8 %v1190
        %v1299 = vunpack.c.1.s8 %v1191
        %v1300 = vunpack.c.2.s8 %v1186
        %v1301 = vunpack.c.2.s8 %v1187
        %v1302 = vunpack.c.2.s8 %v1188
        %v1303 = vunpack.c.2.s8 %v1189
        %v1304 = vunpack.c.2.s8 %v1190
        %v1305 = vunpack.c.2.s8 %v1191
        %v1306 = vunpack.c.3.s8 %v1186
        %v1307 = vunpack.c.3.s8 %v1187
        %v1308 = vunpack.c.3.s8 %v1188
        %v1309 = vunpack.c.3.s8 %v1189
        %v1310 = vunpack.c.3.s8 %v1190
        %v1311 = vunpack.c.3.s8 %v1191
        %v1312 = vunpack.c.0.s8 %v1192
        %v1313 = vunpack.c.0.s8 %v1193
        %v1314 = vunpack.c.0.s8 %v1194
        %v1315 = vunpack.c.0.s8 %v1195
        %v1316 = vunpack.c.0.s8 %v1196
        %v1317 = vunpack.c.0.s8 %v1197
        %v1318 = vunpack.c.1.s8 %v1192
        %v1319 = vunpack.c.1.s8 %v1193
        %v1320 = vunpack.c.1.s8 %v1194
        %v1321 = vunpack.c.1.s8 %v1195
        %v1322 = vunpack.c.1.s8 %v1196
        %v1323 = vunpack.c.1.s8 %v1197
        %v1324 = vunpack.c.2.s8 %v1192
        %v1325 = vunpack.c.2.s8 %v1193
        %v1326 = vunpack.c.2.s8 %v1194
        %v1327 = vunpack.c.2.s8 %v1195
        %v1328 = vunpack.c.2.s8 %v1196
        %v1329 = vunpack.c.2.s8 %v1197
        %v1330 = vunpack.c.3.s8 %v1192
        %v1331 = vunpack.c.3.s8 %v1193
        %v1332 = vunpack.c.3.s8 %v1194
        %v1333 = vunpack.c.3.s8 %v1195
        %v1334 = vunpack.c.3.s8 %v1196
        %v1335 = vunpack.c.3.s8 %v1197
        %v1336 = vunpack.c.0.s8 %v1198
        %v1337 = vunpack.c.0.s8 %v1199
        %v1338 = vunpack.c.0.s8 %v1200
        %v1339 = vunpack.c.0.s8 %v1201
        %v1340 = vunpack.c.0.s8 %v1202
        %v1341 = vunpack.c.0.s8 %v1203
        %v1342 = vunpack.c.1.s8 %v1198
        %v1343 = vunpack.c.1.s8 %v1199
        %v1344 = vunpack.c.1.s8 %v1200
        %v1345 = vunpack.c.1.s8 %v1201
        %v1346 = vunpack.c.1.s8 %v1202
        %v1347 = vunpack.c.1.s8 %v1203
        %v1348 = vunpack.c.2.s8 %v1198
        %v1349 = vunpack.c.2.s8 %v1199
        %v1350 = vunpack.c.2.s8 %v1200
        %v1351 = vunpack.c.2.s8 %v1201
        %v1352 = vunpack.c.2.s8 %v1202
        %v1353 = vunpack.c.2.s8 %v1203
        %v1354 = vunpack.c.3.s8 %v1198
        %v1355 = vunpack.c.3.s8 %v1199
        %v1356 = vunpack.c.3.s8 %v1200
        %v1357 = vunpack.c.3.s8 %v1201
        %v1358 = vunpack.c.3.s8 %v1202
        %v1359 = vunpack.c.3.s8 %v1203
        %v1360 = vunpack.c.0.s8 %v1204
        %v1361 = vunpack.c.0.s8 %v1205
        %v1362 = vunpack.c.0.s8 %v1206
        %v1363 = vunpack.c.0.s8 %v1207
        %v1364 = vunpack.c.0.s8 %v1208
        %v1365 = vunpack.c.0.s8 %v1209
        %v1366 = vunpack.c.1.s8 %v1204
        %v1367 = vunpack.c.1.s8 %v1205
        %v1368 = vunpack.c.1.s8 %v1206
        %v1369 = vunpack.c.1.s8 %v1207
        %v1370 = vunpack.c.1.s8 %v1208
        %v1371 = vunpack.c.1.s8 %v1209
        %v1372 = vunpack.c.2.s8 %v1204
        %v1373 = vunpack.c.2.s8 %v1205
        %v1374 = vunpack.c.2.s8 %v1206
        %v1375 = vunpack.c.2.s8 %v1207
        %v1376 = vunpack.c.2.s8 %v1208
        %v1377 = vunpack.c.2.s8 %v1209
        %v1378 = vunpack.c.3.s8 %v1204
        %v1379 = vunpack.c.3.s8 %v1205
        %v1380 = vunpack.c.3.s8 %v1206
        %v1381 = vunpack.c.3.s8 %v1207
        %v1382 = vunpack.c.3.s8 %v1208
        %v1383 = vunpack.c.3.s8 %v1209
        %v1384 = vunpack.c.0.s8 %v1210
        %v1385 = vunpack.c.0.s8 %v1211
        %v1386 = vunpack.c.0.s8 %v1212
        %v1387 = vunpack.c.0.s8 %v1213
        %v1388 = vunpack.c.0.s8 %v1214
        %v1389 = vunpack.c.0.s8 %v1215
        %v1390 = vunpack.c.1.s8 %v1210
        %v1391 = vunpack.c.1.s8 %v1211
        %v1392 = vunpack.c.1.s8 %v1212
        %v1393 = vunpack.c.1.s8 %v1213
        %v1394 = vunpack.c.1.s8 %v1214
        %v1395 = vunpack.c.1.s8 %v1215
        %v1396 = vunpack.c.2.s8 %v1210
        %v1397 = vunpack.c.2.s8 %v1211
        %v1398 = vunpack.c.2.s8 %v1212
        %v1399 = vunpack.c.2.s8 %v1213
        %v1400 = vunpack.c.2.s8 %v1214
        %v1401 = vunpack.c.2.s8 %v1215
        %v1402 = vunpack.c.3.s8 %v1210
        %v1403 = vunpack.c.3.s8 %v1211
        %v1404 = vunpack.c.3.s8 %v1212
        %v1405 = vunpack.c.3.s8 %v1213
        %v1406 = vunpack.c.3.s8 %v1214
        %v1407 = vunpack.c.3.s8 %v1215
        %v1408 = vcvt.s32.f32 %v1216
        %v1409 = vcvt.s32.f32 %v1217
        %v1410 = vcvt.s32.f32 %v1218
        %v1411 = vcvt.s32.f32 %v1219
        %v1412 = vcvt.s32.f32 %v1220
        %v1413 = vcvt.s32.f32 %v1221
        %v1414 = vcvt.s32.f32 %v1222
        %v1415 = vcvt.s32.f32 %v1223
        %v1416 = vcvt.s32.f32 %v1224
        %v1417 = vcvt.s32.f32 %v1225
        %v1418 = vcvt.s32.f32 %v1226
        %v1419 = vcvt.s32.f32 %v1227
        %v1420 = vcvt.s32.f32 %v1228
        %v1421 = vcvt.s32.f32 %v1229
        %v1422 = vcvt.s32.f32 %v1230
        %v1423 = vcvt.s32.f32 %v1231
        %v1424 = vcvt.s32.f32 %v1232
        %v1425 = vcvt.s32.f32 %v1233
        %v1426 = vcvt.s32.f32 %v1234
        %v1427 = vcvt.s32.f32 %v1235
        %v1428 = vcvt.s32.f32 %v1236
        %v1429 = vcvt.s32.f32 %v1237
        %v1430 = vcvt.s32.f32 %v1238
        %v1431 = vcvt.s32.f32 %v1239
        %v1432 = vcvt.s32.f32 %v1240
        %v1433 = vcvt.s32.f32 %v1241
        %v1434 = vcvt.s32.f32 %v1242
        %v1435 = vcvt.s32.f32 %v1243
        %v1436 = vcvt.s32.f32 %v1244
        %v1437 = vcvt.s32.f32 %v1245
        %v1438 = vcvt.s32.f32 %v1246
        %v1439 = vcvt.s32.f32 %v1247
        %v1440 = vcvt.s32.f32 %v1248
        %v1441 = vcvt.s32.f32 %v1249
        %v1442 = vcvt.s32.f32 %v1250
        %v1443 = vcvt.s32.f32 %v1251
        %v1444 = vcvt.s32.f32 %v1252
        %v1445 = vcvt.s32.f32 %v1253
        %v1446 = vcvt.s32.f32 %v1254
        %v1447 = vcvt.s32.f32 %v1255
        %v1448 = vcvt.s32.f32 %v1256
        %v1449 = vcvt.s32.f32 %v1257
        %v1450 = vcvt.s32.f32 %v1258
        %v1451 = vcvt.s32.f32 %v1259
        %v1452 = vcvt.s32.f32 %v1260
        %v1453 = vcvt.s32.f32 %v1261
        %v1454 = vcvt.s32.f32 %v1262
        %v1455 = vcvt.s32.f32 %v1263
        %v1456 = vcvt.s32.f32 %v1264
        %v1457 = vcvt.s32.f32 %v1265
        %v1458 = vcvt.s32.f32 %v1266
        %v1459 = vcvt.s32.f32 %v1267
        %v1460 = vcvt.s32.f32 %v1268
        %v1461 = vcvt.s32.f32 %v1269
        %v1462 = vcvt.s32.f32 %v1270
        %v1463 = vcvt.s32.f32 %v1271
        %v1464 = vcvt.s32.f32 %v1272
        %v1465 = vcvt.s32.f32 %v1273
        %v1466 = vcvt.s32.f32 %v1274
        %v1467 = vcvt.s32.f32 %v1275
        %v1468 = vcvt.s32.f32 %v1276
        %v1469 = vcvt.s32.f32 %v1277
        %v1470 = vcvt.s32.f32 %v1278
        %v1471 = vcvt.s32.f32 %v1279
        %v1472 = vcvt.s32.f32 %v1280
        %v1473 = vcvt.s32.f32 %v1281
        %v1474 = vcvt.s32.f32 %v1282
        %v1475 = vcvt.s32.f32 %v1283
        %v1476 = vcvt.s32.f32 %v1284
        %v1477 = vcvt.s32.f32 %v1285
        %v1478 = vcvt.s32.f32 %v1286
        %v1479 = vcvt.s32.f32 %v1287
        %v1480 = vcvt.s32.f32 %v1288
        %v1481 = vcvt.s32.f32 %v1289
        %v1482 = vcvt.s32.f32 %v1290
        %v1483 = vcvt.s32.f32 %v1291
        %v1484 = vcvt.s32.f32 %v1292
        %v1485 = vcvt.s32.f32 %v1293
        %v1486 = vcvt.s32.f32 %v1294
        %v1487 = vcvt.s32.f32 %v1295
        %v1488 = vcvt.s32.f32 %v1296
        %v1489 = vcvt.s32.f32 %v1297
        %v1490 = vcvt.s32.f32 %v1298
        %v1491 = vcvt.s32.f32 %v1299
        %v1492 = vcvt.s32.f32 %v1300
        %v1493 = vcvt.s32.f32 %v1301
        %v1494 = vcvt.s32.f32 %v1302
        %v1495 = vcvt.s32.f32 %v1303
        %v1496 = vcvt.s32.f32 %v1304
        %v1497 = vcvt.s32.f32 %v1305
        %v1498 = vcvt.s32.f32 %v1306
        %v1499 = vcvt.s32.f32 %v1307
        %v1500 = vcvt.s32.f32 %v1308
        %v1501 = vcvt.s32.f32 %v1309
        %v1502 = vcvt.s32.f32 %v1310
        %v1503 = vcvt.s32.f32 %v1311
        %v1504 = vcvt.s32.f32 %v1312
        %v1505 = vcvt.s32.f32 %v1313
        %v1506 = vcvt.s32.f32 %v1314
        %v1507 = vcvt.s32.f32 %v1315
        %v1508 = vcvt.s32.f32 %v1316
        %v1509 = vcvt.s32.f32 %v1317
        %v1510 = vcvt.s32.f32 %v1318
        %v1511 = vcvt.s32.f32 %v1319
        %v1512 = vcvt.s32.f32 %v1320
        %v1513 = vcvt.s32.f32 %v1321
        %v1514 = vcvt.s32.f32 %v1322
        %v1515 = vcvt.s32.f32 %v1323
        %v1516 = vcvt.s32.f32 %v1324
        %v1517 = vcvt.s32.f32 %v1325
        %v1518 = vcvt.s32.f32 %v1326
        %v1519 = vcvt.s32.f32 %v1327
        %v1520 = vcvt.s32.f32 %v1328
        %v1521 = vcvt.s32.f32 %v1329
        %v1522 = vcvt.s32.f32 %v1330
        %v1523 = vcvt.s32.f32 %v1331
        %v1524 = vcvt.s32.f32 %v1332
        %v1525 = vcvt.s32.f32 %v1333
        %v1526 = vcvt.s32.f32 %v1334
        %v1527 = vcvt.s32.f32 %v1335
        %v1528 = vcvt.s32.f32 %v1336
        %v1529 = vcvt.s32.f32 %v1337
        %v1530 = vcvt.s32.f32 %v1338
        %v1531 = vcvt.s32.f32 %v1339
        %v1532 = vcvt.s32.f32 %v1340
        %v1533 = vcvt.s32.f32 %v1341
        %v1534 = vcvt.s32.f32 %v1342
        %v1535 = vcvt.s32.f32 %v1343
        %v1536 = vcvt.s32.f32 %v1344
        %v1537 = vcvt.s32.f32 %v1345
        %v1538 = vcvt.s32.f32 %v1346
        %v1539 = vcvt.s32.f32 %v1347
        %v1540 = vcvt.s32.f32 %v1348
        %v1541 = vcvt.s32.f32 %v1349
        %v1542 = vcvt.s32.f32 %v1350
        %v1543 = vcvt.s32.f32 %v1351
        %v1544 = vcvt.s32.f32 %v1352
        %v1545 = vcvt.s32.f32 %v1353
        %v1546 = vcvt.s32.f32 %v1354
        %v1547 = vcvt.s32.f32 %v1355
        %v1548 = vcvt.s32.f32 %v1356
        %v1549 = vcvt.s32.f32 %v1357
        %v1550 = vcvt.s32.f32 %v1358
        %v1551 = vcvt.s32.f32 %v1359
        %v1552 = vcvt.s32.f32 %v1360
        %v1553 = vcvt.s32.f32 %v1361
        %v1554 = vcvt.s32.f32 %v1362
        %v1555 = vcvt.s32.f32 %v1363
        %v1556 = vcvt.s32.f32 %v1364
        %v1557 = vcvt.s32.f32 %v1365
        %v1558 = vcvt.s32.f32 %v1366
        %v1559 = vcvt.s32.f32 %v1367
        %v1560 = vcvt.s32.f32 %v1368
        %v1561 = vcvt.s32.f32 %v1369
        %v1562 = vcvt.s32.f32 %v1370
        %v1563 = vcvt.s32.f32 %v1371
        %v1564 = vcvt.s32.f32 %v1372
        %v1565 = vcvt.s32.f32 %v1373
        %v1566 = vcvt.s32.f32 %v1374
        %v1567 = vcvt.s32.f32 %v1375
        %v1568 = vcvt.s32.f32 %v1376
        %v1569 = vcvt.s32.f32 %v1377
        %v1570 = vcvt.s32.f32 %v1378
        %v1571 = vcvt.s32.f32 %v1379
        %v1572 = vcvt.s32.f32 %v1380
        %v1573 = vcvt.s32.f32 %v1381
        %v1574 = vcvt.s32.f32 %v1382
        %v1575 = vcvt.s32.f32 %v1383
        %v1576 = vcvt.s32.f32 %v1384
        %v1577 = vcvt.s32.f32 %v1385
        %v1578 = vcvt.s32.f32 %v1386
        %v1579 = vcvt.s32.f32 %v1387
        %v1580 = vcvt.s32.f32 %v1388
        %v1581 = vcvt.s32.f32 %v1389
        %v1582 = vcvt.s32.f32 %v1390
        %v1583 = vcvt.s32.f32 %v1391
        %v1584 = vcvt.s32.f32 %v1392
        %v1585 = vcvt.s32.f32 %v1393
        %v1586 = vcvt.s32.f32 %v1394
        %v1587 = vcvt.s32.f32 %v1395
        %v1588 = vcvt.s32.f32 %v1396
        %v1589 = vcvt.s32.f32 %v1397
        %v1590 = vcvt.s32.f32 %v1398
        %v1591 = vcvt.s32.f32 %v1399
        %v1592 = vcvt.s32.f32 %v1400
        %v1593 = vcvt.s32.f32 %v1401
        %v1594 = vcvt.s32.f32 %v1402
        %v1595 = vcvt.s32.f32 %v1403
        %v1596 = vcvt.s32.f32 %v1404
        %v1597 = vcvt.s32.f32 %v1405
        %v1598 = vcvt.s32.f32 %v1406
        %v1599 = vcvt.s32.f32 %v1407
        %v1600 = vpack.c.bf16 %v1414, %v1408
        %v1601 = vpack.c.bf16 %v1415, %v1409
        %v1602 = vpack.c.bf16 %v1416, %v1410
        %v1603 = vpack.c.bf16 %v1417, %v1411
        %v1604 = vpack.c.bf16 %v1418, %v1412
        %v1605 = vpack.c.bf16 %v1419, %v1413
        %v1606 = vpack.c.bf16 %v1426, %v1420
        %v1607 = vpack.c.bf16 %v1427, %v1421
        %v1608 = vpack.c.bf16 %v1428, %v1422
        %v1609 = vpack.c.bf16 %v1429, %v1423
        %v1610 = vpack.c.bf16 %v1430, %v1424
        %v1611 = vpack.c.bf16 %v1431, %v1425
        %v1612 = vpack.c.bf16 %v1438, %v1432
        %v1613 = vpack.c.bf16 %v1439, %v1433
        %v1614 = vpack.c.bf16 %v1440, %v1434
        %v1615 = vpack.c.bf16 %v1441, %v1435
        %v1616 = vpack.c.bf16 %v1442, %v1436
        %v1617 = vpack.c.bf16 %v1443, %v1437
        %v1618 = vpack.c.bf16 %v1450, %v1444
        %v1619 = vpack.c.bf16 %v1451, %v1445
        %v1620 = vpack.c.bf16 %v1452, %v1446
        %v1621 = vpack.c.bf16 %v1453, %v1447
        %v1622 = vpack.c.bf16 %v1454, %v1448
        %v1623 = vpack.c.bf16 %v1455, %v1449
        %v1624 = vpack.c.bf16 %v1462, %v1456
        %v1625 = vpack.c.bf16 %v1463, %v1457
        %v1626 = vpack.c.bf16 %v1464, %v1458
        %v1627 = vpack.c.bf16 %v1465, %v1459
        %v1628 = vpack.c.bf16 %v1466, %v1460
        %v1629 = vpack.c.bf16 %v1467, %v1461
        %v1630 = vpack.c.bf16 %v1474, %v1468
        %v1631 = vpack.c.bf16 %v1475, %v1469
        %v1632 = vpack.c.bf16 %v1476, %v1470
        %v1633 = vpack.c.bf16 %v1477, %v1471
        %v1634 = vpack.c.bf16 %v1478, %v1472
        %v1635 = vpack.c.bf16 %v1479, %v1473
        %v1636 = vpack.c.bf16 %v1486, %v1480
        %v1637 = vpack.c.bf16 %v1487, %v1481
        %v1638 = vpack.c.bf16 %v1488, %v1482
        %v1639 = vpack.c.bf16 %v1489, %v1483
        %v1640 = vpack.c.bf16 %v1490, %v1484
        %v1641 = vpack.c.bf16 %v1491, %v1485
        %v1642 = vpack.c.bf16 %v1498, %v1492
        %v1643 = vpack.c.bf16 %v1499, %v1493
        %v1644 = vpack.c.bf16 %v1500, %v1494
        %v1645 = vpack.c.bf16 %v1501, %v1495
        %v1646 = vpack.c.bf16 %v1502, %v1496
        %v1647 = vpack.c.bf16 %v1503, %v1497
        %v1648 = vpack.c.bf16 %v1510, %v1504
        %v1649 = vpack.c.bf16 %v1511, %v1505
        %v1650 = vpack.c.bf16 %v1512, %v1506
        %v1651 = vpack.c.bf16 %v1513, %v1507
        %v1652 = vpack.c.bf16 %v1514, %v1508
        %v1653 = vpack.c.bf16 %v1515, %v1509
        %v1654 = vpack.c.bf16 %v1522, %v1516
        %v1655 = vpack.c.bf16 %v1523, %v1517
        %v1656 = vpack.c.bf16 %v1524, %v1518
        %v1657 = vpack.c.bf16 %v1525, %v1519
        %v1658 = vpack.c.bf16 %v1526, %v1520
        %v1659 = vpack.c.bf16 %v1527, %v1521
        %v1660 = vpack.c.bf16 %v1534, %v1528
        %v1661 = vpack.c.bf16 %v1535, %v1529
        %v1662 = vpack.c.bf16 %v1536, %v1530
        %v1663 = vpack.c.bf16 %v1537, %v1531
        %v1664 = vpack.c.bf16 %v1538, %v1532
        %v1665 = vpack.c.bf16 %v1539, %v1533
        %v1666 = vpack.c.bf16 %v1546, %v1540
        %v1667 = vpack.c.bf16 %v1547, %v1541
        %v1668 = vpack.c.bf16 %v1548, %v1542
        %v1669 = vpack.c.bf16 %v1549, %v1543
        %v1670 = vpack.c.bf16 %v1550, %v1544
        %v1671 = vpack.c.bf16 %v1551, %v1545
        %v1672 = vpack.c.bf16 %v1558, %v1552
        %v1673 = vpack.c.bf16 %v1559, %v1553
        %v1674 = vpack.c.bf16 %v1560, %v1554
        %v1675 = vpack.c.bf16 %v1561, %v1555
        %v1676 = vpack.c.bf16 %v1562, %v1556
        %v1677 = vpack.c.bf16 %v1563, %v1557
        %v1678 = vpack.c.bf16 %v1570, %v1564
        %v1679 = vpack.c.bf16 %v1571, %v1565
        %v1680 = vpack.c.bf16 %v1572, %v1566
        %v1681 = vpack.c.bf16 %v1573, %v1567
        %v1682 = vpack.c.bf16 %v1574, %v1568
        %v1683 = vpack.c.bf16 %v1575, %v1569
        %v1684 = vpack.c.bf16 %v1582, %v1576
        %v1685 = vpack.c.bf16 %v1583, %v1577
        %v1686 = vpack.c.bf16 %v1584, %v1578
        %v1687 = vpack.c.bf16 %v1585, %v1579
        %v1688 = vpack.c.bf16 %v1586, %v1580
        %v1689 = vpack.c.bf16 %v1587, %v1581
        %v1690 = vpack.c.bf16 %v1594, %v1588
        %v1691 = vpack.c.bf16 %v1595, %v1589
        %v1692 = vpack.c.bf16 %v1596, %v1590
        %v1693 = vpack.c.bf16 %v1597, %v1591
        %v1694 = vpack.c.bf16 %v1598, %v1592
        %v1695 = vpack.c.bf16 %v1599, %v1593
        %1696 = vmatpush.bf16.msra.mxu0 %v1642
        %1697 = vmatpush.bf16.msra.mxu0 %v1636
        %1698 = vmatpush.bf16.msra.mxu0 %v1630
        %1699 = vmatpush.bf16.msra.mxu0 %v1624
        %1700 = vmatpush.bf16.msra.mxu0 %v1618
        %1701 = vmatpush.bf16.msra.mxu0 %v1612
        %1702 = vmatpush.bf16.msra.mxu0 %v1606
        %1703 = vmatpush.bf16.msra.mxu0 %v1600
        %1704 = vmatmul.bf16.gmra.mxu0 %v1166
        %v1705 = vpop.f32.mrf.mxu0
        %v1706 = vadd.f32 0.0, %v1705
        %v1707 = vpop.f32.mrf.mxu0
        %v1708 = vadd.f32 0.0, %v1707
        %1709 = vdwg.mxu0
        %1710 = vmatpush.bf16.msra.mxu0 %v1690
        %1711 = vmatpush.bf16.msra.mxu0 %v1684
        %1712 = vmatpush.bf16.msra.mxu0 %v1678
        %1713 = vmatpush.bf16.msra.mxu0 %v1672
        %1714 = vmatpush.bf16.msra.mxu0 %v1666
        %1715 = vmatpush.bf16.msra.mxu0 %v1660
        %1716 = vmatpush.bf16.msra.mxu0 %v1654
        %1717 = vmatpush.bf16.msra.mxu0 %v1648
        %1718 = vmatmul.bf16.gmra.mxu0 %v1167
        %v1719 = vpop.f32.mrf.mxu0
        %v1720 = vadd.f32 %v1706, %v1719
        %v1721 = vpop.f32.mrf.mxu0
        %v1722 = vadd.f32 %v1708, %v1721
        %1723 = vdwg.mxu0
        %1724 = vmatpush.bf16.msra.mxu0 %v1643
        %1725 = vmatpush.bf16.msra.mxu0 %v1637
        %1726 = vmatpush.bf16.msra.mxu0 %v1631
        %1727 = vmatpush.bf16.msra.mxu0 %v1625
        %1728 = vmatpush.bf16.msra.mxu0 %v1619
        %1729 = vmatpush.bf16.msra.mxu0 %v1613
        %1730 = vmatpush.bf16.msra.mxu0 %v1607
        %1731 = vmatpush.bf16.msra.mxu0 %v1601
        %1732 = vmatmul.bf16.gmra.mxu0 %v1166
        %v1733 = vpop.f32.mrf.mxu0
        %v1734 = vadd.f32 0.0, %v1733
        %v1735 = vpop.f32.mrf.mxu0
        %v1736 = vadd.f32 0.0, %v1735
        %1737 = vdwg.mxu0
        %1738 = vmatpush.bf16.msra.mxu0 %v1691
        %1739 = vmatpush.bf16.msra.mxu0 %v1685
        %1740 = vmatpush.bf16.msra.mxu0 %v1679
        %1741 = vmatpush.bf16.msra.mxu0 %v1673
        %1742 = vmatpush.bf16.msra.mxu0 %v1667
        %1743 = vmatpush.bf16.msra.mxu0 %v1661
        %1744 = vmatpush.bf16.msra.mxu0 %v1655
        %1745 = vmatpush.bf16.msra.mxu0 %v1649
        %1746 = vmatmul.bf16.gmra.mxu0 %v1167
        %v1747 = vpop.f32.mrf.mxu0
        %v1748 = vadd.f32 %v1734, %v1747
        %v1749 = vpop.f32.mrf.mxu0
        %v1750 = vadd.f32 %v1736, %v1749
        %1751 = vdwg.mxu0
        %1752 = vmatpush.bf16.msra.mxu0 %v1644
        %1753 = vmatpush.bf16.msra.mxu0 %v1638
        %1754 = vmatpush.bf16.msra.mxu0 %v1632
        %1755 = vmatpush.bf16.msra.mxu0 %v1626
        %1756 = vmatpush.bf16.msra.mxu0 %v1620
        %1757 = vmatpush.bf16.msra.mxu0 %v1614
        %1758 = vmatpush.bf16.msra.mxu0 %v1608
        %1759 = vmatpush.bf16.msra.mxu0 %v1602
        %1760 = vmatmul.bf16.gmra.mxu0 %v1166
        %v1761 = vpop.f32.mrf.mxu0
        %v1762 = vadd.f32 0.0, %v1761
        %v1763 = vpop.f32.mrf.mxu0
        %v1764 = vadd.f32 0.0, %v1763
        %1765 = vdwg.mxu0
        %1766 = vmatpush.bf16.msra.mxu0 %v1692
        %1767 = vmatpush.bf16.msra.mxu0 %v1686
        %1768 = vmatpush.bf16.msra.mxu0 %v1680
        %1769 = vmatpush.bf16.msra.mxu0 %v1674
        %1770 = vmatpush.bf16.msra.mxu0 %v1668
        %1771 = vmatpush.bf16.msra.mxu0 %v1662
        %1772 = vmatpush.bf16.msra.mxu0 %v1656
        %1773 = vmatpush.bf16.msra.mxu0 %v1650
        %1774 = vmatmul.bf16.gmra.mxu0 %v1167
        %v1775 = vpop.f32.mrf.mxu0
        %v1776 = vadd.f32 %v1762, %v1775
        %v1777 = vpop.f32.mrf.mxu0
        %v1778 = vadd.f32 %v1764, %v1777
        %1779 = vdwg.mxu0
        %1780 = vmatpush.bf16.msra.mxu0 %v1645
        %1781 = vmatpush.bf16.msra.mxu0 %v1639
        %1782 = vmatpush.bf16.msra.mxu0 %v1633
        %1783 = vmatpush.bf16.msra.mxu0 %v1627
        %1784 = vmatpush.bf16.msra.mxu0 %v1621
        %1785 = vmatpush.bf16.msra.mxu0 %v1615
        %1786 = vmatpush.bf16.msra.mxu0 %v1609
        %1787 = vmatpush.bf16.msra.mxu0 %v1603
        %1788 = vmatmul.bf16.gmra.mxu0 %v1166
        %v1789 = vpop.f32.mrf.mxu0
        %v1790 = vadd.f32 0.0, %v1789
        %v1791 = vpop.f32.mrf.mxu0
        %v1792 = vadd.f32 0.0, %v1791
        %1793 = vdwg.mxu0
        %1794 = vmatpush.bf16.msra.mxu0 %v1693
        %1795 = vmatpush.bf16.msra.mxu0 %v1687
        %1796 = vmatpush.bf16.msra.mxu0 %v1681
        %1797 = vmatpush.bf16.msra.mxu0 %v1675
        %1798 = vmatpush.bf16.msra.mxu0 %v1669
        %1799 = vmatpush.bf16.msra.mxu0 %v1663
        %1800 = vmatpush.bf16.msra.mxu0 %v1657
        %1801 = vmatpush.bf16.msra.mxu0 %v1651
        %1802 = vmatmul.bf16.gmra.mxu0 %v1167
        %v1803 = vpop.f32.mrf.mxu0
        %v1804 = vadd.f32 %v1790, %v1803
        %v1805 = vpop.f32.mrf.mxu0
        %v1806 = vadd.f32 %v1792, %v1805
        %1807 = vdwg.mxu0
        %1808 = vmatpush.bf16.msra.mxu0 %v1646
        %1809 = vmatpush.bf16.msra.mxu0 %v1640
        %1810 = vmatpush.bf16.msra.mxu0 %v1634
        %1811 = vmatpush.bf16.msra.mxu0 %v1628
        %1812 = vmatpush.bf16.msra.mxu0 %v1622
        %1813 = vmatpush.bf16.msra.mxu0 %v1616
        %1814 = vmatpush.bf16.msra.mxu0 %v1610
        %1815 = vmatpush.bf16.msra.mxu0 %v1604
        %1816 = vmatmul.bf16.gmra.mxu0 %v1166
        %v1817 = vpop.f32.mrf.mxu0
        %v1818 = vadd.f32 0.0, %v1817
        %v1819 = vpop.f32.mrf.mxu0
        %v1820 = vadd.f32 0.0, %v1819
        %1821 = vdwg.mxu0
        %1822 = vmatpush.bf16.msra.mxu0 %v1694
        %1823 = vmatpush.bf16.msra.mxu0 %v1688
        %1824 = vmatpush.bf16.msra.mxu0 %v1682
        %1825 = vmatpush.bf16.msra.mxu0 %v1676
        %1826 = vmatpush.bf16.msra.mxu0 %v1670
        %1827 = vmatpush.bf16.msra.mxu0 %v1664
        %1828 = vmatpush.bf16.msra.mxu0 %v1658
        %1829 = vmatpush.bf16.msra.mxu0 %v1652
        %1830 = vmatmul.bf16.gmra.mxu0 %v1167
        %v1831 = vpop.f32.mrf.mxu0
        %v1832 = vadd.f32 %v1818, %v1831
        %v1833 = vpop.f32.mrf.mxu0
        %v1834 = vadd.f32 %v1820, %v1833
        %1835 = vdwg.mxu0
        %1836 = vmatpush.bf16.msra.mxu0 %v1647
        %1837 = vmatpush.bf16.msra.mxu0 %v1641
        %1838 = vmatpush.bf16.msra.mxu0 %v1635
        %1839 = vmatpush.bf16.msra.mxu0 %v1629
        %1840 = vmatpush.bf16.msra.mxu0 %v1623
        %1841 = vmatpush.bf16.msra.mxu0 %v1617
        %1842 = vmatpush.bf16.msra.mxu0 %v1611
        %1843 = vmatpush.bf16.msra.mxu0 %v1605
        %1844 = vmatmul.bf16.gmra.mxu0 %v1166
        %v1845 = vpop.f32.mrf.mxu0
        %v1846 = vadd.f32 0.0, %v1845
        %v1847 = vpop.f32.mrf.mxu0
        %v1848 = vadd.f32 0.0, %v1847
        %1849 = vdwg.mxu0
        %1850 = vmatpush.bf16.msra.mxu0 %v1695
        %1851 = vmatpush.bf16.msra.mxu0 %v1689
        %1852 = vmatpush.bf16.msra.mxu0 %v1683
        %1853 = vmatpush.bf16.msra.mxu0 %v1677
        %1854 = vmatpush.bf16.msra.mxu0 %v1671
        %1855 = vmatpush.bf16.msra.mxu0 %v1665
        %1856 = vmatpush.bf16.msra.mxu0 %v1659
        %1857 = vmatpush.bf16.msra.mxu0 %v1653
        %1858 = vmatmul.bf16.gmra.mxu0 %v1167
        %v1859 = vpop.f32.mrf.mxu0
        %v1860 = vadd.f32 %v1846, %v1859
        %v1861 = vpop.f32.mrf.mxu0
        %v1862 = vadd.f32 %v1848, %v1861
        %1863 = vdwg.mxu0
        %v1864 = vld [vmem:[%s801] sm:$0x3f]
        %v1866 = vperm.slane %v1864, 0
        %v1867 = vperm.slane %v1864, 1
        %v1868 = vperm.slane %v1864, 2
        %v1869 = vperm.slane %v1864, 3
        %v1870 = vperm.slane %v1864, 4
        %v1871 = vperm.slane %v1864, 5
        %v1878 = vmul.f32 %v1720, %v1866
        %v1879 = vmul.f32 %v1748, %v1867
        %v1880 = vmul.f32 %v1776, %v1868
        %v1881 = vmul.f32 %v1804, %v1869
        %v1882 = vmul.f32 %v1832, %v1870
        %v1883 = vmul.f32 %v1860, %v1871
        %v1884 = vmul.f32 %v1722, %v1866
        %v1885 = vmul.f32 %v1750, %v1867
        %v1886 = vmul.f32 %v1778, %v1868
        %v1887 = vmul.f32 %v1806, %v1869
        %v1888 = vmul.f32 %v1834, %v1870
        %v1889 = vmul.f32 %v1862, %v1871
        %v1890 = vld [vmem:[%s11] sm:$0xff]
        %v1891 = vld [vmem:[%s12] sm:$0xff]
        %v1892 = vpack.c.bf16 %v1882, %v1882
        %v1893 = vpack.c.bf16 %v1888, %v1888
        %v1894 = vpack.c.bf16 %v1883, %v1883
        %v1895 = vpack.c.bf16 %v1889, %v1889
        %v1896 = vmul.f32 %v1878, %v1890
        %v1897 = vmul.f32 %v1884, %v1890
        %v1898 = vmul.f32 %v1879, %v1890
        %v1899 = vmul.f32 %v1885, %v1890
        %1900 = vrot.lane.b32.xlu0 %v1878, 64
        %v1901 = vpop.permute.xlu0 %1900
        %1902 = vrot.lane.b32.xlu0 %v1884, 64
        %v1903 = vpop.permute.xlu0 %1902
        %1904 = vrot.lane.b32.xlu0 %v1879, 64
        %v1905 = vpop.permute.xlu0 %1904
        %1906 = vrot.lane.b32.xlu0 %v1885, 64
        %v1907 = vpop.permute.xlu0 %1906
        %v1908 = vmul.f32 %v1901, %v1891
        %v1909 = vmul.f32 %v1903, %v1891
        %v1910 = vmul.f32 %v1905, %v1891
        %v1911 = vmul.f32 %v1907, %v1891
        %v1912 = vadd.f32 %v1896, %v1908
        %v1913 = vadd.f32 %v1897, %v1909
        %v1914 = vadd.f32 %v1898, %v1910
        %v1915 = vadd.f32 %v1899, %v1911
        %v1916 = vpack.c.bf16 %v1912, %v1912
        %v1917 = vpack.c.bf16 %v1913, %v1913
        %v1918 = vpack.c.bf16 %v1914, %v1914
        %v1919 = vpack.c.bf16 %v1915, %v1915
        %v1920 = vmul.f32 %v1880, %v1890
        %v1921 = vmul.f32 %v1886, %v1890
        %v1922 = vmul.f32 %v1881, %v1890
        %v1923 = vmul.f32 %v1887, %v1890
        %1924 = vrot.lane.b32.xlu0 %v1880, 64
        %v1925 = vpop.permute.xlu0 %1924
        %1926 = vrot.lane.b32.xlu0 %v1886, 64
        %v1927 = vpop.permute.xlu0 %1926
        %1928 = vrot.lane.b32.xlu0 %v1881, 64
        %v1929 = vpop.permute.xlu0 %1928
        %1930 = vrot.lane.b32.xlu0 %v1887, 64
        %v1931 = vpop.permute.xlu0 %1930
        %v1932 = vmul.f32 %v1925, %v1891
        %v1933 = vmul.f32 %v1927, %v1891
        %v1934 = vmul.f32 %v1929, %v1891
        %v1935 = vmul.f32 %v1931, %v1891
        %v1936 = vadd.f32 %v1920, %v1932
        %v1937 = vadd.f32 %v1921, %v1933
        %v1938 = vadd.f32 %v1922, %v1934
        %v1939 = vadd.f32 %v1923, %v1935
        %v1940 = vpack.c.bf16 %v1936, %v1936
        %v1941 = vpack.c.bf16 %v1937, %v1937
        %v1942 = vpack.c.bf16 %v1938, %v1938
        %v1943 = vpack.c.bf16 %v1939, %v1939
        %1944 = vmatpush.bf16.xpose.msra.mxu0 0
        %1945 = vmatpush.bf16.xpose.msra.mxu0 0
        %1946 = vmatpush.bf16.xpose.msra.mxu0 0
        %1947 = vmatpush.bf16.xpose.msra.mxu0 0
        %1948 = vmatpush.bf16.xpose.msra.mxu0 0
        %1949 = vmatpush.bf16.xpose.msra.mxu0 0
        %1950 = vmatpush.bf16.xpose.msra.mxu0 0
        %1951 = vmatpush.bf16.xpose.msra.mxu0 %v1940
        %1952 = vmatmul.bf16.gmra.mxu0 %v1916
        %v1953 = vpop.f32.mrf.mxu0
        %v1954 = vadd.f32 0.0, %v1953
        %v1955 = vpop.f32.mrf.mxu0
        %1956 = vdwg.mxu0
        %1957 = vmatpush.bf16.xpose.msra.mxu0 0
        %1958 = vmatpush.bf16.xpose.msra.mxu0 0
        %1959 = vmatpush.bf16.xpose.msra.mxu0 0
        %1960 = vmatpush.bf16.xpose.msra.mxu0 0
        %1961 = vmatpush.bf16.xpose.msra.mxu0 0
        %1962 = vmatpush.bf16.xpose.msra.mxu0 0
        %1963 = vmatpush.bf16.xpose.msra.mxu0 0
        %1964 = vmatpush.bf16.xpose.msra.mxu0 %v1941
        %1965 = vmatmul.bf16.gmra.mxu0 %v1917
        %v1966 = vpop.f32.mrf.mxu0
        %v1967 = vadd.f32 0.0, %v1966
        %v1968 = vpop.f32.mrf.mxu0
        %1969 = vdwg.mxu0
        %1970 = vmatpush.bf16.xpose.msra.mxu0 0
        %1971 = vmatpush.bf16.xpose.msra.mxu0 0
        %1972 = vmatpush.bf16.xpose.msra.mxu0 0
        %1973 = vmatpush.bf16.xpose.msra.mxu0 0
        %1974 = vmatpush.bf16.xpose.msra.mxu0 0
        %1975 = vmatpush.bf16.xpose.msra.mxu0 0
        %1976 = vmatpush.bf16.xpose.msra.mxu0 0
        %1977 = vmatpush.bf16.xpose.msra.mxu0 %v1942
        %1978 = vmatmul.bf16.gmra.mxu0 %v1918
        %v1979 = vpop.f32.mrf.mxu0
        %v1980 = vadd.f32 0.0, %v1979
        %v1981 = vpop.f32.mrf.mxu0
        %1982 = vdwg.mxu0
        %1983 = vmatpush.bf16.xpose.msra.mxu0 0
        %1984 = vmatpush.bf16.xpose.msra.mxu0 0
        %1985 = vmatpush.bf16.xpose.msra.mxu0 0
        %1986 = vmatpush.bf16.xpose.msra.mxu0 0
        %1987 = vmatpush.bf16.xpose.msra.mxu0 0
        %1988 = vmatpush.bf16.xpose.msra.mxu0 0
        %1989 = vmatpush.bf16.xpose.msra.mxu0 0
        %1990 = vmatpush.bf16.xpose.msra.mxu0 %v1943
        %1991 = vmatmul.bf16.gmra.mxu0 %v1919
        %v1992 = vpop.f32.mrf.mxu0
        %v1993 = vadd.f32 0.0, %v1992
        %v1994 = vpop.f32.mrf.mxu0
        %1995 = vdwg.mxu0
        %v1996 = vmul.f32 %v1954, 0.088388346
        %v1997 = vmul.f32 %v1967, 0.088388346
        %v1998 = vmul.f32 %v1980, 0.088388346
        %v1999 = vmul.f32 %v1993, 0.088388346
        %v2000 = vld [vmem:[%s13] sm:$0xff]
        %v2001 = vadd.f32 %v1996, %v2000
        %v2002 = vadd.f32 %v1997, %v2000
        %v2003 = vadd.f32 %v1998, %v2000
        %v2004 = vadd.f32 %v1999, %v2000
        %vm2005 = vcmask 64512
        %v2006 = vsel %vm2005, %v2001, -inf
        %2007 = vmax.xlane.f32.xlu0 %v2006
        %v2008 = vpop.xlane.xlu0 %2007
        %v2009 = vsel %vm2005, %v2002, -inf
        %2010 = vmax.xlane.f32.xlu0 %v2009
        %v2011 = vpop.xlane.xlu0 %2010
        %v2012 = vsel %vm2005, %v2003, -inf
        %2013 = vmax.xlane.f32.xlu0 %v2012
        %v2014 = vpop.xlane.xlu0 %2013
        %v2015 = vsel %vm2005, %v2004, -inf
        %2016 = vmax.xlane.f32.xlu0 %v2015
        %v2017 = vpop.xlane.xlu0 %2016
        %v2018 = vsub.f32 %v2001, %v2008
        %v2019 = vsub.f32 %v2002, %v2011
        %v2020 = vsub.f32 %v2003, %v2014
        %v2021 = vsub.f32 %v2004, %v2017
        %v2022 = vmul.f32 %v2018, 1.442695
        %v2023 = vpow.pop %v2022
        %v2024 = vmul.f32 %v2019, 1.442695
        %v2025 = vpow.pop %v2024
        %v2026 = vmul.f32 %v2020, 1.442695
        %v2027 = vpow.pop %v2026
        %v2028 = vmul.f32 %v2021, 1.442695
        %v2029 = vpow.pop %v2028
        %v2030 = vsel %vm2005, %v2023, 0.0
        %2031 = vadd.xlane.f32.xlu0 %v2030
        %v2032 = vpop.xlane.xlu0 %2031
        %v2033 = vsel %vm2005, %v2025, 0.0
        %2034 = vadd.xlane.f32.xlu0 %v2033
        %v2035 = vpop.xlane.xlu0 %2034
        %v2036 = vsel %vm2005, %v2027, 0.0
        %2037 = vadd.xlane.f32.xlu0 %v2036
        %v2038 = vpop.xlane.xlu0 %2037
        %v2039 = vsel %vm2005, %v2029, 0.0
        %2040 = vadd.xlane.f32.xlu0 %v2039
        %v2041 = vpop.xlane.xlu0 %2040
        %v2042 = vrcp.pop %v2032
        %v2043 = vrcp.pop %v2035
        %v2044 = vrcp.pop %v2038
        %v2045 = vrcp.pop %v2041
        %v2046 = vmul.f32 %v2023, %v2042
        %v2047 = vmul.f32 %v2025, %v2043
        %v2048 = vmul.f32 %v2027, %v2044
        %v2049 = vmul.f32 %v2029, %v2045
        %v2050 = vpack.c.bf16 %v2046, %v2046
        %v2051 = vpack.c.bf16 %v2047, %v2047
        %v2052 = vpack.c.bf16 %v2048, %v2048
        %v2053 = vpack.c.bf16 %v2049, %v2049
        %v2055 = vsel %vm2005, %v2050, 0
        %vm2057 = vcmask 1043456
        %v2059 = vsel %vm2057, %v1892, 0
        %2061 = vmatpush.bf16.msra.mxu0 0
        %2062 = vmatpush.bf16.msra.mxu0 0
        %2063 = vmatpush.bf16.msra.mxu0 0
        %2064 = vmatpush.bf16.msra.mxu0 0
        %2065 = vmatpush.bf16.msra.mxu0 0
        %2066 = vmatpush.bf16.msra.mxu0 0
        %2067 = vmatpush.bf16.msra.mxu0 0
        %2068 = vmatpush.bf16.msra.mxu0 %v2059
        %2069 = vmatmul.bf16.gmra.mxu0 %v2055
        %v2070 = vpop.f32.mrf.mxu0
        %v2071 = vadd.f32 0.0, %v2070
        %v2072 = vpop.f32.mrf.mxu0
        %2073 = vdwg.mxu0
        %v2075 = vsel %vm2005, %v2051, 0
        %v2078 = vsel %vm2057, %v1893, 0
        %2080 = vmatpush.bf16.msra.mxu0 0
        %2081 = vmatpush.bf16.msra.mxu0 0
        %2082 = vmatpush.bf16.msra.mxu0 0
        %2083 = vmatpush.bf16.msra.mxu0 0
        %2084 = vmatpush.bf16.msra.mxu0 0
        %2085 = vmatpush.bf16.msra.mxu0 0
        %2086 = vmatpush.bf16.msra.mxu0 0
        %2087 = vmatpush.bf16.msra.mxu0 %v2078
        %2088 = vmatmul.bf16.gmra.mxu0 %v2075
        %v2089 = vpop.f32.mrf.mxu0
        %v2090 = vadd.f32 0.0, %v2089
        %v2091 = vpop.f32.mrf.mxu0
        %2092 = vdwg.mxu0
        %v2094 = vsel %vm2005, %v2052, 0
        %v2097 = vsel %vm2057, %v1894, 0
        %2099 = vmatpush.bf16.msra.mxu0 0
        %2100 = vmatpush.bf16.msra.mxu0 0
        %2101 = vmatpush.bf16.msra.mxu0 0
        %2102 = vmatpush.bf16.msra.mxu0 0
        %2103 = vmatpush.bf16.msra.mxu0 0
        %2104 = vmatpush.bf16.msra.mxu0 0
        %2105 = vmatpush.bf16.msra.mxu0 0
        %2106 = vmatpush.bf16.msra.mxu0 %v2097
        %2107 = vmatmul.bf16.gmra.mxu0 %v2094
        %v2108 = vpop.f32.mrf.mxu0
        %v2109 = vadd.f32 0.0, %v2108
        %v2110 = vpop.f32.mrf.mxu0
        %2111 = vdwg.mxu0
        %v2113 = vsel %vm2005, %v2053, 0
        %v2116 = vsel %vm2057, %v1895, 0
        %2118 = vmatpush.bf16.msra.mxu0 0
        %2119 = vmatpush.bf16.msra.mxu0 0
        %2120 = vmatpush.bf16.msra.mxu0 0
        %2121 = vmatpush.bf16.msra.mxu0 0
        %2122 = vmatpush.bf16.msra.mxu0 0
        %2123 = vmatpush.bf16.msra.mxu0 0
        %2124 = vmatpush.bf16.msra.mxu0 0
        %2125 = vmatpush.bf16.msra.mxu0 %v2116
        %2126 = vmatmul.bf16.gmra.mxu0 %v2113
        %v2127 = vpop.f32.mrf.mxu0
        %v2128 = vadd.f32 0.0, %v2127
        %v2129 = vpop.f32.mrf.mxu0
        %2130 = vdwg.mxu0
        %v2131 = vpack.c.bf16 %v2090, %v2071
        %v2132 = vpack.c.bf16 %v2128, %v2109
        %v2133 = vld [vmem:[%s680] sm:$0xff]
        %v2134 = vld [vmem:[%s680 + $0x8] sm:$0xff]
        %v2135 = vld [vmem:[%s680 + $0x10] sm:$0xff]
        %v2136 = vld [vmem:[%s680 + $0x18] sm:$0xff]
        %v2137 = vld [vmem:[%s680 + $0x20] sm:$0xff]
        %v2138 = vld [vmem:[%s680 + $0x28] sm:$0xff]
        %v2139 = vld [vmem:[%s680 + $0x30] sm:$0xff]
        %v2140 = vld [vmem:[%s680 + $0x38] sm:$0xff]
        %v2141 = vld [vmem:[%s680 + $0x40] sm:$0xff]
        %v2142 = vld [vmem:[%s680 + $0x48] sm:$0xff]
        %v2143 = vld [vmem:[%s680 + $0x50] sm:$0xff]
        %v2144 = vld [vmem:[%s680 + $0x58] sm:$0xff]
        %v2145 = vld [vmem:[%s680 + $0x60] sm:$0xff]
        %v2146 = vld [vmem:[%s680 + $0x68] sm:$0xff]
        %v2147 = vld [vmem:[%s680 + $0x70] sm:$0xff]
        %v2148 = vld [vmem:[%s680 + $0x78] sm:$0xff]
        %v2149 = vunpack.c.0.s8 %v2133
        %v2150 = vunpack.c.0.s8 %v2134
        %v2151 = vunpack.c.1.s8 %v2133
        %v2152 = vunpack.c.1.s8 %v2134
        %v2153 = vunpack.c.2.s8 %v2133
        %v2154 = vunpack.c.2.s8 %v2134
        %v2155 = vunpack.c.3.s8 %v2133
        %v2156 = vunpack.c.3.s8 %v2134
        %v2157 = vunpack.c.0.s8 %v2135
        %v2158 = vunpack.c.0.s8 %v2136
        %v2159 = vunpack.c.1.s8 %v2135
        %v2160 = vunpack.c.1.s8 %v2136
        %v2161 = vunpack.c.2.s8 %v2135
        %v2162 = vunpack.c.2.s8 %v2136
        %v2163 = vunpack.c.3.s8 %v2135
        %v2164 = vunpack.c.3.s8 %v2136
        %v2165 = vunpack.c.0.s8 %v2137
        %v2166 = vunpack.c.0.s8 %v2138
        %v2167 = vunpack.c.1.s8 %v2137
        %v2168 = vunpack.c.1.s8 %v2138
        %v2169 = vunpack.c.2.s8 %v2137
        %v2170 = vunpack.c.2.s8 %v2138
        %v2171 = vunpack.c.3.s8 %v2137
        %v2172 = vunpack.c.3.s8 %v2138
        %v2173 = vunpack.c.0.s8 %v2139
        %v2174 = vunpack.c.0.s8 %v2140
        %v2175 = vunpack.c.1.s8 %v2139
        %v2176 = vunpack.c.1.s8 %v2140
        %v2177 = vunpack.c.2.s8 %v2139
        %v2178 = vunpack.c.2.s8 %v2140
        %v2179 = vunpack.c.3.s8 %v2139
        %v2180 = vunpack.c.3.s8 %v2140
        %v2181 = vunpack.c.0.s8 %v2141
        %v2182 = vunpack.c.0.s8 %v2142
        %v2183 = vunpack.c.1.s8 %v2141
        %v2184 = vunpack.c.1.s8 %v2142
        %v2185 = vunpack.c.2.s8 %v2141
        %v2186 = vunpack.c.2.s8 %v2142
        %v2187 = vunpack.c.3.s8 %v2141
        %v2188 = vunpack.c.3.s8 %v2142
        %v2189 = vunpack.c.0.s8 %v2143
        %v2190 = vunpack.c.0.s8 %v2144
        %v2191 = vunpack.c.1.s8 %v2143
        %v2192 = vunpack.c.1.s8 %v2144
        %v2193 = vunpack.c.2.s8 %v2143
        %v2194 = vunpack.c.2.s8 %v2144
        %v2195 = vunpack.c.3.s8 %v2143
        %v2196 = vunpack.c.3.s8 %v2144
        %v2197 = vunpack.c.0.s8 %v2145
        %v2198 = vunpack.c.0.s8 %v2146
        %v2199 = vunpack.c.1.s8 %v2145
        %v2200 = vunpack.c.1.s8 %v2146
        %v2201 = vunpack.c.2.s8 %v2145
        %v2202 = vunpack.c.2.s8 %v2146
        %v2203 = vunpack.c.3.s8 %v2145
        %v2204 = vunpack.c.3.s8 %v2146
        %v2205 = vunpack.c.0.s8 %v2147
        %v2206 = vunpack.c.0.s8 %v2148
        %v2207 = vunpack.c.1.s8 %v2147
        %v2208 = vunpack.c.1.s8 %v2148
        %v2209 = vunpack.c.2.s8 %v2147
        %v2210 = vunpack.c.2.s8 %v2148
        %v2211 = vunpack.c.3.s8 %v2147
        %v2212 = vunpack.c.3.s8 %v2148
        %v2213 = vcvt.s32.f32 %v2149
        %v2214 = vcvt.s32.f32 %v2150
        %v2215 = vcvt.s32.f32 %v2151
        %v2216 = vcvt.s32.f32 %v2152
        %v2217 = vcvt.s32.f32 %v2153
        %v2218 = vcvt.s32.f32 %v2154
        %v2219 = vcvt.s32.f32 %v2155
        %v2220 = vcvt.s32.f32 %v2156
        %v2221 = vcvt.s32.f32 %v2157
        %v2222 = vcvt.s32.f32 %v2158
        %v2223 = vcvt.s32.f32 %v2159
        %v2224 = vcvt.s32.f32 %v2160
        %v2225 = vcvt.s32.f32 %v2161
        %v2226 = vcvt.s32.f32 %v2162
        %v2227 = vcvt.s32.f32 %v2163
        %v2228 = vcvt.s32.f32 %v2164
        %v2229 = vcvt.s32.f32 %v2165
        %v2230 = vcvt.s32.f32 %v2166
        %v2231 = vcvt.s32.f32 %v2167
        %v2232 = vcvt.s32.f32 %v2168
        %v2233 = vcvt.s32.f32 %v2169
        %v2234 = vcvt.s32.f32 %v2170
        %v2235 = vcvt.s32.f32 %v2171
        %v2236 = vcvt.s32.f32 %v2172
        %v2237 = vcvt.s32.f32 %v2173
        %v2238 = vcvt.s32.f32 %v2174
        %v2239 = vcvt.s32.f32 %v2175
        %v2240 = vcvt.s32.f32 %v2176
        %v2241 = vcvt.s32.f32 %v2177
        %v2242 = vcvt.s32.f32 %v2178
        %v2243 = vcvt.s32.f32 %v2179
        %v2244 = vcvt.s32.f32 %v2180
        %v2245 = vcvt.s32.f32 %v2181
        %v2246 = vcvt.s32.f32 %v2182
        %v2247 = vcvt.s32.f32 %v2183
        %v2248 = vcvt.s32.f32 %v2184
        %v2249 = vcvt.s32.f32 %v2185
        %v2250 = vcvt.s32.f32 %v2186
        %v2251 = vcvt.s32.f32 %v2187
        %v2252 = vcvt.s32.f32 %v2188
        %v2253 = vcvt.s32.f32 %v2189
        %v2254 = vcvt.s32.f32 %v2190
        %v2255 = vcvt.s32.f32 %v2191
        %v2256 = vcvt.s32.f32 %v2192
        %v2257 = vcvt.s32.f32 %v2193
        %v2258 = vcvt.s32.f32 %v2194
        %v2259 = vcvt.s32.f32 %v2195
        %v2260 = vcvt.s32.f32 %v2196
        %v2261 = vcvt.s32.f32 %v2197
        %v2262 = vcvt.s32.f32 %v2198
        %v2263 = vcvt.s32.f32 %v2199
        %v2264 = vcvt.s32.f32 %v2200
        %v2265 = vcvt.s32.f32 %v2201
        %v2266 = vcvt.s32.f32 %v2202
        %v2267 = vcvt.s32.f32 %v2203
        %v2268 = vcvt.s32.f32 %v2204
        %v2269 = vcvt.s32.f32 %v2205
        %v2270 = vcvt.s32.f32 %v2206
        %v2271 = vcvt.s32.f32 %v2207
        %v2272 = vcvt.s32.f32 %v2208
        %v2273 = vcvt.s32.f32 %v2209
        %v2274 = vcvt.s32.f32 %v2210
        %v2275 = vcvt.s32.f32 %v2211
        %v2276 = vcvt.s32.f32 %v2212
        %v2277 = vpack.c.bf16 %v2215, %v2213
        %v2278 = vpack.c.bf16 %v2216, %v2214
        %v2279 = vpack.c.bf16 %v2219, %v2217
        %v2280 = vpack.c.bf16 %v2220, %v2218
        %v2281 = vpack.c.bf16 %v2223, %v2221
        %v2282 = vpack.c.bf16 %v2224, %v2222
        %v2283 = vpack.c.bf16 %v2227, %v2225
        %v2284 = vpack.c.bf16 %v2228, %v2226
        %v2285 = vpack.c.bf16 %v2231, %v2229
        %v2286 = vpack.c.bf16 %v2232, %v2230
        %v2287 = vpack.c.bf16 %v2235, %v2233
        %v2288 = vpack.c.bf16 %v2236, %v2234
        %v2289 = vpack.c.bf16 %v2239, %v2237
        %v2290 = vpack.c.bf16 %v2240, %v2238
        %v2291 = vpack.c.bf16 %v2243, %v2241
        %v2292 = vpack.c.bf16 %v2244, %v2242
        %v2293 = vpack.c.bf16 %v2247, %v2245
        %v2294 = vpack.c.bf16 %v2248, %v2246
        %v2295 = vpack.c.bf16 %v2251, %v2249
        %v2296 = vpack.c.bf16 %v2252, %v2250
        %v2297 = vpack.c.bf16 %v2255, %v2253
        %v2298 = vpack.c.bf16 %v2256, %v2254
        %v2299 = vpack.c.bf16 %v2259, %v2257
        %v2300 = vpack.c.bf16 %v2260, %v2258
        %v2301 = vpack.c.bf16 %v2263, %v2261
        %v2302 = vpack.c.bf16 %v2264, %v2262
        %v2303 = vpack.c.bf16 %v2267, %v2265
        %v2304 = vpack.c.bf16 %v2268, %v2266
        %v2305 = vpack.c.bf16 %v2271, %v2269
        %v2306 = vpack.c.bf16 %v2272, %v2270
        %v2307 = vpack.c.bf16 %v2275, %v2273
        %v2308 = vpack.c.bf16 %v2276, %v2274
        %2309 = vmatpush.bf16.msra.mxu0 %v2291
        %2310 = vmatpush.bf16.msra.mxu0 %v2289
        %2311 = vmatpush.bf16.msra.mxu0 %v2287
        %2312 = vmatpush.bf16.msra.mxu0 %v2285
        %2313 = vmatpush.bf16.msra.mxu0 %v2283
        %2314 = vmatpush.bf16.msra.mxu0 %v2281
        %2315 = vmatpush.bf16.msra.mxu0 %v2279
        %2316 = vmatpush.bf16.msra.mxu0 %v2277
        %2317 = vmatmul.bf16.gmra.mxu0 %v2131
        %v2318 = vpop.f32.mrf.mxu0
        %v2319 = vadd.f32 0.0, %v2318
        %v2320 = vpop.f32.mrf.mxu0
        %v2321 = vadd.f32 0.0, %v2320
        %2322 = vdwg.mxu0
        %2323 = vmatpush.bf16.msra.mxu0 %v2307
        %2324 = vmatpush.bf16.msra.mxu0 %v2305
        %2325 = vmatpush.bf16.msra.mxu0 %v2303
        %2326 = vmatpush.bf16.msra.mxu0 %v2301
        %2327 = vmatpush.bf16.msra.mxu0 %v2299
        %2328 = vmatpush.bf16.msra.mxu0 %v2297
        %2329 = vmatpush.bf16.msra.mxu0 %v2295
        %2330 = vmatpush.bf16.msra.mxu0 %v2293
        %2331 = vmatmul.bf16.gmra.mxu0 %v2132
        %v2332 = vpop.f32.mrf.mxu0
        %v2333 = vadd.f32 %v2319, %v2332
        %v2334 = vpop.f32.mrf.mxu0
        %v2335 = vadd.f32 %v2321, %v2334
        %2336 = vdwg.mxu0
        %2337 = vmatpush.bf16.msra.mxu0 %v2292
        %2338 = vmatpush.bf16.msra.mxu0 %v2290
        %2339 = vmatpush.bf16.msra.mxu0 %v2288
        %2340 = vmatpush.bf16.msra.mxu0 %v2286
        %2341 = vmatpush.bf16.msra.mxu0 %v2284
        %2342 = vmatpush.bf16.msra.mxu0 %v2282
        %2343 = vmatpush.bf16.msra.mxu0 %v2280
        %2344 = vmatpush.bf16.msra.mxu0 %v2278
        %2345 = vmatmul.bf16.gmra.mxu0 %v2131
        %v2346 = vpop.f32.mrf.mxu0
        %v2347 = vadd.f32 0.0, %v2346
        %v2348 = vpop.f32.mrf.mxu0
        %v2349 = vadd.f32 0.0, %v2348
        %2350 = vdwg.mxu0
        %2351 = vmatpush.bf16.msra.mxu0 %v2308
        %2352 = vmatpush.bf16.msra.mxu0 %v2306
        %2353 = vmatpush.bf16.msra.mxu0 %v2304
        %2354 = vmatpush.bf16.msra.mxu0 %v2302
        %2355 = vmatpush.bf16.msra.mxu0 %v2300
        %2356 = vmatpush.bf16.msra.mxu0 %v2298
        %2357 = vmatpush.bf16.msra.mxu0 %v2296
        %2358 = vmatpush.bf16.msra.mxu0 %v2294
        %2359 = vmatmul.bf16.gmra.mxu0 %v2132
        %v2360 = vpop.f32.mrf.mxu0
        %v2361 = vadd.f32 %v2347, %v2360
        %v2362 = vpop.f32.mrf.mxu0
        %v2363 = vadd.f32 %v2349, %v2362
        %2364 = vdwg.mxu0
        %v2365 = vld [vmem:[%s805] sm:$0x3]
        %v2367 = vperm.slane %v2365, 0
        %v2368 = vperm.slane %v2365, 1
        %v2371 = vmul.f32 %v2333, %v2367
        %v2372 = vmul.f32 %v2361, %v2368
        %v2373 = vmul.f32 %v2335, %v2367
        %v2374 = vmul.f32 %v2363, %v2368
        %v2375 = vadd.f32 %v1107, %v2371
        %v2376 = vadd.f32 %v1108, %v2372
        %v2377 = vadd.f32 %v1109, %v2373
        %v2378 = vadd.f32 %v1110, %v2374
        %s2379 = scalar_lea.vmem %s797, 1
        %v2380 = vld [vmem:[%s2379] ss:$2 sm:$0x3]
        %v2381 = vmul.f32 %v2375, %v2375
        %v2382 = vmul.f32 %v2376, %v2376
        %v2383 = vmul.f32 %v2377, %v2377
        %v2384 = vmul.f32 %v2378, %v2378
        %v2385 = vadd.f32 %v2381, %v2382
        %2386 = vadd.xlane.f32.xlu0 %v2385
        %v2387 = vpop.xlane.xlu0 %2386
        %v2388 = vadd.f32 %v2383, %v2384
        %2389 = vadd.xlane.f32.xlu0 %v2388
        %v2390 = vpop.xlane.xlu0 %2389
        %v2391 = vmul.f32 %v2387, %v1128
        %v2392 = vmul.f32 %v2390, %v1128
        %v2393 = vadd.f32 %v2391, 1e-05
        %v2394 = vadd.f32 %v2392, 1e-05
        %v2395 = vrsqrt.pop %v2393
        %v2396 = vmul.f32 %v2395, %v2393
        %v2397 = vmul.f32 %v2396, %v2395
        %v2398 = vmul.f32 0.5, %v2397
        %v2399 = vsub.f32 1.5, %v2398
        %v2400 = vmul.f32 %v2395, %v2399
        %vm2401 = vweird.f32 %v2393
        %vm2402 = vweird.f32 %v2395
        %vm2403 = vmor %vm2401, %vm2402
        %v2404 = vsel %vm2403, %v2395, %v2400
        %v2405 = vrsqrt.pop %v2394
        %v2406 = vmul.f32 %v2405, %v2394
        %v2407 = vmul.f32 %v2406, %v2405
        %v2408 = vmul.f32 0.5, %v2407
        %v2409 = vsub.f32 1.5, %v2408
        %v2410 = vmul.f32 %v2405, %v2409
        %vm2411 = vweird.f32 %v2394
        %vm2412 = vweird.f32 %v2405
        %vm2413 = vmor %vm2411, %vm2412
        %v2414 = vsel %vm2413, %v2405, %v2410
        %v2415 = vmul.f32 %v2375, %v2404
        %v2416 = vmul.f32 %v2376, %v2404
        %v2417 = vmul.f32 %v2377, %v2414
        %v2418 = vmul.f32 %v2378, %v2414
        %v2420 = vperm.slane %v2380, 0
        %v2421 = vperm.slane %v2380, 1
        %v2424 = vmul.f32 %v2415, %v2420
        %v2425 = vmul.f32 %v2416, %v2421
        %v2426 = vmul.f32 %v2417, %v2420
        %v2427 = vmul.f32 %v2418, %v2421
        %v2428 = vpack.c.bf16 %v2426, %v2424
        %v2429 = vpack.c.bf16 %v2427, %v2425
        %v2430 = vld [vmem:[%s690] sm:$0xff]
        %v2431 = vld [vmem:[%s690 + $0x8] sm:$0xff]
        %v2432 = vld [vmem:[%s690 + $0x10] sm:$0xff]
        %v2433 = vld [vmem:[%s690 + $0x18] sm:$0xff]
        %v2434 = vld [vmem:[%s690 + $0x20] sm:$0xff]
        %v2435 = vld [vmem:[%s690 + $0x28] sm:$0xff]
        %v2436 = vld [vmem:[%s690 + $0x30] sm:$0xff]
        %v2437 = vld [vmem:[%s690 + $0x38] sm:$0xff]
        %v2438 = vld [vmem:[%s690 + $0x40] sm:$0xff]
        %v2439 = vld [vmem:[%s690 + $0x48] sm:$0xff]
        %v2440 = vld [vmem:[%s690 + $0x50] sm:$0xff]
        %v2441 = vld [vmem:[%s690 + $0x58] sm:$0xff]
        %v2442 = vld [vmem:[%s690 + $0x60] sm:$0xff]
        %v2443 = vld [vmem:[%s690 + $0x68] sm:$0xff]
        %v2444 = vld [vmem:[%s690 + $0x70] sm:$0xff]
        %v2445 = vld [vmem:[%s690 + $0x78] sm:$0xff]
        %v2446 = vld [vmem:[%s690 + $0x80] sm:$0xff]
        %v2447 = vld [vmem:[%s690 + $0x88] sm:$0xff]
        %v2448 = vld [vmem:[%s690 + $0x90] sm:$0xff]
        %v2449 = vld [vmem:[%s690 + $0x98] sm:$0xff]
        %v2450 = vld [vmem:[%s690 + $0xa0] sm:$0xff]
        %v2451 = vld [vmem:[%s690 + $0xa8] sm:$0xff]
        %v2452 = vld [vmem:[%s690 + $0xb0] sm:$0xff]
        %v2453 = vld [vmem:[%s690 + $0xb8] sm:$0xff]
        %v2454 = vld [vmem:[%s690 + $0xc0] sm:$0xff]
        %v2455 = vld [vmem:[%s690 + $0xc8] sm:$0xff]
        %v2456 = vld [vmem:[%s690 + $0xd0] sm:$0xff]
        %v2457 = vld [vmem:[%s690 + $0xd8] sm:$0xff]
        %v2458 = vld [vmem:[%s690 + $0xe0] sm:$0xff]
        %v2459 = vld [vmem:[%s690 + $0xe8] sm:$0xff]
        %v2460 = vld [vmem:[%s690 + $0xf0] sm:$0xff]
        %v2461 = vld [vmem:[%s690 + $0xf8] sm:$0xff]
        %v2462 = vld [vmem:[%s690 + $0x100] sm:$0xff]
        %v2463 = vld [vmem:[%s690 + $0x108] sm:$0xff]
        %v2464 = vld [vmem:[%s690 + $0x110] sm:$0xff]
        %v2465 = vld [vmem:[%s690 + $0x118] sm:$0xff]
        %v2466 = vld [vmem:[%s690 + $0x120] sm:$0xff]
        %v2467 = vld [vmem:[%s690 + $0x128] sm:$0xff]
        %v2468 = vld [vmem:[%s690 + $0x130] sm:$0xff]
        %v2469 = vld [vmem:[%s690 + $0x138] sm:$0xff]
        %v2470 = vld [vmem:[%s690 + $0x140] sm:$0xff]
        %v2471 = vld [vmem:[%s690 + $0x148] sm:$0xff]
        %v2472 = vld [vmem:[%s690 + $0x150] sm:$0xff]
        %v2473 = vld [vmem:[%s690 + $0x158] sm:$0xff]
        %v2474 = vld [vmem:[%s690 + $0x160] sm:$0xff]
        %v2475 = vld [vmem:[%s690 + $0x168] sm:$0xff]
        %v2476 = vld [vmem:[%s690 + $0x170] sm:$0xff]
        %v2477 = vld [vmem:[%s690 + $0x178] sm:$0xff]
        %v2478 = vld [vmem:[%s690 + $0x180] sm:$0xff]
        %v2479 = vld [vmem:[%s690 + $0x188] sm:$0xff]
        %v2480 = vld [vmem:[%s690 + $0x190] sm:$0xff]
        %v2481 = vld [vmem:[%s690 + $0x198] sm:$0xff]
        %v2482 = vld [vmem:[%s690 + $0x1a0] sm:$0xff]
        %v2483 = vld [vmem:[%s690 + $0x1a8] sm:$0xff]
        %v2484 = vld [vmem:[%s690 + $0x1b0] sm:$0xff]
        %v2485 = vld [vmem:[%s690 + $0x1b8] sm:$0xff]
        %v2486 = vld [vmem:[%s690 + $0x1c0] sm:$0xff]
        %v2487 = vld [vmem:[%s690 + $0x1c8] sm:$0xff]
        %v2488 = vld [vmem:[%s690 + $0x1d0] sm:$0xff]
        %v2489 = vld [vmem:[%s690 + $0x1d8] sm:$0xff]
        %v2490 = vld [vmem:[%s690 + $0x1e0] sm:$0xff]
        %v2491 = vld [vmem:[%s690 + $0x1e8] sm:$0xff]
        %v2492 = vld [vmem:[%s690 + $0x1f0] sm:$0xff]
        %v2493 = vld [vmem:[%s690 + $0x1f8] sm:$0xff]
        %v2494 = vunpack.c.0.s8 %v2430
        %v2495 = vunpack.c.0.s8 %v2431
        %v2496 = vunpack.c.0.s8 %v2432
        %v2497 = vunpack.c.0.s8 %v2433
        %v2498 = vunpack.c.0.s8 %v2434
        %v2499 = vunpack.c.0.s8 %v2435
        %v2500 = vunpack.c.0.s8 %v2436
        %v2501 = vunpack.c.0.s8 %v2437
        %v2502 = vunpack.c.1.s8 %v2430
        %v2503 = vunpack.c.1.s8 %v2431
        %v2504 = vunpack.c.1.s8 %v2432
        %v2505 = vunpack.c.1.s8 %v2433
        %v2506 = vunpack.c.1.s8 %v2434
        %v2507 = vunpack.c.1.s8 %v2435
        %v2508 = vunpack.c.1.s8 %v2436
        %v2509 = vunpack.c.1.s8 %v2437
        %v2510 = vunpack.c.2.s8 %v2430
        %v2511 = vunpack.c.2.s8 %v2431
        %v2512 = vunpack.c.2.s8 %v2432
        %v2513 = vunpack.c.2.s8 %v2433
        %v2514 = vunpack.c.2.s8 %v2434
        %v2515 = vunpack.c.2.s8 %v2435
        %v2516 = vunpack.c.2.s8 %v2436
        %v2517 = vunpack.c.2.s8 %v2437
        %v2518 = vunpack.c.3.s8 %v2430
        %v2519 = vunpack.c.3.s8 %v2431
        %v2520 = vunpack.c.3.s8 %v2432
        %v2521 = vunpack.c.3.s8 %v2433
        %v2522 = vunpack.c.3.s8 %v2434
        %v2523 = vunpack.c.3.s8 %v2435
        %v2524 = vunpack.c.3.s8 %v2436
        %v2525 = vunpack.c.3.s8 %v2437
        %v2526 = vunpack.c.0.s8 %v2438
        %v2527 = vunpack.c.0.s8 %v2439
        %v2528 = vunpack.c.0.s8 %v2440
        %v2529 = vunpack.c.0.s8 %v2441
        %v2530 = vunpack.c.0.s8 %v2442
        %v2531 = vunpack.c.0.s8 %v2443
        %v2532 = vunpack.c.0.s8 %v2444
        %v2533 = vunpack.c.0.s8 %v2445
        %v2534 = vunpack.c.1.s8 %v2438
        %v2535 = vunpack.c.1.s8 %v2439
        %v2536 = vunpack.c.1.s8 %v2440
        %v2537 = vunpack.c.1.s8 %v2441
        %v2538 = vunpack.c.1.s8 %v2442
        %v2539 = vunpack.c.1.s8 %v2443
        %v2540 = vunpack.c.1.s8 %v2444
        %v2541 = vunpack.c.1.s8 %v2445
        %v2542 = vunpack.c.2.s8 %v2438
        %v2543 = vunpack.c.2.s8 %v2439
        %v2544 = vunpack.c.2.s8 %v2440
        %v2545 = vunpack.c.2.s8 %v2441
        %v2546 = vunpack.c.2.s8 %v2442
        %v2547 = vunpack.c.2.s8 %v2443
        %v2548 = vunpack.c.2.s8 %v2444
        %v2549 = vunpack.c.2.s8 %v2445
        %v2550 = vunpack.c.3.s8 %v2438
        %v2551 = vunpack.c.3.s8 %v2439
        %v2552 = vunpack.c.3.s8 %v2440
        %v2553 = vunpack.c.3.s8 %v2441
        %v2554 = vunpack.c.3.s8 %v2442
        %v2555 = vunpack.c.3.s8 %v2443
        %v2556 = vunpack.c.3.s8 %v2444
        %v2557 = vunpack.c.3.s8 %v2445
        %v2558 = vunpack.c.0.s8 %v2446
        %v2559 = vunpack.c.0.s8 %v2447
        %v2560 = vunpack.c.0.s8 %v2448
        %v2561 = vunpack.c.0.s8 %v2449
        %v2562 = vunpack.c.0.s8 %v2450
        %v2563 = vunpack.c.0.s8 %v2451
        %v2564 = vunpack.c.0.s8 %v2452
        %v2565 = vunpack.c.0.s8 %v2453
        %v2566 = vunpack.c.1.s8 %v2446
        %v2567 = vunpack.c.1.s8 %v2447
        %v2568 = vunpack.c.1.s8 %v2448
        %v2569 = vunpack.c.1.s8 %v2449
        %v2570 = vunpack.c.1.s8 %v2450
        %v2571 = vunpack.c.1.s8 %v2451
        %v2572 = vunpack.c.1.s8 %v2452
        %v2573 = vunpack.c.1.s8 %v2453
        %v2574 = vunpack.c.2.s8 %v2446
        %v2575 = vunpack.c.2.s8 %v2447
        %v2576 = vunpack.c.2.s8 %v2448
        %v2577 = vunpack.c.2.s8 %v2449
        %v2578 = vunpack.c.2.s8 %v2450
        %v2579 = vunpack.c.2.s8 %v2451
        %v2580 = vunpack.c.2.s8 %v2452
        %v2581 = vunpack.c.2.s8 %v2453
        %v2582 = vunpack.c.3.s8 %v2446
        %v2583 = vunpack.c.3.s8 %v2447
        %v2584 = vunpack.c.3.s8 %v2448
        %v2585 = vunpack.c.3.s8 %v2449
        %v2586 = vunpack.c.3.s8 %v2450
        %v2587 = vunpack.c.3.s8 %v2451
        %v2588 = vunpack.c.3.s8 %v2452
        %v2589 = vunpack.c.3.s8 %v2453
        %v2590 = vunpack.c.0.s8 %v2454
        %v2591 = vunpack.c.0.s8 %v2455
        %v2592 = vunpack.c.0.s8 %v2456
        %v2593 = vunpack.c.0.s8 %v2457
        %v2594 = vunpack.c.0.s8 %v2458
        %v2595 = vunpack.c.0.s8 %v2459
        %v2596 = vunpack.c.0.s8 %v2460
        %v2597 = vunpack.c.0.s8 %v2461
        %v2598 = vunpack.c.1.s8 %v2454
        %v2599 = vunpack.c.1.s8 %v2455
        %v2600 = vunpack.c.1.s8 %v2456
        %v2601 = vunpack.c.1.s8 %v2457
        %v2602 = vunpack.c.1.s8 %v2458
        %v2603 = vunpack.c.1.s8 %v2459
        %v2604 = vunpack.c.1.s8 %v2460
        %v2605 = vunpack.c.1.s8 %v2461
        %v2606 = vunpack.c.2.s8 %v2454
        %v2607 = vunpack.c.2.s8 %v2455
        %v2608 = vunpack.c.2.s8 %v2456
        %v2609 = vunpack.c.2.s8 %v2457
        %v2610 = vunpack.c.2.s8 %v2458
        %v2611 = vunpack.c.2.s8 %v2459
        %v2612 = vunpack.c.2.s8 %v2460
        %v2613 = vunpack.c.2.s8 %v2461
        %v2614 = vunpack.c.3.s8 %v2454
        %v2615 = vunpack.c.3.s8 %v2455
        %v2616 = vunpack.c.3.s8 %v2456
        %v2617 = vunpack.c.3.s8 %v2457
        %v2618 = vunpack.c.3.s8 %v2458
        %v2619 = vunpack.c.3.s8 %v2459
        %v2620 = vunpack.c.3.s8 %v2460
        %v2621 = vunpack.c.3.s8 %v2461
        %v2622 = vunpack.c.0.s8 %v2462
        %v2623 = vunpack.c.0.s8 %v2463
        %v2624 = vunpack.c.0.s8 %v2464
        %v2625 = vunpack.c.0.s8 %v2465
        %v2626 = vunpack.c.0.s8 %v2466
        %v2627 = vunpack.c.0.s8 %v2467
        %v2628 = vunpack.c.0.s8 %v2468
        %v2629 = vunpack.c.0.s8 %v2469
        %v2630 = vunpack.c.1.s8 %v2462
        %v2631 = vunpack.c.1.s8 %v2463
        %v2632 = vunpack.c.1.s8 %v2464
        %v2633 = vunpack.c.1.s8 %v2465
        %v2634 = vunpack.c.1.s8 %v2466
        %v2635 = vunpack.c.1.s8 %v2467
        %v2636 = vunpack.c.1.s8 %v2468
        %v2637 = vunpack.c.1.s8 %v2469
        %v2638 = vunpack.c.2.s8 %v2462
        %v2639 = vunpack.c.2.s8 %v2463
        %v2640 = vunpack.c.2.s8 %v2464
        %v2641 = vunpack.c.2.s8 %v2465
        %v2642 = vunpack.c.2.s8 %v2466
        %v2643 = vunpack.c.2.s8 %v2467
        %v2644 = vunpack.c.2.s8 %v2468
        %v2645 = vunpack.c.2.s8 %v2469
        %v2646 = vunpack.c.3.s8 %v2462
        %v2647 = vunpack.c.3.s8 %v2463
        %v2648 = vunpack.c.3.s8 %v2464
        %v2649 = vunpack.c.3.s8 %v2465
        %v2650 = vunpack.c.3.s8 %v2466
        %v2651 = vunpack.c.3.s8 %v2467
        %v2652 = vunpack.c.3.s8 %v2468
        %v2653 = vunpack.c.3.s8 %v2469
        %v2654 = vunpack.c.0.s8 %v2470
        %v2655 = vunpack.c.0.s8 %v2471
        %v2656 = vunpack.c.0.s8 %v2472
        %v2657 = vunpack.c.0.s8 %v2473
        %v2658 = vunpack.c.0.s8 %v2474
        %v2659 = vunpack.c.0.s8 %v2475
        %v2660 = vunpack.c.0.s8 %v2476
        %v2661 = vunpack.c.0.s8 %v2477
        %v2662 = vunpack.c.1.s8 %v2470
        %v2663 = vunpack.c.1.s8 %v2471
        %v2664 = vunpack.c.1.s8 %v2472
        %v2665 = vunpack.c.1.s8 %v2473
        %v2666 = vunpack.c.1.s8 %v2474
        %v2667 = vunpack.c.1.s8 %v2475
        %v2668 = vunpack.c.1.s8 %v2476
        %v2669 = vunpack.c.1.s8 %v2477
        %v2670 = vunpack.c.2.s8 %v2470
        %v2671 = vunpack.c.2.s8 %v2471
        %v2672 = vunpack.c.2.s8 %v2472
        %v2673 = vunpack.c.2.s8 %v2473
        %v2674 = vunpack.c.2.s8 %v2474
        %v2675 = vunpack.c.2.s8 %v2475
        %v2676 = vunpack.c.2.s8 %v2476
        %v2677 = vunpack.c.2.s8 %v2477
        %v2678 = vunpack.c.3.s8 %v2470
        %v2679 = vunpack.c.3.s8 %v2471
        %v2680 = vunpack.c.3.s8 %v2472
        %v2681 = vunpack.c.3.s8 %v2473
        %v2682 = vunpack.c.3.s8 %v2474
        %v2683 = vunpack.c.3.s8 %v2475
        %v2684 = vunpack.c.3.s8 %v2476
        %v2685 = vunpack.c.3.s8 %v2477
        %v2686 = vunpack.c.0.s8 %v2478
        %v2687 = vunpack.c.0.s8 %v2479
        %v2688 = vunpack.c.0.s8 %v2480
        %v2689 = vunpack.c.0.s8 %v2481
        %v2690 = vunpack.c.0.s8 %v2482
        %v2691 = vunpack.c.0.s8 %v2483
        %v2692 = vunpack.c.0.s8 %v2484
        %v2693 = vunpack.c.0.s8 %v2485
        %v2694 = vunpack.c.1.s8 %v2478
        %v2695 = vunpack.c.1.s8 %v2479
        %v2696 = vunpack.c.1.s8 %v2480
        %v2697 = vunpack.c.1.s8 %v2481
        %v2698 = vunpack.c.1.s8 %v2482
        %v2699 = vunpack.c.1.s8 %v2483
        %v2700 = vunpack.c.1.s8 %v2484
        %v2701 = vunpack.c.1.s8 %v2485
        %v2702 = vunpack.c.2.s8 %v2478
        %v2703 = vunpack.c.2.s8 %v2479
        %v2704 = vunpack.c.2.s8 %v2480
        %v2705 = vunpack.c.2.s8 %v2481
        %v2706 = vunpack.c.2.s8 %v2482
        %v2707 = vunpack.c.2.s8 %v2483
        %v2708 = vunpack.c.2.s8 %v2484
        %v2709 = vunpack.c.2.s8 %v2485
        %v2710 = vunpack.c.3.s8 %v2478
        %v2711 = vunpack.c.3.s8 %v2479
        %v2712 = vunpack.c.3.s8 %v2480
        %v2713 = vunpack.c.3.s8 %v2481
        %v2714 = vunpack.c.3.s8 %v2482
        %v2715 = vunpack.c.3.s8 %v2483
        %v2716 = vunpack.c.3.s8 %v2484
        %v2717 = vunpack.c.3.s8 %v2485
        %v2718 = vunpack.c.0.s8 %v2486
        %v2719 = vunpack.c.0.s8 %v2487
        %v2720 = vunpack.c.0.s8 %v2488
        %v2721 = vunpack.c.0.s8 %v2489
        %v2722 = vunpack.c.0.s8 %v2490
        %v2723 = vunpack.c.0.s8 %v2491
        %v2724 = vunpack.c.0.s8 %v2492
        %v2725 = vunpack.c.0.s8 %v2493
        %v2726 = vunpack.c.1.s8 %v2486
        %v2727 = vunpack.c.1.s8 %v2487
        %v2728 = vunpack.c.1.s8 %v2488
        %v2729 = vunpack.c.1.s8 %v2489
        %v2730 = vunpack.c.1.s8 %v2490
        %v2731 = vunpack.c.1.s8 %v2491
        %v2732 = vunpack.c.1.s8 %v2492
        %v2733 = vunpack.c.1.s8 %v2493
        %v2734 = vunpack.c.2.s8 %v2486
        %v2735 = vunpack.c.2.s8 %v2487
        %v2736 = vunpack.c.2.s8 %v2488
        %v2737 = vunpack.c.2.s8 %v2489
        %v2738 = vunpack.c.2.s8 %v2490
        %v2739 = vunpack.c.2.s8 %v2491
        %v2740 = vunpack.c.2.s8 %v2492
        %v2741 = vunpack.c.2.s8 %v2493
        %v2742 = vunpack.c.3.s8 %v2486
        %v2743 = vunpack.c.3.s8 %v2487
        %v2744 = vunpack.c.3.s8 %v2488
        %v2745 = vunpack.c.3.s8 %v2489
        %v2746 = vunpack.c.3.s8 %v2490
        %v2747 = vunpack.c.3.s8 %v2491
        %v2748 = vunpack.c.3.s8 %v2492
        %v2749 = vunpack.c.3.s8 %v2493
        %v2750 = vcvt.s32.f32 %v2494
        %v2751 = vcvt.s32.f32 %v2495
        %v2752 = vcvt.s32.f32 %v2496
        %v2753 = vcvt.s32.f32 %v2497
        %v2754 = vcvt.s32.f32 %v2498
        %v2755 = vcvt.s32.f32 %v2499
        %v2756 = vcvt.s32.f32 %v2500
        %v2757 = vcvt.s32.f32 %v2501
        %v2758 = vcvt.s32.f32 %v2502
        %v2759 = vcvt.s32.f32 %v2503
        %v2760 = vcvt.s32.f32 %v2504
        %v2761 = vcvt.s32.f32 %v2505
        %v2762 = vcvt.s32.f32 %v2506
        %v2763 = vcvt.s32.f32 %v2507
        %v2764 = vcvt.s32.f32 %v2508
        %v2765 = vcvt.s32.f32 %v2509
        %v2766 = vcvt.s32.f32 %v2510
        %v2767 = vcvt.s32.f32 %v2511
        %v2768 = vcvt.s32.f32 %v2512
        %v2769 = vcvt.s32.f32 %v2513
        %v2770 = vcvt.s32.f32 %v2514
        %v2771 = vcvt.s32.f32 %v2515
        %v2772 = vcvt.s32.f32 %v2516
        %v2773 = vcvt.s32.f32 %v2517
        %v2774 = vcvt.s32.f32 %v2518
        %v2775 = vcvt.s32.f32 %v2519
        %v2776 = vcvt.s32.f32 %v2520
        %v2777 = vcvt.s32.f32 %v2521
        %v2778 = vcvt.s32.f32 %v2522
        %v2779 = vcvt.s32.f32 %v2523
        %v2780 = vcvt.s32.f32 %v2524
        %v2781 = vcvt.s32.f32 %v2525
        %v2782 = vcvt.s32.f32 %v2526
        %v2783 = vcvt.s32.f32 %v2527
        %v2784 = vcvt.s32.f32 %v2528
        %v2785 = vcvt.s32.f32 %v2529
        %v2786 = vcvt.s32.f32 %v2530
        %v2787 = vcvt.s32.f32 %v2531
        %v2788 = vcvt.s32.f32 %v2532
        %v2789 = vcvt.s32.f32 %v2533
        %v2790 = vcvt.s32.f32 %v2534
        %v2791 = vcvt.s32.f32 %v2535
        %v2792 = vcvt.s32.f32 %v2536
        %v2793 = vcvt.s32.f32 %v2537
        %v2794 = vcvt.s32.f32 %v2538
        %v2795 = vcvt.s32.f32 %v2539
        %v2796 = vcvt.s32.f32 %v2540
        %v2797 = vcvt.s32.f32 %v2541
        %v2798 = vcvt.s32.f32 %v2542
        %v2799 = vcvt.s32.f32 %v2543
        %v2800 = vcvt.s32.f32 %v2544
        %v2801 = vcvt.s32.f32 %v2545
        %v2802 = vcvt.s32.f32 %v2546
        %v2803 = vcvt.s32.f32 %v2547
        %v2804 = vcvt.s32.f32 %v2548
        %v2805 = vcvt.s32.f32 %v2549
        %v2806 = vcvt.s32.f32 %v2550
        %v2807 = vcvt.s32.f32 %v2551
        %v2808 = vcvt.s32.f32 %v2552
        %v2809 = vcvt.s32.f32 %v2553
        %v2810 = vcvt.s32.f32 %v2554
        %v2811 = vcvt.s32.f32 %v2555
        %v2812 = vcvt.s32.f32 %v2556
        %v2813 = vcvt.s32.f32 %v2557
        %v2814 = vcvt.s32.f32 %v2558
        %v2815 = vcvt.s32.f32 %v2559
        %v2816 = vcvt.s32.f32 %v2560
        %v2817 = vcvt.s32.f32 %v2561
        %v2818 = vcvt.s32.f32 %v2562
        %v2819 = vcvt.s32.f32 %v2563
        %v2820 = vcvt.s32.f32 %v2564
        %v2821 = vcvt.s32.f32 %v2565
        %v2822 = vcvt.s32.f32 %v2566
        %v2823 = vcvt.s32.f32 %v2567
        %v2824 = vcvt.s32.f32 %v2568
        %v2825 = vcvt.s32.f32 %v2569
        %v2826 = vcvt.s32.f32 %v2570
        %v2827 = vcvt.s32.f32 %v2571
        %v2828 = vcvt.s32.f32 %v2572
        %v2829 = vcvt.s32.f32 %v2573
        %v2830 = vcvt.s32.f32 %v2574
        %v2831 = vcvt.s32.f32 %v2575
        %v2832 = vcvt.s32.f32 %v2576
        %v2833 = vcvt.s32.f32 %v2577
        %v2834 = vcvt.s32.f32 %v2578
        %v2835 = vcvt.s32.f32 %v2579
        %v2836 = vcvt.s32.f32 %v2580
        %v2837 = vcvt.s32.f32 %v2581
        %v2838 = vcvt.s32.f32 %v2582
        %v2839 = vcvt.s32.f32 %v2583
        %v2840 = vcvt.s32.f32 %v2584
        %v2841 = vcvt.s32.f32 %v2585
        %v2842 = vcvt.s32.f32 %v2586
        %v2843 = vcvt.s32.f32 %v2587
        %v2844 = vcvt.s32.f32 %v2588
        %v2845 = vcvt.s32.f32 %v2589
        %v2846 = vcvt.s32.f32 %v2590
        %v2847 = vcvt.s32.f32 %v2591
        %v2848 = vcvt.s32.f32 %v2592
        %v2849 = vcvt.s32.f32 %v2593
        %v2850 = vcvt.s32.f32 %v2594
        %v2851 = vcvt.s32.f32 %v2595
        %v2852 = vcvt.s32.f32 %v2596
        %v2853 = vcvt.s32.f32 %v2597
        %v2854 = vcvt.s32.f32 %v2598
        %v2855 = vcvt.s32.f32 %v2599
        %v2856 = vcvt.s32.f32 %v2600
        %v2857 = vcvt.s32.f32 %v2601
        %v2858 = vcvt.s32.f32 %v2602
        %v2859 = vcvt.s32.f32 %v2603
        %v2860 = vcvt.s32.f32 %v2604
        %v2861 = vcvt.s32.f32 %v2605
        %v2862 = vcvt.s32.f32 %v2606
        %v2863 = vcvt.s32.f32 %v2607
        %v2864 = vcvt.s32.f32 %v2608
        %v2865 = vcvt.s32.f32 %v2609
        %v2866 = vcvt.s32.f32 %v2610
        %v2867 = vcvt.s32.f32 %v2611
        %v2868 = vcvt.s32.f32 %v2612
        %v2869 = vcvt.s32.f32 %v2613
        %v2870 = vcvt.s32.f32 %v2614
        %v2871 = vcvt.s32.f32 %v2615
        %v2872 = vcvt.s32.f32 %v2616
        %v2873 = vcvt.s32.f32 %v2617
        %v2874 = vcvt.s32.f32 %v2618
        %v2875 = vcvt.s32.f32 %v2619
        %v2876 = vcvt.s32.f32 %v2620
        %v2877 = vcvt.s32.f32 %v2621
        %v2878 = vcvt.s32.f32 %v2622
        %v2879 = vcvt.s32.f32 %v2623
        %v2880 = vcvt.s32.f32 %v2624
        %v2881 = vcvt.s32.f32 %v2625
        %v2882 = vcvt.s32.f32 %v2626
        %v2883 = vcvt.s32.f32 %v2627
        %v2884 = vcvt.s32.f32 %v2628
        %v2885 = vcvt.s32.f32 %v2629
        %v2886 = vcvt.s32.f32 %v2630
        %v2887 = vcvt.s32.f32 %v2631
        %v2888 = vcvt.s32.f32 %v2632
        %v2889 = vcvt.s32.f32 %v2633
        %v2890 = vcvt.s32.f32 %v2634
        %v2891 = vcvt.s32.f32 %v2635
        %v2892 = vcvt.s32.f32 %v2636
        %v2893 = vcvt.s32.f32 %v2637
        %v2894 = vcvt.s32.f32 %v2638
        %v2895 = vcvt.s32.f32 %v2639
        %v2896 = vcvt.s32.f32 %v2640
        %v2897 = vcvt.s32.f32 %v2641
        %v2898 = vcvt.s32.f32 %v2642
        %v2899 = vcvt.s32.f32 %v2643
        %v2900 = vcvt.s32.f32 %v2644
        %v2901 = vcvt.s32.f32 %v2645
        %v2902 = vcvt.s32.f32 %v2646
        %v2903 = vcvt.s32.f32 %v2647
        %v2904 = vcvt.s32.f32 %v2648
        %v2905 = vcvt.s32.f32 %v2649
        %v2906 = vcvt.s32.f32 %v2650
        %v2907 = vcvt.s32.f32 %v2651
        %v2908 = vcvt.s32.f32 %v2652
        %v2909 = vcvt.s32.f32 %v2653
        %v2910 = vcvt.s32.f32 %v2654
        %v2911 = vcvt.s32.f32 %v2655
        %v2912 = vcvt.s32.f32 %v2656
        %v2913 = vcvt.s32.f32 %v2657
        %v2914 = vcvt.s32.f32 %v2658
        %v2915 = vcvt.s32.f32 %v2659
        %v2916 = vcvt.s32.f32 %v2660
        %v2917 = vcvt.s32.f32 %v2661
        %v2918 = vcvt.s32.f32 %v2662
        %v2919 = vcvt.s32.f32 %v2663
        %v2920 = vcvt.s32.f32 %v2664
        %v2921 = vcvt.s32.f32 %v2665
        %v2922 = vcvt.s32.f32 %v2666
        %v2923 = vcvt.s32.f32 %v2667
        %v2924 = vcvt.s32.f32 %v2668
        %v2925 = vcvt.s32.f32 %v2669
        %v2926 = vcvt.s32.f32 %v2670
        %v2927 = vcvt.s32.f32 %v2671
        %v2928 = vcvt.s32.f32 %v2672
        %v2929 = vcvt.s32.f32 %v2673
        %v2930 = vcvt.s32.f32 %v2674
        %v2931 = vcvt.s32.f32 %v2675
        %v2932 = vcvt.s32.f32 %v2676
        %v2933 = vcvt.s32.f32 %v2677
        %v2934 = vcvt.s32.f32 %v2678
        %v2935 = vcvt.s32.f32 %v2679
        %v2936 = vcvt.s32.f32 %v2680
        %v2937 = vcvt.s32.f32 %v2681
        %v2938 = vcvt.s32.f32 %v2682
        %v2939 = vcvt.s32.f32 %v2683
        %v2940 = vcvt.s32.f32 %v2684
        %v2941 = vcvt.s32.f32 %v2685
        %v2942 = vcvt.s32.f32 %v2686
        %v2943 = vcvt.s32.f32 %v2687
        %v2944 = vcvt.s32.f32 %v2688
        %v2945 = vcvt.s32.f32 %v2689
        %v2946 = vcvt.s32.f32 %v2690
        %v2947 = vcvt.s32.f32 %v2691
        %v2948 = vcvt.s32.f32 %v2692
        %v2949 = vcvt.s32.f32 %v2693
        %v2950 = vcvt.s32.f32 %v2694
        %v2951 = vcvt.s32.f32 %v2695
        %v2952 = vcvt.s32.f32 %v2696
        %v2953 = vcvt.s32.f32 %v2697
        %v2954 = vcvt.s32.f32 %v2698
        %v2955 = vcvt.s32.f32 %v2699
        %v2956 = vcvt.s32.f32 %v2700
        %v2957 = vcvt.s32.f32 %v2701
        %v2958 = vcvt.s32.f32 %v2702
        %v2959 = vcvt.s32.f32 %v2703
        %v2960 = vcvt.s32.f32 %v2704
        %v2961 = vcvt.s32.f32 %v2705
        %v2962 = vcvt.s32.f32 %v2706
        %v2963 = vcvt.s32.f32 %v2707
        %v2964 = vcvt.s32.f32 %v2708
        %v2965 = vcvt.s32.f32 %v2709
        %v2966 = vcvt.s32.f32 %v2710
        %v2967 = vcvt.s32.f32 %v2711
        %v2968 = vcvt.s32.f32 %v2712
        %v2969 = vcvt.s32.f32 %v2713
        %v2970 = vcvt.s32.f32 %v2714
        %v2971 = vcvt.s32.f32 %v2715
        %v2972 = vcvt.s32.f32 %v2716
        %v2973 = vcvt.s32.f32 %v2717
        %v2974 = vcvt.s32.f32 %v2718
        %v2975 = vcvt.s32.f32 %v2719
        %v2976 = vcvt.s32.f32 %v2720
        %v2977 = vcvt.s32.f32 %v2721
        %v2978 = vcvt.s32.f32 %v2722
        %v2979 = vcvt.s32.f32 %v2723
        %v2980 = vcvt.s32.f32 %v2724
        %v2981 = vcvt.s32.f32 %v2725
        %v2982 = vcvt.s32.f32 %v2726
        %v2983 = vcvt.s32.f32 %v2727
        %v2984 = vcvt.s32.f32 %v2728
        %v2985 = vcvt.s32.f32 %v2729
        %v2986 = vcvt.s32.f32 %v2730
        %v2987 = vcvt.s32.f32 %v2731
        %v2988 = vcvt.s32.f32 %v2732
        %v2989 = vcvt.s32.f32 %v2733
        %v2990 = vcvt.s32.f32 %v2734
        %v2991 = vcvt.s32.f32 %v2735
        %v2992 = vcvt.s32.f32 %v2736
        %v2993 = vcvt.s32.f32 %v2737
        %v2994 = vcvt.s32.f32 %v2738
        %v2995 = vcvt.s32.f32 %v2739
        %v2996 = vcvt.s32.f32 %v2740
        %v2997 = vcvt.s32.f32 %v2741
        %v2998 = vcvt.s32.f32 %v2742
        %v2999 = vcvt.s32.f32 %v2743
        %v3000 = vcvt.s32.f32 %v2744
        %v3001 = vcvt.s32.f32 %v2745
        %v3002 = vcvt.s32.f32 %v2746
        %v3003 = vcvt.s32.f32 %v2747
        %v3004 = vcvt.s32.f32 %v2748
        %v3005 = vcvt.s32.f32 %v2749
        %v3006 = vpack.c.bf16 %v2758, %v2750
        %v3007 = vpack.c.bf16 %v2759, %v2751
        %v3008 = vpack.c.bf16 %v2760, %v2752
        %v3009 = vpack.c.bf16 %v2761, %v2753
        %v3010 = vpack.c.bf16 %v2762, %v2754
        %v3011 = vpack.c.bf16 %v2763, %v2755
        %v3012 = vpack.c.bf16 %v2764, %v2756
        %v3013 = vpack.c.bf16 %v2765, %v2757
        %v3014 = vpack.c.bf16 %v2774, %v2766
        %v3015 = vpack.c.bf16 %v2775, %v2767
        %v3016 = vpack.c.bf16 %v2776, %v2768
        %v3017 = vpack.c.bf16 %v2777, %v2769
        %v3018 = vpack.c.bf16 %v2778, %v2770
        %v3019 = vpack.c.bf16 %v2779, %v2771
        %v3020 = vpack.c.bf16 %v2780, %v2772
        %v3021 = vpack.c.bf16 %v2781, %v2773
        %v3022 = vpack.c.bf16 %v2790, %v2782
        %v3023 = vpack.c.bf16 %v2791, %v2783
        %v3024 = vpack.c.bf16 %v2792, %v2784
        %v3025 = vpack.c.bf16 %v2793, %v2785
        %v3026 = vpack.c.bf16 %v2794, %v2786
        %v3027 = vpack.c.bf16 %v2795, %v2787
        %v3028 = vpack.c.bf16 %v2796, %v2788
        %v3029 = vpack.c.bf16 %v2797, %v2789
        %v3030 = vpack.c.bf16 %v2806, %v2798
        %v3031 = vpack.c.bf16 %v2807, %v2799
        %v3032 = vpack.c.bf16 %v2808, %v2800
        %v3033 = vpack.c.bf16 %v2809, %v2801
        %v3034 = vpack.c.bf16 %v2810, %v2802
        %v3035 = vpack.c.bf16 %v2811, %v2803
        %v3036 = vpack.c.bf16 %v2812, %v2804
        %v3037 = vpack.c.bf16 %v2813, %v2805
        %v3038 = vpack.c.bf16 %v2822, %v2814
        %v3039 = vpack.c.bf16 %v2823, %v2815
        %v3040 = vpack.c.bf16 %v2824, %v2816
        %v3041 = vpack.c.bf16 %v2825, %v2817
        %v3042 = vpack.c.bf16 %v2826, %v2818
        %v3043 = vpack.c.bf16 %v2827, %v2819
        %v3044 = vpack.c.bf16 %v2828, %v2820
        %v3045 = vpack.c.bf16 %v2829, %v2821
        %v3046 = vpack.c.bf16 %v2838, %v2830
        %v3047 = vpack.c.bf16 %v2839, %v2831
        %v3048 = vpack.c.bf16 %v2840, %v2832
        %v3049 = vpack.c.bf16 %v2841, %v2833
        %v3050 = vpack.c.bf16 %v2842, %v2834
        %v3051 = vpack.c.bf16 %v2843, %v2835
        %v3052 = vpack.c.bf16 %v2844, %v2836
        %v3053 = vpack.c.bf16 %v2845, %v2837
        %v3054 = vpack.c.bf16 %v2854, %v2846
        %v3055 = vpack.c.bf16 %v2855, %v2847
        %v3056 = vpack.c.bf16 %v2856, %v2848
        %v3057 = vpack.c.bf16 %v2857, %v2849
        %v3058 = vpack.c.bf16 %v2858, %v2850
        %v3059 = vpack.c.bf16 %v2859, %v2851
        %v3060 = vpack.c.bf16 %v2860, %v2852
        %v3061 = vpack.c.bf16 %v2861, %v2853
        %v3062 = vpack.c.bf16 %v2870, %v2862
        %v3063 = vpack.c.bf16 %v2871, %v2863
        %v3064 = vpack.c.bf16 %v2872, %v2864
        %v3065 = vpack.c.bf16 %v2873, %v2865
        %v3066 = vpack.c.bf16 %v2874, %v2866
        %v3067 = vpack.c.bf16 %v2875, %v2867
        %v3068 = vpack.c.bf16 %v2876, %v2868
        %v3069 = vpack.c.bf16 %v2877, %v2869
        %v3070 = vpack.c.bf16 %v2886, %v2878
        %v3071 = vpack.c.bf16 %v2887, %v2879
        %v3072 = vpack.c.bf16 %v2888, %v2880
        %v3073 = vpack.c.bf16 %v2889, %v2881
        %v3074 = vpack.c.bf16 %v2890, %v2882
        %v3075 = vpack.c.bf16 %v2891, %v2883
        %v3076 = vpack.c.bf16 %v2892, %v2884
        %v3077 = vpack.c.bf16 %v2893, %v2885
        %v3078 = vpack.c.bf16 %v2902, %v2894
        %v3079 = vpack.c.bf16 %v2903, %v2895
        %v3080 = vpack.c.bf16 %v2904, %v2896
        %v3081 = vpack.c.bf16 %v2905, %v2897
        %v3082 = vpack.c.bf16 %v2906, %v2898
        %v3083 = vpack.c.bf16 %v2907, %v2899
        %v3084 = vpack.c.bf16 %v2908, %v2900
        %v3085 = vpack.c.bf16 %v2909, %v2901
        %v3086 = vpack.c.bf16 %v2918, %v2910
        %v3087 = vpack.c.bf16 %v2919, %v2911
        %v3088 = vpack.c.bf16 %v2920, %v2912
        %v3089 = vpack.c.bf16 %v2921, %v2913
        %v3090 = vpack.c.bf16 %v2922, %v2914
        %v3091 = vpack.c.bf16 %v2923, %v2915
        %v3092 = vpack.c.bf16 %v2924, %v2916
        %v3093 = vpack.c.bf16 %v2925, %v2917
        %v3094 = vpack.c.bf16 %v2934, %v2926
        %v3095 = vpack.c.bf16 %v2935, %v2927
        %v3096 = vpack.c.bf16 %v2936, %v2928
        %v3097 = vpack.c.bf16 %v2937, %v2929
        %v3098 = vpack.c.bf16 %v2938, %v2930
        %v3099 = vpack.c.bf16 %v2939, %v2931
        %v3100 = vpack.c.bf16 %v2940, %v2932
        %v3101 = vpack.c.bf16 %v2941, %v2933
        %v3102 = vpack.c.bf16 %v2950, %v2942
        %v3103 = vpack.c.bf16 %v2951, %v2943
        %v3104 = vpack.c.bf16 %v2952, %v2944
        %v3105 = vpack.c.bf16 %v2953, %v2945
        %v3106 = vpack.c.bf16 %v2954, %v2946
        %v3107 = vpack.c.bf16 %v2955, %v2947
        %v3108 = vpack.c.bf16 %v2956, %v2948
        %v3109 = vpack.c.bf16 %v2957, %v2949
        %v3110 = vpack.c.bf16 %v2966, %v2958
        %v3111 = vpack.c.bf16 %v2967, %v2959
        %v3112 = vpack.c.bf16 %v2968, %v2960
        %v3113 = vpack.c.bf16 %v2969, %v2961
        %v3114 = vpack.c.bf16 %v2970, %v2962
        %v3115 = vpack.c.bf16 %v2971, %v2963
        %v3116 = vpack.c.bf16 %v2972, %v2964
        %v3117 = vpack.c.bf16 %v2973, %v2965
        %v3118 = vpack.c.bf16 %v2982, %v2974
        %v3119 = vpack.c.bf16 %v2983, %v2975
        %v3120 = vpack.c.bf16 %v2984, %v2976
        %v3121 = vpack.c.bf16 %v2985, %v2977
        %v3122 = vpack.c.bf16 %v2986, %v2978
        %v3123 = vpack.c.bf16 %v2987, %v2979
        %v3124 = vpack.c.bf16 %v2988, %v2980
        %v3125 = vpack.c.bf16 %v2989, %v2981
        %v3126 = vpack.c.bf16 %v2998, %v2990
        %v3127 = vpack.c.bf16 %v2999, %v2991
        %v3128 = vpack.c.bf16 %v3000, %v2992
        %v3129 = vpack.c.bf16 %v3001, %v2993
        %v3130 = vpack.c.bf16 %v3002, %v2994
        %v3131 = vpack.c.bf16 %v3003, %v2995
        %v3132 = vpack.c.bf16 %v3004, %v2996
        %v3133 = vpack.c.bf16 %v3005, %v2997
        %3134 = vmatpush.bf16.msra.mxu0 %v3062
        %3135 = vmatpush.bf16.msra.mxu0 %v3054
        %3136 = vmatpush.bf16.msra.mxu0 %v3046
        %3137 = vmatpush.bf16.msra.mxu0 %v3038
        %3138 = vmatpush.bf16.msra.mxu0 %v3030
        %3139 = vmatpush.bf16.msra.mxu0 %v3022
        %3140 = vmatpush.bf16.msra.mxu0 %v3014
        %3141 = vmatpush.bf16.msra.mxu0 %v3006
        %3142 = vmatmul.bf16.gmra.mxu0 %v2428
        %v3143 = vpop.f32.mrf.mxu0
        %v3144 = vadd.f32 0.0, %v3143
        %v3145 = vpop.f32.mrf.mxu0
        %v3146 = vadd.f32 0.0, %v3145
        %3147 = vdwg.mxu0
        %3148 = vmatpush.bf16.msra.mxu0 %v3126
        %3149 = vmatpush.bf16.msra.mxu0 %v3118
        %3150 = vmatpush.bf16.msra.mxu0 %v3110
        %3151 = vmatpush.bf16.msra.mxu0 %v3102
        %3152 = vmatpush.bf16.msra.mxu0 %v3094
        %3153 = vmatpush.bf16.msra.mxu0 %v3086
        %3154 = vmatpush.bf16.msra.mxu0 %v3078
        %3155 = vmatpush.bf16.msra.mxu0 %v3070
        %3156 = vmatmul.bf16.gmra.mxu0 %v2429
        %v3157 = vpop.f32.mrf.mxu0
        %v3158 = vadd.f32 %v3144, %v3157
        %v3159 = vpop.f32.mrf.mxu0
        %v3160 = vadd.f32 %v3146, %v3159
        %3161 = vdwg.mxu0
        %3162 = vmatpush.bf16.msra.mxu0 %v3063
        %3163 = vmatpush.bf16.msra.mxu0 %v3055
        %3164 = vmatpush.bf16.msra.mxu0 %v3047
        %3165 = vmatpush.bf16.msra.mxu0 %v3039
        %3166 = vmatpush.bf16.msra.mxu0 %v3031
        %3167 = vmatpush.bf16.msra.mxu0 %v3023
        %3168 = vmatpush.bf16.msra.mxu0 %v3015
        %3169 = vmatpush.bf16.msra.mxu0 %v3007
        %3170 = vmatmul.bf16.gmra.mxu0 %v2428
        %v3171 = vpop.f32.mrf.mxu0
        %v3172 = vadd.f32 0.0, %v3171
        %v3173 = vpop.f32.mrf.mxu0
        %v3174 = vadd.f32 0.0, %v3173
        %3175 = vdwg.mxu0
        %3176 = vmatpush.bf16.msra.mxu0 %v3127
        %3177 = vmatpush.bf16.msra.mxu0 %v3119
        %3178 = vmatpush.bf16.msra.mxu0 %v3111
        %3179 = vmatpush.bf16.msra.mxu0 %v3103
        %3180 = vmatpush.bf16.msra.mxu0 %v3095
        %3181 = vmatpush.bf16.msra.mxu0 %v3087
        %3182 = vmatpush.bf16.msra.mxu0 %v3079
        %3183 = vmatpush.bf16.msra.mxu0 %v3071
        %3184 = vmatmul.bf16.gmra.mxu0 %v2429
        %v3185 = vpop.f32.mrf.mxu0
        %v3186 = vadd.f32 %v3172, %v3185
        %v3187 = vpop.f32.mrf.mxu0
        %v3188 = vadd.f32 %v3174, %v3187
        %3189 = vdwg.mxu0
        %3190 = vmatpush.bf16.msra.mxu0 %v3064
        %3191 = vmatpush.bf16.msra.mxu0 %v3056
        %3192 = vmatpush.bf16.msra.mxu0 %v3048
        %3193 = vmatpush.bf16.msra.mxu0 %v3040
        %3194 = vmatpush.bf16.msra.mxu0 %v3032
        %3195 = vmatpush.bf16.msra.mxu0 %v3024
        %3196 = vmatpush.bf16.msra.mxu0 %v3016
        %3197 = vmatpush.bf16.msra.mxu0 %v3008
        %3198 = vmatmul.bf16.gmra.mxu0 %v2428
        %v3199 = vpop.f32.mrf.mxu0
        %v3200 = vadd.f32 0.0, %v3199
        %v3201 = vpop.f32.mrf.mxu0
        %v3202 = vadd.f32 0.0, %v3201
        %3203 = vdwg.mxu0
        %3204 = vmatpush.bf16.msra.mxu0 %v3128
        %3205 = vmatpush.bf16.msra.mxu0 %v3120
        %3206 = vmatpush.bf16.msra.mxu0 %v3112
        %3207 = vmatpush.bf16.msra.mxu0 %v3104
        %3208 = vmatpush.bf16.msra.mxu0 %v3096
        %3209 = vmatpush.bf16.msra.mxu0 %v3088
        %3210 = vmatpush.bf16.msra.mxu0 %v3080
        %3211 = vmatpush.bf16.msra.mxu0 %v3072
        %3212 = vmatmul.bf16.gmra.mxu0 %v2429
        %v3213 = vpop.f32.mrf.mxu0
        %v3214 = vadd.f32 %v3200, %v3213
        %v3215 = vpop.f32.mrf.mxu0
        %v3216 = vadd.f32 %v3202, %v3215
        %3217 = vdwg.mxu0
        %3218 = vmatpush.bf16.msra.mxu0 %v3065
        %3219 = vmatpush.bf16.msra.mxu0 %v3057
        %3220 = vmatpush.bf16.msra.mxu0 %v3049
        %3221 = vmatpush.bf16.msra.mxu0 %v3041
        %3222 = vmatpush.bf16.msra.mxu0 %v3033
        %3223 = vmatpush.bf16.msra.mxu0 %v3025
        %3224 = vmatpush.bf16.msra.mxu0 %v3017
        %3225 = vmatpush.bf16.msra.mxu0 %v3009
        %3226 = vmatmul.bf16.gmra.mxu0 %v2428
        %v3227 = vpop.f32.mrf.mxu0
        %v3228 = vadd.f32 0.0, %v3227
        %v3229 = vpop.f32.mrf.mxu0
        %v3230 = vadd.f32 0.0, %v3229
        %3231 = vdwg.mxu0
        %3232 = vmatpush.bf16.msra.mxu0 %v3129
        %3233 = vmatpush.bf16.msra.mxu0 %v3121
        %3234 = vmatpush.bf16.msra.mxu0 %v3113
        %3235 = vmatpush.bf16.msra.mxu0 %v3105
        %3236 = vmatpush.bf16.msra.mxu0 %v3097
        %3237 = vmatpush.bf16.msra.mxu0 %v3089
        %3238 = vmatpush.bf16.msra.mxu0 %v3081
        %3239 = vmatpush.bf16.msra.mxu0 %v3073
        %3240 = vmatmul.bf16.gmra.mxu0 %v2429
        %v3241 = vpop.f32.mrf.mxu0
        %v3242 = vadd.f32 %v3228, %v3241
        %v3243 = vpop.f32.mrf.mxu0
        %v3244 = vadd.f32 %v3230, %v3243
        %3245 = vdwg.mxu0
        %3246 = vmatpush.bf16.msra.mxu0 %v3066
        %3247 = vmatpush.bf16.msra.mxu0 %v3058
        %3248 = vmatpush.bf16.msra.mxu0 %v3050
        %3249 = vmatpush.bf16.msra.mxu0 %v3042
        %3250 = vmatpush.bf16.msra.mxu0 %v3034
        %3251 = vmatpush.bf16.msra.mxu0 %v3026
        %3252 = vmatpush.bf16.msra.mxu0 %v3018
        %3253 = vmatpush.bf16.msra.mxu0 %v3010
        %3254 = vmatmul.bf16.gmra.mxu0 %v2428
        %v3255 = vpop.f32.mrf.mxu0
        %v3256 = vadd.f32 0.0, %v3255
        %v3257 = vpop.f32.mrf.mxu0
        %v3258 = vadd.f32 0.0, %v3257
        %3259 = vdwg.mxu0
        %3260 = vmatpush.bf16.msra.mxu0 %v3130
        %3261 = vmatpush.bf16.msra.mxu0 %v3122
        %3262 = vmatpush.bf16.msra.mxu0 %v3114
        %3263 = vmatpush.bf16.msra.mxu0 %v3106
        %3264 = vmatpush.bf16.msra.mxu0 %v3098
        %3265 = vmatpush.bf16.msra.mxu0 %v3090
        %3266 = vmatpush.bf16.msra.mxu0 %v3082
        %3267 = vmatpush.bf16.msra.mxu0 %v3074
        %3268 = vmatmul.bf16.gmra.mxu0 %v2429
        %v3269 = vpop.f32.mrf.mxu0
        %v3270 = vadd.f32 %v3256, %v3269
        %v3271 = vpop.f32.mrf.mxu0
        %v3272 = vadd.f32 %v3258, %v3271
        %3273 = vdwg.mxu0
        %3274 = vmatpush.bf16.msra.mxu0 %v3067
        %3275 = vmatpush.bf16.msra.mxu0 %v3059
        %3276 = vmatpush.bf16.msra.mxu0 %v3051
        %3277 = vmatpush.bf16.msra.mxu0 %v3043
        %3278 = vmatpush.bf16.msra.mxu0 %v3035
        %3279 = vmatpush.bf16.msra.mxu0 %v3027
        %3280 = vmatpush.bf16.msra.mxu0 %v3019
        %3281 = vmatpush.bf16.msra.mxu0 %v3011
        %3282 = vmatmul.bf16.gmra.mxu0 %v2428
        %v3283 = vpop.f32.mrf.mxu0
        %v3284 = vadd.f32 0.0, %v3283
        %v3285 = vpop.f32.mrf.mxu0
        %v3286 = vadd.f32 0.0, %v3285
        %3287 = vdwg.mxu0
        %3288 = vmatpush.bf16.msra.mxu0 %v3131
        %3289 = vmatpush.bf16.msra.mxu0 %v3123
        %3290 = vmatpush.bf16.msra.mxu0 %v3115
        %3291 = vmatpush.bf16.msra.mxu0 %v3107
        %3292 = vmatpush.bf16.msra.mxu0 %v3099
        %3293 = vmatpush.bf16.msra.mxu0 %v3091
        %3294 = vmatpush.bf16.msra.mxu0 %v3083
        %3295 = vmatpush.bf16.msra.mxu0 %v3075
        %3296 = vmatmul.bf16.gmra.mxu0 %v2429
        %v3297 = vpop.f32.mrf.mxu0
        %v3298 = vadd.f32 %v3284, %v3297
        %v3299 = vpop.f32.mrf.mxu0
        %v3300 = vadd.f32 %v3286, %v3299
        %3301 = vdwg.mxu0
        %3302 = vmatpush.bf16.msra.mxu0 %v3068
        %3303 = vmatpush.bf16.msra.mxu0 %v3060
        %3304 = vmatpush.bf16.msra.mxu0 %v3052
        %3305 = vmatpush.bf16.msra.mxu0 %v3044
        %3306 = vmatpush.bf16.msra.mxu0 %v3036
        %3307 = vmatpush.bf16.msra.mxu0 %v3028
        %3308 = vmatpush.bf16.msra.mxu0 %v3020
        %3309 = vmatpush.bf16.msra.mxu0 %v3012
        %3310 = vmatmul.bf16.gmra.mxu0 %v2428
        %v3311 = vpop.f32.mrf.mxu0
        %v3312 = vadd.f32 0.0, %v3311
        %v3313 = vpop.f32.mrf.mxu0
        %v3314 = vadd.f32 0.0, %v3313
        %3315 = vdwg.mxu0
        %3316 = vmatpush.bf16.msra.mxu0 %v3132
        %3317 = vmatpush.bf16.msra.mxu0 %v3124
        %3318 = vmatpush.bf16.msra.mxu0 %v3116
        %3319 = vmatpush.bf16.msra.mxu0 %v3108
        %3320 = vmatpush.bf16.msra.mxu0 %v3100
        %3321 = vmatpush.bf16.msra.mxu0 %v3092
        %3322 = vmatpush.bf16.msra.mxu0 %v3084
        %3323 = vmatpush.bf16.msra.mxu0 %v3076
        %3324 = vmatmul.bf16.gmra.mxu0 %v2429
        %v3325 = vpop.f32.mrf.mxu0
        %v3326 = vadd.f32 %v3312, %v3325
        %v3327 = vpop.f32.mrf.mxu0
        %v3328 = vadd.f32 %v3314, %v3327
        %3329 = vdwg.mxu0
        %3330 = vmatpush.bf16.msra.mxu0 %v3069
        %3331 = vmatpush.bf16.msra.mxu0 %v3061
        %3332 = vmatpush.bf16.msra.mxu0 %v3053
        %3333 = vmatpush.bf16.msra.mxu0 %v3045
        %3334 = vmatpush.bf16.msra.mxu0 %v3037
        %3335 = vmatpush.bf16.msra.mxu0 %v3029
        %3336 = vmatpush.bf16.msra.mxu0 %v3021
        %3337 = vmatpush.bf16.msra.mxu0 %v3013
        %3338 = vmatmul.bf16.gmra.mxu0 %v2428
        %v3339 = vpop.f32.mrf.mxu0
        %v3340 = vadd.f32 0.0, %v3339
        %v3341 = vpop.f32.mrf.mxu0
        %v3342 = vadd.f32 0.0, %v3341
        %3343 = vdwg.mxu0
        %3344 = vmatpush.bf16.msra.mxu0 %v3133
        %3345 = vmatpush.bf16.msra.mxu0 %v3125
        %3346 = vmatpush.bf16.msra.mxu0 %v3117
        %3347 = vmatpush.bf16.msra.mxu0 %v3109
        %3348 = vmatpush.bf16.msra.mxu0 %v3101
        %3349 = vmatpush.bf16.msra.mxu0 %v3093
        %3350 = vmatpush.bf16.msra.mxu0 %v3085
        %3351 = vmatpush.bf16.msra.mxu0 %v3077
        %3352 = vmatmul.bf16.gmra.mxu0 %v2429
        %v3353 = vpop.f32.mrf.mxu0
        %v3354 = vadd.f32 %v3340, %v3353
        %v3355 = vpop.f32.mrf.mxu0
        %v3356 = vadd.f32 %v3342, %v3355
        %3357 = vdwg.mxu0
        %v3358 = vld [vmem:[%s809] sm:$0xff]
        %v3360 = vperm.slane %v3358, 0
        %v3361 = vperm.slane %v3358, 1
        %v3362 = vperm.slane %v3358, 2
        %v3363 = vperm.slane %v3358, 3
        %v3364 = vperm.slane %v3358, 4
        %v3365 = vperm.slane %v3358, 5
        %v3366 = vperm.slane %v3358, 6
        %v3367 = vperm.slane %v3358, 7
        %v3376 = vmul.f32 %v3158, %v3360
        %v3377 = vmul.f32 %v3186, %v3361
        %v3378 = vmul.f32 %v3214, %v3362
        %v3379 = vmul.f32 %v3242, %v3363
        %v3380 = vmul.f32 %v3270, %v3364
        %v3381 = vmul.f32 %v3298, %v3365
        %v3382 = vmul.f32 %v3326, %v3366
        %v3383 = vmul.f32 %v3354, %v3367
        %v3384 = vmul.f32 %v3160, %v3360
        %v3385 = vmul.f32 %v3188, %v3361
        %v3386 = vmul.f32 %v3216, %v3362
        %v3387 = vmul.f32 %v3244, %v3363
        %v3388 = vmul.f32 %v3272, %v3364
        %v3389 = vmul.f32 %v3300, %v3365
        %v3390 = vmul.f32 %v3328, %v3366
        %v3391 = vmul.f32 %v3356, %v3367
        %v3392 = vxor.u32 %v3376, 2147483648
        %v3393 = vxor.u32 %v3377, 2147483648
        %v3394 = vxor.u32 %v3378, 2147483648
        %v3395 = vxor.u32 %v3379, 2147483648
        %v3396 = vxor.u32 %v3384, 2147483648
        %v3397 = vxor.u32 %v3385, 2147483648
        %v3398 = vxor.u32 %v3386, 2147483648
        %v3399 = vxor.u32 %v3387, 2147483648
        %v3400 = vmul.f32 %v3392, 1.442695
        %v3401 = vpow.pop %v3400
        %v3402 = vmul.f32 %v3393, 1.442695
        %v3403 = vpow.pop %v3402
        %v3404 = vmul.f32 %v3394, 1.442695
        %v3405 = vpow.pop %v3404
        %v3406 = vmul.f32 %v3395, 1.442695
        %v3407 = vpow.pop %v3406
        %v3408 = vmul.f32 %v3396, 1.442695
        %v3409 = vpow.pop %v3408
        %v3410 = vmul.f32 %v3397, 1.442695
        %v3411 = vpow.pop %v3410
        %v3412 = vmul.f32 %v3398, 1.442695
        %v3413 = vpow.pop %v3412
        %v3414 = vmul.f32 %v3399, 1.442695
        %v3415 = vpow.pop %v3414
        %v3416 = vadd.f32 %v3401, 1.0
        %v3417 = vadd.f32 %v3403, 1.0
        %v3418 = vadd.f32 %v3405, 1.0
        %v3419 = vadd.f32 %v3407, 1.0
        %v3420 = vadd.f32 %v3409, 1.0
        %v3421 = vadd.f32 %v3411, 1.0
        %v3422 = vadd.f32 %v3413, 1.0
        %v3423 = vadd.f32 %v3415, 1.0
        %v3424 = vrcp.pop %v3416
        %v3425 = vmul.f32 %v3416, %v3424
        %v3426 = vsub.f32 1.0, %v3425
        %v3427 = vmul.f32 %v3424, %v3426
        %v3428 = vadd.f32 %v3424, %v3427
        %vm3429 = vweird.f32 %v3416
        %vm3430 = vweird.f32 %v3424
        %vm3431 = vmor %vm3429, %vm3430
        %v3432 = vsel %vm3431, %v3424, %v3428
        %v3433 = vand.u32 2147483647, %v3416
        %vm3434 = vcmp.eq.f32.partialorder %v3433, 8.507059e+37
        %v3435 = vand.u32 %v3416, 2147483648
        %v3436 = vor.u32 1.1754944e-38, %v3435
        %v3437 = vsel %vm3434, %v3436, %v3432
        %v3438 = vmul.f32 1.0, %v3437
        %v3439 = vrcp.pop %v3417
        %v3440 = vmul.f32 %v3417, %v3439
        %v3441 = vsub.f32 1.0, %v3440
        %v3442 = vmul.f32 %v3439, %v3441
        %v3443 = vadd.f32 %v3439, %v3442
        %vm3444 = vweird.f32 %v3417
        %vm3445 = vweird.f32 %v3439
        %vm3446 = vmor %vm3444, %vm3445
        %v3447 = vsel %vm3446, %v3439, %v3443
        %v3448 = vand.u32 2147483647, %v3417
        %vm3449 = vcmp.eq.f32.partialorder %v3448, 8.507059e+37
        %v3450 = vand.u32 %v3417, 2147483648
        %v3451 = vor.u32 1.1754944e-38, %v3450
        %v3452 = vsel %vm3449, %v3451, %v3447
        %v3453 = vmul.f32 1.0, %v3452
        %v3454 = vrcp.pop %v3418
        %v3455 = vmul.f32 %v3418, %v3454
        %v3456 = vsub.f32 1.0, %v3455
        %v3457 = vmul.f32 %v3454, %v3456
        %v3458 = vadd.f32 %v3454, %v3457
        %vm3459 = vweird.f32 %v3418
        %vm3460 = vweird.f32 %v3454
        %vm3461 = vmor %vm3459, %vm3460
        %v3462 = vsel %vm3461, %v3454, %v3458
        %v3463 = vand.u32 2147483647, %v3418
        %vm3464 = vcmp.eq.f32.partialorder %v3463, 8.507059e+37
        %v3465 = vand.u32 %v3418, 2147483648
        %v3466 = vor.u32 1.1754944e-38, %v3465
        %v3467 = vsel %vm3464, %v3466, %v3462
        %v3468 = vmul.f32 1.0, %v3467
        %v3469 = vrcp.pop %v3419
        %v3470 = vmul.f32 %v3419, %v3469
        %v3471 = vsub.f32 1.0, %v3470
        %v3472 = vmul.f32 %v3469, %v3471
        %v3473 = vadd.f32 %v3469, %v3472
        %vm3474 = vweird.f32 %v3419
        %vm3475 = vweird.f32 %v3469
        %vm3476 = vmor %vm3474, %vm3475
        %v3477 = vsel %vm3476, %v3469, %v3473
        %v3478 = vand.u32 2147483647, %v3419
        %vm3479 = vcmp.eq.f32.partialorder %v3478, 8.507059e+37
        %v3480 = vand.u32 %v3419, 2147483648
        %v3481 = vor.u32 1.1754944e-38, %v3480
        %v3482 = vsel %vm3479, %v3481, %v3477
        %v3483 = vmul.f32 1.0, %v3482
        %v3484 = vrcp.pop %v3420
        %v3485 = vmul.f32 %v3420, %v3484
        %v3486 = vsub.f32 1.0, %v3485
        %v3487 = vmul.f32 %v3484, %v3486
        %v3488 = vadd.f32 %v3484, %v3487
        %vm3489 = vweird.f32 %v3420
        %vm3490 = vweird.f32 %v3484
        %vm3491 = vmor %vm3489, %vm3490
        %v3492 = vsel %vm3491, %v3484, %v3488
        %v3493 = vand.u32 2147483647, %v3420
        %vm3494 = vcmp.eq.f32.partialorder %v3493, 8.507059e+37
        %v3495 = vand.u32 %v3420, 2147483648
        %v3496 = vor.u32 1.1754944e-38, %v3495
        %v3497 = vsel %vm3494, %v3496, %v3492
        %v3498 = vmul.f32 1.0, %v3497
        %v3499 = vrcp.pop %v3421
        %v3500 = vmul.f32 %v3421, %v3499
        %v3501 = vsub.f32 1.0, %v3500
        %v3502 = vmul.f32 %v3499, %v3501
        %v3503 = vadd.f32 %v3499, %v3502
        %vm3504 = vweird.f32 %v3421
        %vm3505 = vweird.f32 %v3499
        %vm3506 = vmor %vm3504, %vm3505
        %v3507 = vsel %vm3506, %v3499, %v3503
        %v3508 = vand.u32 2147483647, %v3421
        %vm3509 = vcmp.eq.f32.partialorder %v3508, 8.507059e+37
        %v3510 = vand.u32 %v3421, 2147483648
        %v3511 = vor.u32 1.1754944e-38, %v3510
        %v3512 = vsel %vm3509, %v3511, %v3507
        %v3513 = vmul.f32 1.0, %v3512
        %v3514 = vrcp.pop %v3422
        %v3515 = vmul.f32 %v3422, %v3514
        %v3516 = vsub.f32 1.0, %v3515
        %v3517 = vmul.f32 %v3514, %v3516
        %v3518 = vadd.f32 %v3514, %v3517
        %vm3519 = vweird.f32 %v3422
        %vm3520 = vweird.f32 %v3514
        %vm3521 = vmor %vm3519, %vm3520
        %v3522 = vsel %vm3521, %v3514, %v3518
        %v3523 = vand.u32 2147483647, %v3422
        %vm3524 = vcmp.eq.f32.partialorder %v3523, 8.507059e+37
        %v3525 = vand.u32 %v3422, 2147483648
        %v3526 = vor.u32 1.1754944e-38, %v3525
        %v3527 = vsel %vm3524, %v3526, %v3522
        %v3528 = vmul.f32 1.0, %v3527
        %v3529 = vrcp.pop %v3423
        %v3530 = vmul.f32 %v3423, %v3529
        %v3531 = vsub.f32 1.0, %v3530
        %v3532 = vmul.f32 %v3529, %v3531
        %v3533 = vadd.f32 %v3529, %v3532
        %vm3534 = vweird.f32 %v3423
        %vm3535 = vweird.f32 %v3529
        %vm3536 = vmor %vm3534, %vm3535
        %v3537 = vsel %vm3536, %v3529, %v3533
        %v3538 = vand.u32 2147483647, %v3423
        %vm3539 = vcmp.eq.f32.partialorder %v3538, 8.507059e+37
        %v3540 = vand.u32 %v3423, 2147483648
        %v3541 = vor.u32 1.1754944e-38, %v3540
        %v3542 = vsel %vm3539, %v3541, %v3537
        %v3543 = vmul.f32 1.0, %v3542
        %v3544 = vmul.f32 %v3376, %v3438
        %v3545 = vmul.f32 %v3377, %v3453
        %v3546 = vmul.f32 %v3378, %v3468
        %v3547 = vmul.f32 %v3379, %v3483
        %v3548 = vmul.f32 %v3384, %v3498
        %v3549 = vmul.f32 %v3385, %v3513
        %v3550 = vmul.f32 %v3386, %v3528
        %v3551 = vmul.f32 %v3387, %v3543
        %v3552 = vmul.f32 %v3544, %v3380
        %v3553 = vmul.f32 %v3545, %v3381
        %v3554 = vmul.f32 %v3546, %v3382
        %v3555 = vmul.f32 %v3547, %v3383
        %v3556 = vmul.f32 %v3548, %v3388
        %v3557 = vmul.f32 %v3549, %v3389
        %v3558 = vmul.f32 %v3550, %v3390
        %v3559 = vmul.f32 %v3551, %v3391
        %v3560 = vpack.c.bf16 %v3556, %v3552
        %v3561 = vpack.c.bf16 %v3557, %v3553
        %v3562 = vpack.c.bf16 %v3558, %v3554
        %v3563 = vpack.c.bf16 %v3559, %v3555
        %v3564 = vld [vmem:[%s700] sm:$0xff]
        %v3565 = vld [vmem:[%s700 + $0x8] sm:$0xff]
        %v3566 = vld [vmem:[%s700 + $0x10] sm:$0xff]
        %v3567 = vld [vmem:[%s700 + $0x18] sm:$0xff]
        %v3568 = vld [vmem:[%s700 + $0x20] sm:$0xff]
        %v3569 = vld [vmem:[%s700 + $0x28] sm:$0xff]
        %v3570 = vld [vmem:[%s700 + $0x30] sm:$0xff]
        %v3571 = vld [vmem:[%s700 + $0x38] sm:$0xff]
        %v3572 = vld [vmem:[%s700 + $0x40] sm:$0xff]
        %v3573 = vld [vmem:[%s700 + $0x48] sm:$0xff]
        %v3574 = vld [vmem:[%s700 + $0x50] sm:$0xff]
        %v3575 = vld [vmem:[%s700 + $0x58] sm:$0xff]
        %v3576 = vld [vmem:[%s700 + $0x60] sm:$0xff]
        %v3577 = vld [vmem:[%s700 + $0x68] sm:$0xff]
        %v3578 = vld [vmem:[%s700 + $0x70] sm:$0xff]
        %v3579 = vld [vmem:[%s700 + $0x78] sm:$0xff]
        %v3580 = vld [vmem:[%s700 + $0x80] sm:$0xff]
        %v3581 = vld [vmem:[%s700 + $0x88] sm:$0xff]
        %v3582 = vld [vmem:[%s700 + $0x90] sm:$0xff]
        %v3583 = vld [vmem:[%s700 + $0x98] sm:$0xff]
        %v3584 = vld [vmem:[%s700 + $0xa0] sm:$0xff]
        %v3585 = vld [vmem:[%s700 + $0xa8] sm:$0xff]
        %v3586 = vld [vmem:[%s700 + $0xb0] sm:$0xff]
        %v3587 = vld [vmem:[%s700 + $0xb8] sm:$0xff]
        %v3588 = vld [vmem:[%s700 + $0xc0] sm:$0xff]
        %v3589 = vld [vmem:[%s700 + $0xc8] sm:$0xff]
        %v3590 = vld [vmem:[%s700 + $0xd0] sm:$0xff]
        %v3591 = vld [vmem:[%s700 + $0xd8] sm:$0xff]
        %v3592 = vld [vmem:[%s700 + $0xe0] sm:$0xff]
        %v3593 = vld [vmem:[%s700 + $0xe8] sm:$0xff]
        %v3594 = vld [vmem:[%s700 + $0xf0] sm:$0xff]
        %v3595 = vld [vmem:[%s700 + $0xf8] sm:$0xff]
        %v3596 = vunpack.c.0.s8 %v3564
        %v3597 = vunpack.c.0.s8 %v3565
        %v3598 = vunpack.c.1.s8 %v3564
        %v3599 = vunpack.c.1.s8 %v3565
        %v3600 = vunpack.c.2.s8 %v3564
        %v3601 = vunpack.c.2.s8 %v3565
        %v3602 = vunpack.c.3.s8 %v3564
        %v3603 = vunpack.c.3.s8 %v3565
        %v3604 = vunpack.c.0.s8 %v3566
        %v3605 = vunpack.c.0.s8 %v3567
        %v3606 = vunpack.c.1.s8 %v3566
        %v3607 = vunpack.c.1.s8 %v3567
        %v3608 = vunpack.c.2.s8 %v3566
        %v3609 = vunpack.c.2.s8 %v3567
        %v3610 = vunpack.c.3.s8 %v3566
        %v3611 = vunpack.c.3.s8 %v3567
        %v3612 = vunpack.c.0.s8 %v3568
        %v3613 = vunpack.c.0.s8 %v3569
        %v3614 = vunpack.c.1.s8 %v3568
        %v3615 = vunpack.c.1.s8 %v3569
        %v3616 = vunpack.c.2.s8 %v3568
        %v3617 = vunpack.c.2.s8 %v3569
        %v3618 = vunpack.c.3.s8 %v3568
        %v3619 = vunpack.c.3.s8 %v3569
        %v3620 = vunpack.c.0.s8 %v3570
        %v3621 = vunpack.c.0.s8 %v3571
        %v3622 = vunpack.c.1.s8 %v3570
        %v3623 = vunpack.c.1.s8 %v3571
        %v3624 = vunpack.c.2.s8 %v3570
        %v3625 = vunpack.c.2.s8 %v3571
        %v3626 = vunpack.c.3.s8 %v3570
        %v3627 = vunpack.c.3.s8 %v3571
        %v3628 = vunpack.c.0.s8 %v3572
        %v3629 = vunpack.c.0.s8 %v3573
        %v3630 = vunpack.c.1.s8 %v3572
        %v3631 = vunpack.c.1.s8 %v3573
        %v3632 = vunpack.c.2.s8 %v3572
        %v3633 = vunpack.c.2.s8 %v3573
        %v3634 = vunpack.c.3.s8 %v3572
        %v3635 = vunpack.c.3.s8 %v3573
        %v3636 = vunpack.c.0.s8 %v3574
        %v3637 = vunpack.c.0.s8 %v3575
        %v3638 = vunpack.c.1.s8 %v3574
        %v3639 = vunpack.c.1.s8 %v3575
        %v3640 = vunpack.c.2.s8 %v3574
        %v3641 = vunpack.c.2.s8 %v3575
        %v3642 = vunpack.c.3.s8 %v3574
        %v3643 = vunpack.c.3.s8 %v3575
        %v3644 = vunpack.c.0.s8 %v3576
        %v3645 = vunpack.c.0.s8 %v3577
        %v3646 = vunpack.c.1.s8 %v3576
        %v3647 = vunpack.c.1.s8 %v3577
        %v3648 = vunpack.c.2.s8 %v3576
        %v3649 = vunpack.c.2.s8 %v3577
        %v3650 = vunpack.c.3.s8 %v3576
        %v3651 = vunpack.c.3.s8 %v3577
        %v3652 = vunpack.c.0.s8 %v3578
        %v3653 = vunpack.c.0.s8 %v3579
        %v3654 = vunpack.c.1.s8 %v3578
        %v3655 = vunpack.c.1.s8 %v3579
        %v3656 = vunpack.c.2.s8 %v3578
        %v3657 = vunpack.c.2.s8 %v3579
        %v3658 = vunpack.c.3.s8 %v3578
        %v3659 = vunpack.c.3.s8 %v3579
        %v3660 = vunpack.c.0.s8 %v3580
        %v3661 = vunpack.c.0.s8 %v3581
        %v3662 = vunpack.c.1.s8 %v3580
        %v3663 = vunpack.c.1.s8 %v3581
        %v3664 = vunpack.c.2.s8 %v3580
        %v3665 = vunpack.c.2.s8 %v3581
        %v3666 = vunpack.c.3.s8 %v3580
        %v3667 = vunpack.c.3.s8 %v3581
        %v3668 = vunpack.c.0.s8 %v3582
        %v3669 = vunpack.c.0.s8 %v3583
        %v3670 = vunpack.c.1.s8 %v3582
        %v3671 = vunpack.c.1.s8 %v3583
        %v3672 = vunpack.c.2.s8 %v3582
        %v3673 = vunpack.c.2.s8 %v3583
        %v3674 = vunpack.c.3.s8 %v3582
        %v3675 = vunpack.c.3.s8 %v3583
        %v3676 = vunpack.c.0.s8 %v3584
        %v3677 = vunpack.c.0.s8 %v3585
        %v3678 = vunpack.c.1.s8 %v3584
        %v3679 = vunpack.c.1.s8 %v3585
        %v3680 = vunpack.c.2.s8 %v3584
        %v3681 = vunpack.c.2.s8 %v3585
        %v3682 = vunpack.c.3.s8 %v3584
        %v3683 = vunpack.c.3.s8 %v3585
        %v3684 = vunpack.c.0.s8 %v3586
        %v3685 = vunpack.c.0.s8 %v3587
        %v3686 = vunpack.c.1.s8 %v3586
        %v3687 = vunpack.c.1.s8 %v3587
        %v3688 = vunpack.c.2.s8 %v3586
        %v3689 = vunpack.c.2.s8 %v3587
        %v3690 = vunpack.c.3.s8 %v3586
        %v3691 = vunpack.c.3.s8 %v3587
        %v3692 = vunpack.c.0.s8 %v3588
        %v3693 = vunpack.c.0.s8 %v3589
        %v3694 = vunpack.c.1.s8 %v3588
        %v3695 = vunpack.c.1.s8 %v3589
        %v3696 = vunpack.c.2.s8 %v3588
        %v3697 = vunpack.c.2.s8 %v3589
        %v3698 = vunpack.c.3.s8 %v3588
        %v3699 = vunpack.c.3.s8 %v3589
        %v3700 = vunpack.c.0.s8 %v3590
        %v3701 = vunpack.c.0.s8 %v3591
        %v3702 = vunpack.c.1.s8 %v3590
        %v3703 = vunpack.c.1.s8 %v3591
        %v3704 = vunpack.c.2.s8 %v3590
        %v3705 = vunpack.c.2.s8 %v3591
        %v3706 = vunpack.c.3.s8 %v3590
        %v3707 = vunpack.c.3.s8 %v3591
        %v3708 = vunpack.c.0.s8 %v3592
        %v3709 = vunpack.c.0.s8 %v3593
        %v3710 = vunpack.c.1.s8 %v3592
        %v3711 = vunpack.c.1.s8 %v3593
        %v3712 = vunpack.c.2.s8 %v3592
        %v3713 = vunpack.c.2.s8 %v3593
        %v3714 = vunpack.c.3.s8 %v3592
        %v3715 = vunpack.c.3.s8 %v3593
        %v3716 = vunpack.c.0.s8 %v3594
        %v3717 = vunpack.c.0.s8 %v3595
        %v3718 = vunpack.c.1.s8 %v3594
        %v3719 = vunpack.c.1.s8 %v3595
        %v3720 = vunpack.c.2.s8 %v3594
        %v3721 = vunpack.c.2.s8 %v3595
        %v3722 = vunpack.c.3.s8 %v3594
        %v3723 = vunpack.c.3.s8 %v3595
        %v3724 = vcvt.s32.f32 %v3596
        %v3725 = vcvt.s32.f32 %v3597
        %v3726 = vcvt.s32.f32 %v3598
        %v3727 = vcvt.s32.f32 %v3599
        %v3728 = vcvt.s32.f32 %v3600
        %v3729 = vcvt.s32.f32 %v3601
        %v3730 = vcvt.s32.f32 %v3602
        %v3731 = vcvt.s32.f32 %v3603
        %v3732 = vcvt.s32.f32 %v3604
        %v3733 = vcvt.s32.f32 %v3605
        %v3734 = vcvt.s32.f32 %v3606
        %v3735 = vcvt.s32.f32 %v3607
        %v3736 = vcvt.s32.f32 %v3608
        %v3737 = vcvt.s32.f32 %v3609
        %v3738 = vcvt.s32.f32 %v3610
        %v3739 = vcvt.s32.f32 %v3611
        %v3740 = vcvt.s32.f32 %v3612
        %v3741 = vcvt.s32.f32 %v3613
        %v3742 = vcvt.s32.f32 %v3614
        %v3743 = vcvt.s32.f32 %v3615
        %v3744 = vcvt.s32.f32 %v3616
        %v3745 = vcvt.s32.f32 %v3617
        %v3746 = vcvt.s32.f32 %v3618
        %v3747 = vcvt.s32.f32 %v3619
        %v3748 = vcvt.s32.f32 %v3620
        %v3749 = vcvt.s32.f32 %v3621
        %v3750 = vcvt.s32.f32 %v3622
        %v3751 = vcvt.s32.f32 %v3623
        %v3752 = vcvt.s32.f32 %v3624
        %v3753 = vcvt.s32.f32 %v3625
        %v3754 = vcvt.s32.f32 %v3626
        %v3755 = vcvt.s32.f32 %v3627
        %v3756 = vcvt.s32.f32 %v3628
        %v3757 = vcvt.s32.f32 %v3629
        %v3758 = vcvt.s32.f32 %v3630
        %v3759 = vcvt.s32.f32 %v3631
        %v3760 = vcvt.s32.f32 %v3632
        %v3761 = vcvt.s32.f32 %v3633
        %v3762 = vcvt.s32.f32 %v3634
        %v3763 = vcvt.s32.f32 %v3635
        %v3764 = vcvt.s32.f32 %v3636
        %v3765 = vcvt.s32.f32 %v3637
        %v3766 = vcvt.s32.f32 %v3638
        %v3767 = vcvt.s32.f32 %v3639
        %v3768 = vcvt.s32.f32 %v3640
        %v3769 = vcvt.s32.f32 %v3641
        %v3770 = vcvt.s32.f32 %v3642
        %v3771 = vcvt.s32.f32 %v3643
        %v3772 = vcvt.s32.f32 %v3644
        %v3773 = vcvt.s32.f32 %v3645
        %v3774 = vcvt.s32.f32 %v3646
        %v3775 = vcvt.s32.f32 %v3647
        %v3776 = vcvt.s32.f32 %v3648
        %v3777 = vcvt.s32.f32 %v3649
        %v3778 = vcvt.s32.f32 %v3650
        %v3779 = vcvt.s32.f32 %v3651
        %v3780 = vcvt.s32.f32 %v3652
        %v3781 = vcvt.s32.f32 %v3653
        %v3782 = vcvt.s32.f32 %v3654
        %v3783 = vcvt.s32.f32 %v3655
        %v3784 = vcvt.s32.f32 %v3656
        %v3785 = vcvt.s32.f32 %v3657
        %v3786 = vcvt.s32.f32 %v3658
        %v3787 = vcvt.s32.f32 %v3659
        %v3788 = vcvt.s32.f32 %v3660
        %v3789 = vcvt.s32.f32 %v3661
        %v3790 = vcvt.s32.f32 %v3662
        %v3791 = vcvt.s32.f32 %v3663
        %v3792 = vcvt.s32.f32 %v3664
        %v3793 = vcvt.s32.f32 %v3665
        %v3794 = vcvt.s32.f32 %v3666
        %v3795 = vcvt.s32.f32 %v3667
        %v3796 = vcvt.s32.f32 %v3668
        %v3797 = vcvt.s32.f32 %v3669
        %v3798 = vcvt.s32.f32 %v3670
        %v3799 = vcvt.s32.f32 %v3671
        %v3800 = vcvt.s32.f32 %v3672
        %v3801 = vcvt.s32.f32 %v3673
        %v3802 = vcvt.s32.f32 %v3674
        %v3803 = vcvt.s32.f32 %v3675
        %v3804 = vcvt.s32.f32 %v3676
        %v3805 = vcvt.s32.f32 %v3677
        %v3806 = vcvt.s32.f32 %v3678
        %v3807 = vcvt.s32.f32 %v3679
        %v3808 = vcvt.s32.f32 %v3680
        %v3809 = vcvt.s32.f32 %v3681
        %v3810 = vcvt.s32.f32 %v3682
        %v3811 = vcvt.s32.f32 %v3683
        %v3812 = vcvt.s32.f32 %v3684
        %v3813 = vcvt.s32.f32 %v3685
        %v3814 = vcvt.s32.f32 %v3686
        %v3815 = vcvt.s32.f32 %v3687
        %v3816 = vcvt.s32.f32 %v3688
        %v3817 = vcvt.s32.f32 %v3689
        %v3818 = vcvt.s32.f32 %v3690
        %v3819 = vcvt.s32.f32 %v3691
        %v3820 = vcvt.s32.f32 %v3692
        %v3821 = vcvt.s32.f32 %v3693
        %v3822 = vcvt.s32.f32 %v3694
        %v3823 = vcvt.s32.f32 %v3695
        %v3824 = vcvt.s32.f32 %v3696
        %v3825 = vcvt.s32.f32 %v3697
        %v3826 = vcvt.s32.f32 %v3698
        %v3827 = vcvt.s32.f32 %v3699
        %v3828 = vcvt.s32.f32 %v3700
        %v3829 = vcvt.s32.f32 %v3701
        %v3830 = vcvt.s32.f32 %v3702
        %v3831 = vcvt.s32.f32 %v3703
        %v3832 = vcvt.s32.f32 %v3704
        %v3833 = vcvt.s32.f32 %v3705
        %v3834 = vcvt.s32.f32 %v3706
        %v3835 = vcvt.s32.f32 %v3707
        %v3836 = vcvt.s32.f32 %v3708
        %v3837 = vcvt.s32.f32 %v3709
        %v3838 = vcvt.s32.f32 %v3710
        %v3839 = vcvt.s32.f32 %v3711
        %v3840 = vcvt.s32.f32 %v3712
        %v3841 = vcvt.s32.f32 %v3713
        %v3842 = vcvt.s32.f32 %v3714
        %v3843 = vcvt.s32.f32 %v3715
        %v3844 = vcvt.s32.f32 %v3716
        %v3845 = vcvt.s32.f32 %v3717
        %v3846 = vcvt.s32.f32 %v3718
        %v3847 = vcvt.s32.f32 %v3719
        %v3848 = vcvt.s32.f32 %v3720
        %v3849 = vcvt.s32.f32 %v3721
        %v3850 = vcvt.s32.f32 %v3722
        %v3851 = vcvt.s32.f32 %v3723
        %v3852 = vpack.c.bf16 %v3726, %v3724
        %v3853 = vpack.c.bf16 %v3727, %v3725
        %v3854 = vpack.c.bf16 %v3730, %v3728
        %v3855 = vpack.c.bf16 %v3731, %v3729
        %v3856 = vpack.c.bf16 %v3734, %v3732
        %v3857 = vpack.c.bf16 %v3735, %v3733
        %v3858 = vpack.c.bf16 %v3738, %v3736
        %v3859 = vpack.c.bf16 %v3739, %v3737
        %v3860 = vpack.c.bf16 %v3742, %v3740
        %v3861 = vpack.c.bf16 %v3743, %v3741
        %v3862 = vpack.c.bf16 %v3746, %v3744
        %v3863 = vpack.c.bf16 %v3747, %v3745
        %v3864 = vpack.c.bf16 %v3750, %v3748
        %v3865 = vpack.c.bf16 %v3751, %v3749
        %v3866 = vpack.c.bf16 %v3754, %v3752
        %v3867 = vpack.c.bf16 %v3755, %v3753
        %v3868 = vpack.c.bf16 %v3758, %v3756
        %v3869 = vpack.c.bf16 %v3759, %v3757
        %v3870 = vpack.c.bf16 %v3762, %v3760
        %v3871 = vpack.c.bf16 %v3763, %v3761
        %v3872 = vpack.c.bf16 %v3766, %v3764
        %v3873 = vpack.c.bf16 %v3767, %v3765
        %v3874 = vpack.c.bf16 %v3770, %v3768
        %v3875 = vpack.c.bf16 %v3771, %v3769
        %v3876 = vpack.c.bf16 %v3774, %v3772
        %v3877 = vpack.c.bf16 %v3775, %v3773
        %v3878 = vpack.c.bf16 %v3778, %v3776
        %v3879 = vpack.c.bf16 %v3779, %v3777
        %v3880 = vpack.c.bf16 %v3782, %v3780
        %v3881 = vpack.c.bf16 %v3783, %v3781
        %v3882 = vpack.c.bf16 %v3786, %v3784
        %v3883 = vpack.c.bf16 %v3787, %v3785
        %v3884 = vpack.c.bf16 %v3790, %v3788
        %v3885 = vpack.c.bf16 %v3791, %v3789
        %v3886 = vpack.c.bf16 %v3794, %v3792
        %v3887 = vpack.c.bf16 %v3795, %v3793
        %v3888 = vpack.c.bf16 %v3798, %v3796
        %v3889 = vpack.c.bf16 %v3799, %v3797
        %v3890 = vpack.c.bf16 %v3802, %v3800
        %v3891 = vpack.c.bf16 %v3803, %v3801
        %v3892 = vpack.c.bf16 %v3806, %v3804
        %v3893 = vpack.c.bf16 %v3807, %v3805
        %v3894 = vpack.c.bf16 %v3810, %v3808
        %v3895 = vpack.c.bf16 %v3811, %v3809
        %v3896 = vpack.c.bf16 %v3814, %v3812
        %v3897 = vpack.c.bf16 %v3815, %v3813
        %v3898 = vpack.c.bf16 %v3818, %v3816
        %v3899 = vpack.c.bf16 %v3819, %v3817
        %v3900 = vpack.c.bf16 %v3822, %v3820
        %v3901 = vpack.c.bf16 %v3823, %v3821
        %v3902 = vpack.c.bf16 %v3826, %v3824
        %v3903 = vpack.c.bf16 %v3827, %v3825
        %v3904 = vpack.c.bf16 %v3830, %v3828
        %v3905 = vpack.c.bf16 %v3831, %v3829
        %v3906 = vpack.c.bf16 %v3834, %v3832
        %v3907 = vpack.c.bf16 %v3835, %v3833
        %v3908 = vpack.c.bf16 %v3838, %v3836
        %v3909 = vpack.c.bf16 %v3839, %v3837
        %v3910 = vpack.c.bf16 %v3842, %v3840
        %v3911 = vpack.c.bf16 %v3843, %v3841
        %v3912 = vpack.c.bf16 %v3846, %v3844
        %v3913 = vpack.c.bf16 %v3847, %v3845
        %v3914 = vpack.c.bf16 %v3850, %v3848
        %v3915 = vpack.c.bf16 %v3851, %v3849
        %3916 = vmatpush.bf16.msra.mxu0 %v3866
        %3917 = vmatpush.bf16.msra.mxu0 %v3864
        %3918 = vmatpush.bf16.msra.mxu0 %v3862
        %3919 = vmatpush.bf16.msra.mxu0 %v3860
        %3920 = vmatpush.bf16.msra.mxu0 %v3858
        %3921 = vmatpush.bf16.msra.mxu0 %v3856
        %3922 = vmatpush.bf16.msra.mxu0 %v3854
        %3923 = vmatpush.bf16.msra.mxu0 %v3852
        %3924 = vmatmul.bf16.gmra.mxu0 %v3560
        %v3925 = vpop.f32.mrf.mxu0
        %v3926 = vadd.f32 0.0, %v3925
        %v3927 = vpop.f32.mrf.mxu0
        %v3928 = vadd.f32 0.0, %v3927
        %3929 = vdwg.mxu0
        %3930 = vmatpush.bf16.msra.mxu0 %v3882
        %3931 = vmatpush.bf16.msra.mxu0 %v3880
        %3932 = vmatpush.bf16.msra.mxu0 %v3878
        %3933 = vmatpush.bf16.msra.mxu0 %v3876
        %3934 = vmatpush.bf16.msra.mxu0 %v3874
        %3935 = vmatpush.bf16.msra.mxu0 %v3872
        %3936 = vmatpush.bf16.msra.mxu0 %v3870
        %3937 = vmatpush.bf16.msra.mxu0 %v3868
        %3938 = vmatmul.bf16.gmra.mxu0 %v3561
        %v3939 = vpop.f32.mrf.mxu0
        %v3940 = vadd.f32 %v3926, %v3939
        %v3941 = vpop.f32.mrf.mxu0
        %v3942 = vadd.f32 %v3928, %v3941
        %3943 = vdwg.mxu0
        %3944 = vmatpush.bf16.msra.mxu0 %v3898
        %3945 = vmatpush.bf16.msra.mxu0 %v3896
        %3946 = vmatpush.bf16.msra.mxu0 %v3894
        %3947 = vmatpush.bf16.msra.mxu0 %v3892
        %3948 = vmatpush.bf16.msra.mxu0 %v3890
        %3949 = vmatpush.bf16.msra.mxu0 %v3888
        %3950 = vmatpush.bf16.msra.mxu0 %v3886
        %3951 = vmatpush.bf16.msra.mxu0 %v3884
        %3952 = vmatmul.bf16.gmra.mxu0 %v3562
        %v3953 = vpop.f32.mrf.mxu0
        %v3954 = vadd.f32 %v3940, %v3953
        %v3955 = vpop.f32.mrf.mxu0
        %v3956 = vadd.f32 %v3942, %v3955
        %3957 = vdwg.mxu0
        %3958 = vmatpush.bf16.msra.mxu0 %v3914
        %3959 = vmatpush.bf16.msra.mxu0 %v3912
        %3960 = vmatpush.bf16.msra.mxu0 %v3910
        %3961 = vmatpush.bf16.msra.mxu0 %v3908
        %3962 = vmatpush.bf16.msra.mxu0 %v3906
        %3963 = vmatpush.bf16.msra.mxu0 %v3904
        %3964 = vmatpush.bf16.msra.mxu0 %v3902
        %3965 = vmatpush.bf16.msra.mxu0 %v3900
        %3966 = vmatmul.bf16.gmra.mxu0 %v3563
        %v3967 = vpop.f32.mrf.mxu0
        %v3968 = vadd.f32 %v3954, %v3967
        %v3969 = vpop.f32.mrf.mxu0
        %v3970 = vadd.f32 %v3956, %v3969
        %3971 = vdwg.mxu0
        %3972 = vmatpush.bf16.msra.mxu0 %v3867
        %3973 = vmatpush.bf16.msra.mxu0 %v3865
        %3974 = vmatpush.bf16.msra.mxu0 %v3863
        %3975 = vmatpush.bf16.msra.mxu0 %v3861
        %3976 = vmatpush.bf16.msra.mxu0 %v3859
        %3977 = vmatpush.bf16.msra.mxu0 %v3857
        %3978 = vmatpush.bf16.msra.mxu0 %v3855
        %3979 = vmatpush.bf16.msra.mxu0 %v3853
        %3980 = vmatmul.bf16.gmra.mxu0 %v3560
        %v3981 = vpop.f32.mrf.mxu0
        %v3982 = vadd.f32 0.0, %v3981
        %v3983 = vpop.f32.mrf.mxu0
        %v3984 = vadd.f32 0.0, %v3983
        %3985 = vdwg.mxu0
        %3986 = vmatpush.bf16.msra.mxu0 %v3883
        %3987 = vmatpush.bf16.msra.mxu0 %v3881
        %3988 = vmatpush.bf16.msra.mxu0 %v3879
        %3989 = vmatpush.bf16.msra.mxu0 %v3877
        %3990 = vmatpush.bf16.msra.mxu0 %v3875
        %3991 = vmatpush.bf16.msra.mxu0 %v3873
        %3992 = vmatpush.bf16.msra.mxu0 %v3871
        %3993 = vmatpush.bf16.msra.mxu0 %v3869
        %3994 = vmatmul.bf16.gmra.mxu0 %v3561
        %v3995 = vpop.f32.mrf.mxu0
        %v3996 = vadd.f32 %v3982, %v3995
        %v3997 = vpop.f32.mrf.mxu0
        %v3998 = vadd.f32 %v3984, %v3997
        %3999 = vdwg.mxu0
        %4000 = vmatpush.bf16.msra.mxu0 %v3899
        %4001 = vmatpush.bf16.msra.mxu0 %v3897
        %4002 = vmatpush.bf16.msra.mxu0 %v3895
        %4003 = vmatpush.bf16.msra.mxu0 %v3893
        %4004 = vmatpush.bf16.msra.mxu0 %v3891
        %4005 = vmatpush.bf16.msra.mxu0 %v3889
        %4006 = vmatpush.bf16.msra.mxu0 %v3887
        %4007 = vmatpush.bf16.msra.mxu0 %v3885
        %4008 = vmatmul.bf16.gmra.mxu0 %v3562
        %v4009 = vpop.f32.mrf.mxu0
        %v4010 = vadd.f32 %v3996, %v4009
        %v4011 = vpop.f32.mrf.mxu0
        %v4012 = vadd.f32 %v3998, %v4011
        %4013 = vdwg.mxu0
        %4014 = vmatpush.bf16.msra.mxu0 %v3915
        %4015 = vmatpush.bf16.msra.mxu0 %v3913
        %4016 = vmatpush.bf16.msra.mxu0 %v3911
        %4017 = vmatpush.bf16.msra.mxu0 %v3909
        %4018 = vmatpush.bf16.msra.mxu0 %v3907
        %4019 = vmatpush.bf16.msra.mxu0 %v3905
        %4020 = vmatpush.bf16.msra.mxu0 %v3903
        %4021 = vmatpush.bf16.msra.mxu0 %v3901
        %4022 = vmatmul.bf16.gmra.mxu0 %v3563
        %v4023 = vpop.f32.mrf.mxu0
        %v4024 = vadd.f32 %v4010, %v4023
        %v4025 = vpop.f32.mrf.mxu0
        %v4026 = vadd.f32 %v4012, %v4025
        %4027 = vdwg.mxu0
        %v4028 = vld [vmem:[%s813] sm:$0x3]
        %v4030 = vperm.slane %v4028, 0
        %v4031 = vperm.slane %v4028, 1
        %v4034 = vmul.f32 %v3968, %v4030
        %v4035 = vmul.f32 %v4024, %v4031
        %v4036 = vmul.f32 %v3970, %v4030
        %v4037 = vmul.f32 %v4026, %v4031
        %v4038 = vadd.f32 %v2375, %v4034
        %v4039 = vadd.f32 %v2376, %v4035
        %v4040 = vadd.f32 %v2377, %v4036
        %v4041 = vadd.f32 %v2378, %v4037
        %4042 = vst [vmem:[#allocation2] sm:$0xff] %v4038
        %4043 = vst [vmem:[#allocation2 + $0x8] sm:$0xff] %v4039
        %4044 = vst [vmem:[#allocation2 + $0x10] sm:$0xff] %v4040
        %4045 = vst [vmem:[#allocation2 + $0x18] sm:$0xff] %v4041
        %p4046 = scmp.lt.s32.totalorder %s48, 1
        // Predicated region
        $region109: #{llama2_decoder_forward.1} parent=79 // pred_check
          %p4047 = pneg %p4046
        $region110: #{llama2_decoder_forward.1} parent=79 // pred_check_branch
          %4049 = sbr.rel (%p4047) target = $region112
        $region111: #{llama2_decoder_forward.1} parent=79 // pred_region
          %v4050 = vpack.c.bf16 %v4039, %v4038
          %v4051 = vpack.c.bf16 %v4041, %v4040
          %4052 = vst [vmem:[%s818] sm:$0xff] %v4050
          %4053 = vst [vmem:[%s818 + $0x8] sm:$0xff] %v4051
        $region112: #{llama2_decoder_forward.1} parent=79 // pred_fallthru
          _
        %p4054 = scmp.eq.s32.totalorder %s48, 1
        // Predicated region
        $region113: #{llama2_decoder_forward.1} parent=79 // pred_check
          %p4055 = pneg %p4054
        $region114: #{llama2_decoder_forward.1} parent=79 // pred_check_branch
          %4057 = sbr.rel (%p4055) target = $region116
        $region115: #{llama2_decoder_forward.1} parent=79 // pred_region
          %v4058 = vld [vmem:[%s14] sm:$0x3]
          %v4059 = vmul.f32 %v4038, %v4038
          %v4060 = vmul.f32 %v4039, %v4039
          %v4061 = vmul.f32 %v4040, %v4040
          %v4062 = vmul.f32 %v4041, %v4041
          %v4063 = vadd.f32 %v4059, %v4060
          %4064 = vadd.xlane.f32.xlu0 %v4063
          %v4065 = vpop.xlane.xlu0 %4064
          %v4066 = vadd.f32 %v4061, %v4062
          %4067 = vadd.xlane.f32.xlu0 %v4066
          %v4068 = vpop.xlane.xlu0 %4067
          %v4069 = vmul.f32 %v4065, %v1128
          %v4070 = vmul.f32 %v4068, %v1128
          %v4071 = vadd.f32 %v4069, 1e-05
          %v4072 = vadd.f32 %v4070, 1e-05
          %v4073 = vrsqrt.pop %v4071
          %v4074 = vmul.f32 %v4073, %v4071
          %v4075 = vmul.f32 %v4074, %v4073
          %v4076 = vmul.f32 0.5, %v4075
          %v4077 = vsub.f32 1.5, %v4076
          %v4078 = vmul.f32 %v4073, %v4077
          %vm4079 = vweird.f32 %v4071
          %vm4080 = vweird.f32 %v4073
          %vm4081 = vmor %vm4079, %vm4080
          %v4082 = vsel %vm4081, %v4073, %v4078
          %v4083 = vrsqrt.pop %v4072
          %v4084 = vmul.f32 %v4083, %v4072
          %v4085 = vmul.f32 %v4084, %v4083
          %v4086 = vmul.f32 0.5, %v4085
          %v4087 = vsub.f32 1.5, %v4086
          %v4088 = vmul.f32 %v4083, %v4087
          %vm4089 = vweird.f32 %v4072
          %vm4090 = vweird.f32 %v4083
          %vm4091 = vmor %vm4089, %vm4090
          %v4092 = vsel %vm4091, %v4083, %v4088
          %v4093 = vmul.f32 %v4038, %v4082
          %v4094 = vmul.f32 %v4039, %v4082
          %v4095 = vmul.f32 %v4040, %v4092
          %v4096 = vmul.f32 %v4041, %v4092
          %v4098 = vperm.slane %v4058, 0
          %v4099 = vperm.slane %v4058, 1
          %v4102 = vmul.f32 %v4093, %v4098
          %v4103 = vmul.f32 %v4094, %v4099
          %v4104 = vmul.f32 %v4095, %v4098
          %v4105 = vmul.f32 %v4096, %v4099
          %v4106 = vpack.c.bf16 %v4103, %v4102
          %v4107 = vpack.c.bf16 %v4105, %v4104
          %4108 = vst [vmem:[%s818] sm:$0xff] %v4106
          %4109 = vst [vmem:[%s818 + $0x8] sm:$0xff] %v4107
          %v4110 = vpack.c.bf16 %v4102, %v4102
          %v4111 = vpack.c.bf16 %v4103, %v4103
          %v4112 = vpack.c.bf16 %v4104, %v4104
          %v4113 = vpack.c.bf16 %v4105, %v4105
          %v4114 = vld [vmem:[#allocation14] sm:$0xf]
          %v4115 = vld [vmem:[#allocation14 + $0x4] sm:$0xf]
          %v4116 = vld [vmem:[#allocation14 + $0x8] sm:$0xf]
          %v4117 = vld [vmem:[#allocation14 + $0xc] sm:$0xf]
          %v4118 = vld [vmem:[#allocation14 + $0x10] sm:$0xf]
          %v4119 = vld [vmem:[#allocation14 + $0x14] sm:$0xf]
          %v4120 = vld [vmem:[#allocation14 + $0x18] sm:$0xf]
          %v4121 = vld [vmem:[#allocation14 + $0x1c] sm:$0xf]
          %v4122 = vld [vmem:[#allocation14 + $0x20] sm:$0xf]
          %v4123 = vld [vmem:[#allocation14 + $0x24] sm:$0xf]
          %v4124 = vld [vmem:[#allocation14 + $0x28] sm:$0xf]
          %v4125 = vld [vmem:[#allocation14 + $0x2c] sm:$0xf]
          %v4126 = vld [vmem:[#allocation14 + $0x30] sm:$0xf]
          %v4127 = vld [vmem:[#allocation14 + $0x34] sm:$0xf]
          %v4128 = vld [vmem:[#allocation14 + $0x38] sm:$0xf]
          %v4129 = vld [vmem:[#allocation14 + $0x3c] sm:$0xf]
          %v4130 = vld [vmem:[#allocation14 + $0x40] sm:$0xf]
          %v4131 = vld [vmem:[#allocation14 + $0x44] sm:$0xf]
          %v4132 = vld [vmem:[#allocation14 + $0x48] sm:$0xf]
          %v4133 = vld [vmem:[#allocation14 + $0x4c] sm:$0xf]
          %v4134 = vld [vmem:[#allocation14 + $0x50] sm:$0xf]
          %v4135 = vld [vmem:[#allocation14 + $0x54] sm:$0xf]
          %v4136 = vld [vmem:[#allocation14 + $0x58] sm:$0xf]
          %v4137 = vld [vmem:[#allocation14 + $0x5c] sm:$0xf]
          %v4138 = vld [vmem:[#allocation14 + $0x60] sm:$0xf]
          %v4139 = vld [vmem:[#allocation14 + $0x64] sm:$0xf]
          %v4140 = vld [vmem:[#allocation14 + $0x68] sm:$0xf]
          %v4141 = vld [vmem:[#allocation14 + $0x6c] sm:$0xf]
          %v4142 = vld [vmem:[#allocation14 + $0x70] sm:$0xf]
          %v4143 = vld [vmem:[#allocation14 + $0x74] sm:$0xf]
          %v4144 = vld [vmem:[#allocation14 + $0x78] sm:$0xf]
          %v4145 = vld [vmem:[#allocation14 + $0x7c] sm:$0xf]
          %v4150 = vunpack.c.l.b16 %v4110
          %v4151 = vunpack.c.l.b16 %v4111
          %v4152 = vunpack.c.l.b16 %v4112
          %v4153 = vunpack.c.l.b16 %v4113
          %v4154 = vrot.slane %v4150, 7
          %v4155 = vrot.slane %v4152, 6
          %vm4156 = vcmask 1041409
          %v4157 = vsel %vm4156, %v4155, %v4154
          %v4158 = vrot.slane %v4151, 7
          %v4159 = vrot.slane %v4153, 6
          %v4160 = vsel %vm4156, %v4159, %v4158
          %v4161 = vpack.c.b16 %v4157, %v4157
          %v4162 = vpack.c.b16 %v4160, %v4160
          %v4197 = vunpack.c.l.b16 %v4114
          %v4198 = vunpack.c.l.b16 %v4115
          %v4199 = vunpack.c.l.b16 %v4116
          %v4200 = vunpack.c.l.b16 %v4117
          %v4201 = vunpack.c.l.b16 %v4118
          %v4202 = vunpack.c.l.b16 %v4119
          %v4203 = vunpack.c.l.b16 %v4120
          %v4204 = vunpack.c.l.b16 %v4121
          %v4205 = vunpack.c.l.b16 %v4122
          %v4206 = vunpack.c.l.b16 %v4123
          %v4207 = vunpack.c.l.b16 %v4124
          %v4208 = vunpack.c.l.b16 %v4125
          %v4209 = vunpack.c.l.b16 %v4126
          %v4210 = vunpack.c.l.b16 %v4127
          %v4211 = vunpack.c.l.b16 %v4128
          %v4212 = vunpack.c.l.b16 %v4129
          %v4213 = vunpack.c.l.b16 %v4130
          %v4214 = vunpack.c.l.b16 %v4131
          %v4215 = vunpack.c.l.b16 %v4132
          %v4216 = vunpack.c.l.b16 %v4133
          %v4217 = vunpack.c.l.b16 %v4134
          %v4218 = vunpack.c.l.b16 %v4135
          %v4219 = vunpack.c.l.b16 %v4136
          %v4220 = vunpack.c.l.b16 %v4137
          %v4221 = vunpack.c.l.b16 %v4138
          %v4222 = vunpack.c.l.b16 %v4139
          %v4223 = vunpack.c.l.b16 %v4140
          %v4224 = vunpack.c.l.b16 %v4141
          %v4225 = vunpack.c.l.b16 %v4142
          %v4226 = vunpack.c.l.b16 %v4143
          %v4227 = vunpack.c.l.b16 %v4144
          %v4228 = vunpack.c.l.b16 %v4145
          %v4229 = vpack.c.b16 %v4198, %v4197
          %v4230 = vpack.c.b16 %v4200, %v4199
          %v4231 = vpack.c.b16 %v4202, %v4201
          %v4232 = vpack.c.b16 %v4204, %v4203
          %v4233 = vpack.c.b16 %v4206, %v4205
          %v4234 = vpack.c.b16 %v4208, %v4207
          %v4235 = vpack.c.b16 %v4210, %v4209
          %v4236 = vpack.c.b16 %v4212, %v4211
          %v4237 = vpack.c.b16 %v4214, %v4213
          %v4238 = vpack.c.b16 %v4216, %v4215
          %v4239 = vpack.c.b16 %v4218, %v4217
          %v4240 = vpack.c.b16 %v4220, %v4219
          %v4241 = vpack.c.b16 %v4222, %v4221
          %v4242 = vpack.c.b16 %v4224, %v4223
          %v4243 = vpack.c.b16 %v4226, %v4225
          %v4244 = vpack.c.b16 %v4228, %v4227
          %4261 = vmatpush.bf16.msra.mxu0 %v4236
          %4262 = vmatpush.bf16.msra.mxu0 %v4235
          %4263 = vmatpush.bf16.msra.mxu0 %v4234
          %4264 = vmatpush.bf16.msra.mxu0 %v4233
          %4265 = vmatpush.bf16.msra.mxu0 %v4232
          %4266 = vmatpush.bf16.msra.mxu0 %v4231
          %4267 = vmatpush.bf16.msra.mxu0 %v4230
          %4268 = vmatpush.bf16.msra.mxu0 %v4229
          %4269 = vmatmul.bf16.gmra.mxu0 %v4161
          %v4270 = vpop.f32.mrf.mxu0
          %v4271 = vadd.f32 0.0, %v4270
          %v4272 = vpop.f32.mrf.mxu0
          %4273 = vdwg.mxu0
          %4274 = vmatpush.bf16.msra.mxu0 %v4244
          %4275 = vmatpush.bf16.msra.mxu0 %v4243
          %4276 = vmatpush.bf16.msra.mxu0 %v4242
          %4277 = vmatpush.bf16.msra.mxu0 %v4241
          %4278 = vmatpush.bf16.msra.mxu0 %v4240
          %4279 = vmatpush.bf16.msra.mxu0 %v4239
          %4280 = vmatpush.bf16.msra.mxu0 %v4238
          %4281 = vmatpush.bf16.msra.mxu0 %v4237
          %4282 = vmatmul.bf16.gmra.mxu0 %v4162
          %v4283 = vpop.f32.mrf.mxu0
          %v4284 = vadd.f32 %v4271, %v4283
          %v4285 = vpop.f32.mrf.mxu0
          %4286 = vdwg.mxu0
          %4287 = vst [vmem:[#allocation17] sm:$0x3] %v4284
        $region116: #{llama2_decoder_forward.1} parent=79 // pred_fallthru
          _
        %p4288 = scmp.lt.s32.totalorder %s48, 1
        %s4289 = scalar_select %p4288, %s48, 1
        %s4290 = smul.addr %s4289, 4
        %s4291 = smul.addr %s4290, 4
        %s4292 = scalar_lea.vmem %s17, %s4291
        // Predicated region
        $region117: #{llama2_decoder_forward.1} parent=79 // pred_check
          %p4293 = pneg %p421
        $region118: #{llama2_decoder_forward.1} parent=79 // pred_check_branch
          %4295 = sbr.rel (%p4293) target = $region120
        $region119: #{llama2_decoder_forward.1} parent=79 // pred_region
          %4297 = vsyncadd [#allocation7], 0
          %s4298 = sshll.u32 [#allocation16], 4
          %s4299 = int_to_ptr.vmem [resolvable:$true] %s4298
          %s4300 = sshll.u32 %s16, 4
          %s4301 = int_to_ptr.hbm [resolvable:$true] %s4300
          %4306 = dma.vmem_to_hbm [thread:$0]  %s4299, 256, %s4301, [#allocation7], 128, 128, 8
        $region120: #{llama2_decoder_forward.1} parent=79 // pred_fallthru
          _
        // Predicated region
        $region121: #{llama2_decoder_forward.1} parent=79 // pred_check
          %p4307 = pneg %p447
        $region122: #{llama2_decoder_forward.1} parent=79 // pred_check_branch
          %4309 = sbr.rel (%p4307) target = $region124
        $region123: #{llama2_decoder_forward.1} parent=79 // pred_region
          _
        $region124: #{llama2_decoder_forward.1} parent=79 // pred_fallthru
          _
        // Predicated region
        $region125: #{llama2_decoder_forward.1} parent=79 // pred_check
          %p4310 = pneg %p468
        $region126: #{llama2_decoder_forward.1} parent=79 // pred_check_branch
          %4312 = sbr.rel (%p4310) target = $region128
        $region127: #{llama2_decoder_forward.1} parent=79 // pred_region
          %4314 = vsyncadd [#allocation18], 0
          %s4316 = sshll.u32 [#allocation17], 4
          %s4317 = int_to_ptr.vmem [resolvable:$true] %s4316
          %s4318 = sshll.u32 %s18, 4
          %s4319 = int_to_ptr.hbm [resolvable:$true] %s4318
          %4321 = dma.vmem_to_hbm [thread:$0]  %s4317, 32, %s4319, [#allocation18]
        $region128: #{llama2_decoder_forward.1} parent=79 // pred_fallthru
          _
        // Predicated region
        $region129: #{llama2_decoder_forward.1} parent=79 // pred_check
          %p4322 = pneg %p421
        $region130: #{llama2_decoder_forward.1} parent=79 // pred_check_branch
          %4324 = sbr.rel (%p4322) target = $region132
        $region131: #{llama2_decoder_forward.1} parent=79 // pred_region
          %4326 = dma.done [#allocation7], 256
        $region132: #{llama2_decoder_forward.1} parent=79 // pred_fallthru
          _
        // Predicated region
        $region133: #{llama2_decoder_forward.1} parent=79 // pred_check
          %p4327 = pneg %p468
        $region134: #{llama2_decoder_forward.1} parent=79 // pred_check_branch
          %4329 = sbr.rel (%p4327) target = $region136
        $region135: #{llama2_decoder_forward.1} parent=79 // pred_region
          %4331 = dma.done [#allocation18], 32
        $region136: #{llama2_decoder_forward.1} parent=79 // pred_fallthru
          _
      $region80: #{llama2_decoder_forward.1} parent=5 // pred_fallthru
        _
      %p4332 = scmp.le.s32.totalorder 2, %s43
      // Predicated region
      $region137: #{llama2_decoder_forward.1} parent=5 // pred_check
        %p4333 = pneg %p4332
      $region138: #{llama2_decoder_forward.1} parent=5 // pred_check_branch
        %4335 = sbr.rel (%p4333) target = $region140
      $region139: #{llama2_decoder_forward.1} parent=5 // pred_region
        %s4336 = ssub.s32 %s43, 2
        // Predicated region
        $region141: #{llama2_decoder_forward.1} parent=139 // pred_check
          %p4337 = pneg %p453
        $region142: #{llama2_decoder_forward.1} parent=139 // pred_check_branch
          %4339 = sbr.rel (%p4337) target = $region144
        $region143: #{llama2_decoder_forward.1} parent=139 // pred_region
          %p4340 = scmp.lt.s32.totalorder %s49, 1
          %s4341 = scalar_select %p4340, %s49, 1
          %s4342 = smul.addr %s4341, 4
          %s4343 = smul.addr %s4342, 4
          %s4344 = scalar_lea.vmem %s17, %s4343
        $region144: #{llama2_decoder_forward.1} parent=139 // pred_fallthru
          _
      $region140: #{llama2_decoder_forward.1} parent=5 // pred_fallthru
        _
    $region6: #{llama2_decoder_forward.1} parent=1 // loop_footer
      %s47 = sadd.s32 1, %s43
    $region7: #{llama2_decoder_forward.1} parent=1 // loop_footer_branch
      %42 = sbr.rel target = $region3
    $region8: #{llama2_decoder_forward.1} parent=1 // loop_exit
      _
    %4345 = vsyncpa [#allocation6], 1
    %s4346 = scalar_lea.sflag [#allocation6], 1
    %4347 = vsyncpa %s4346, 1
    %4348 = vsyncpa [#allocation9], 1
    %s4349 = scalar_lea.sflag [#allocation9], 1
    %4350 = vsyncpa %s4349, 1
    %4351 = vsyncpa [#allocation12], 1
    %s4352 = scalar_lea.sflag [#allocation12], 1
    %4353 = vsyncpa %s4352, 1
    %4354 = vsyncpa [#allocation15], 1
    %4355 = vsyncpa [#allocation7], 1
    %s4356 = scalar_lea.sflag [#allocation7], 1
    %4357 = vsyncpa %s4356, 1
    %4358 = vsyncpa [#allocation18], 1

</llo_original>
